<compile_context>
chip_gen: v6e
topology: v6e:2x2x1
jax: 0.10.0
libtpu: 0.0.40
codegen_flags: <defaults>
</compile_context>

<pallas_src>
import functools
import math

import jax
import jax.numpy as jnp
from jax import lax
from jax.experimental import pallas as pl
from jax.experimental.pallas import tpu as pltpu

_LANES = 128


def _cdiv(a, b):
    return -(-a // b)


def _round_up(a, b):
    return _cdiv(a, b) * b


# ----------------------------- Pallas kernel ------------------------------ #
def _conv3d_relu_gn_kernel(x_ref, w_ref, b_ref, g_ref, be_ref, o_ref, *,
                           taps, n_rows, dims, stride, inv_count, eps,
                           k_fill, unroll):
    """One grid step == one batch sample (implicit im2col + MXU + fused GN).

    x_ref  : (r_in, in_cp, 128)   bf16  x_ref[r, c, l] = padded flat voxel
                                        r*128 + l of channel c (zero padded)
    w_ref  : (out_c, K_pad)       bf16  conv weights, k = tap*in_cp + c
    b_ref  : (out_c, 1)           f32   conv bias
    g_ref  : (out_c, 1)           f32   GroupNorm weight
    be_ref : (out_c, 1)           f32   GroupNorm bias
    o_ref  : (n_rows, out_c, 128) f32   output rows (flat index in padded coords)
    """
    out_c = o_ref.shape[1]
    hpwp, wp, do1, ho1, wo1 = dims

    w = w_ref[...]                                   # (out_c, K_pad) bf16, hoisted
    bias = b_ref[...]                                # (out_c, 1) f32
    lane = lax.broadcasted_iota(jnp.int32, (1, _LANES), 1)
    zero_fill = (jnp.zeros((k_fill, _LANES), jnp.bfloat16) if k_fill else None)

    def conv_row(i, carry):
        s_acc, ss_acc = carry

        # ---- implicit im2col: build the (K_pad, 128) patch for this row ----
        base = {}     # delta            -> (in_cp, 128) bf16
        pair = {}     # delta (=off_hi)  -> (in_cp, 256) bf16 (two adjacent rows)

        def get_base(d):
            if d not in base:
                base[d] = x_ref[i + d]
            return base[d]

        def get_pair(hi):
            if hi not in pair:
                pair[hi] = jnp.concatenate([get_base(hi), get_base(hi + 1)],
                                           axis=1)
            return pair[hi]

        pieces = []
        for off_hi, off_lo in taps:
            if off_lo == 0:
                pieces.append(get_base(off_hi))
            else:
                pieces.append(get_pair(off_hi)[:, off_lo:off_lo + _LANES])
        if k_fill:
            pieces.append(zero_fill)
        patch = jnp.concatenate(pieces, axis=0)               # (K_pad, 128) bf16

        # ---- Conv3d as a single MXU contraction + bias + ReLU ----
        y = jnp.dot(w, patch, preferred_element_type=jnp.float32)   # (out_c,128)
        y = jnp.maximum(y + bias, 0.0)
        o_ref[i] = y                                           # stash pre-norm

        # ---- GroupNorm stats over *valid* voxels only (lane-partial sums) ----
        flat = (i * _LANES + lane).astype(jnp.float32)         # exact (< 2^24)
        dq = jnp.floor(flat / hpwp)
        rem = flat - dq * hpwp
        hq = jnp.floor(rem / wp)
        wq = rem - hq * wp
        valid = (dq < do1) & (hq < ho1) & (wq < wo1)
        if stride > 1:
            valid = valid & ((dq - jnp.floor(dq / stride) * stride) == 0)
            valid = valid & ((hq - jnp.floor(hq / stride) * stride) == 0)
            valid = valid & ((wq - jnp.floor(wq / stride) * stride) == 0)
        m = valid.astype(jnp.float32)                          # (1, 128)
        ym = y * m
        return s_acc + ym, ss_acc + ym * y

    zeros = jnp.zeros((out_c, _LANES), jnp.float32)
    s_tot, ss_tot = lax.fori_loop(0, n_rows, conv_row, (zeros, zeros),
                                  unroll=unroll)

    # GroupNorm(1, out_c): single mean / biased var over (C, D, H, W).
    mean = jnp.sum(s_tot) * inv_count
    var = jnp.maximum(jnp.sum(ss_tot) * inv_count - mean * mean, 0.0)
    rstd = lax.rsqrt(var + eps)
    scale = g_ref[...] * rstd                                  # (out_c, 1)
    shift = be_ref[...] - mean * scale

    def norm_row(i, carry):
        o_ref[i] = o_ref[i] * scale + shift
        return carry

    lax.fori_loop(0, n_rows, norm_row, 0, unroll=unroll)


# ------------------------------ JAX wrapper -------------------------------- #
@functools.partial(jax.jit, static_argnames=("ks", "pd", "s"))
def conv3d_block_forward(x, weight, bias, gamma, beta, *, ks, pd, s=1):
    """Conv3dBlock.forward: Conv3d(ks, stride=s, pad=pd) -> ReLU -> GroupNorm(1).

    x      : (N, in_c, D, H, W)        f32 (NCDHW)
    weight : (out_c, in_c, ks, ks, ks) f32 (PyTorch Conv3d layout)
    bias, gamma, beta : (out_c,)       f32
    returns: (N, out_c, Do, Ho, Wo)    f32 (NCDHW)
    """
    N, in_c, D, H, W = x.shape
    out_c = weight.shape[0]
    Dp, Hp, Wp = D + 2 * pd, H + 2 * pd, W + 2 * pd
    Do1, Ho1, Wo1 = Dp - ks + 1, Hp - ks + 1, Wp - ks + 1     # stride-1 extents
    Do, Ho, Wo = _cdiv(Do1, s), _cdiv(Ho1, s), _cdiv(Wo1, s)

    l_vol = Dp * Hp * Wp
    n_rows = _cdiv(l_vol, _LANES)
    in_cp = _round_up(in_c, 8)
    K = ks * ks * ks * in_cp
    K_pad = _round_up(K, _LANES)

    # Tap offsets in the flat padded volume, split (whole rows, residual lanes).
    taps = []
    for kd in range(ks):
        for kh in range(ks):
            for kw in range(ks):
                taps.append(divmod(kd * Hp * Wp + kh * Wp + kw, _LANES))
    max_hi = max(hi for hi, _ in taps)
    r_in = n_rows + max_hi + 1

    # Input: zero-pad channels to in_cp and spatial with pd, flatten and lay out
    # as (row, channel, lane) so every in-kernel access is layout-natural.
    xp = jnp.pad(x, ((0, 0), (0, in_cp - in_c), (pd, pd), (pd, pd), (pd, pd)))
    xf = xp.reshape(N, in_cp, l_vol)
    xf = jnp.pad(xf, ((0, 0), (0, 0), (0, r_in * _LANES - l_vol)))
    x4 = jnp.transpose(xf.reshape(N, in_cp, r_in, _LANES), (0, 2, 1, 3))
    x4 = x4.astype(jnp.bfloat16)

    # Conv weights: (out_c, K_pad) bf16, tap-major / channel-minor (matches the
    # order the kernel stacks the shifted windows), zero-padded channels + K.
    wt = jnp.transpose(weight, (0, 2, 3, 4, 1))               # (oc, kd, kh, kw, ic)
    wt = jnp.pad(wt, ((0, 0), (0, 0), (0, 0), (0, 0), (0, in_cp - in_c)))
    w2 = jnp.pad(wt.reshape(out_c, K), ((0, 0), (0, K_pad - K)))
    w2 = w2.astype(jnp.bfloat16)

    b2 = bias.reshape(out_c, 1).astype(jnp.float32)
    g2 = gamma.reshape(out_c, 1).astype(jnp.float32)
    be2 = beta.reshape(out_c, 1).astype(jnp.float32)

    count = Do * Ho * Wo * out_c
    kernel = functools.partial(
        _conv3d_relu_gn_kernel,
        taps=tuple(taps), n_rows=int(n_rows),
        dims=(float(Hp * Wp), float(Wp), float(Do1), float(Ho1), float(Wo1)),
        stride=int(s), inv_count=1.0 / float(count), eps=1e-5,
        k_fill=int(K_pad - K), unroll=(True if n_rows <= 16 else None))

    out = pl.pallas_call(
        kernel,
        out_shape=jax.ShapeDtypeStruct((N, n_rows, out_c, _LANES), jnp.float32),
        grid_spec=pltpu.PrefetchScalarGridSpec(
            num_scalar_prefetch=0,
            grid=(N,),
            in_specs=[
                pl.BlockSpec((None, r_in, in_cp, _LANES), lambda n: (n, 0, 0, 0)),
                pl.BlockSpec((out_c, K_pad), lambda n: (0, 0)),
                pl.BlockSpec((out_c, 1), lambda n: (0, 0)),
                pl.BlockSpec((out_c, 1), lambda n: (0, 0)),
                pl.BlockSpec((out_c, 1), lambda n: (0, 0)),
            ],
            out_specs=pl.BlockSpec((None, n_rows, out_c, _LANES),
                                   lambda n: (n, 0, 0, 0)),
        ),
        compiler_params=pltpu.CompilerParams(
            dimension_semantics=("parallel",)),
    )(x4, w2, b2, g2, be2)

    # (N, rows, out_c, 128) -> NCDHW (transpose + free reshape + strided slice).
    of = jnp.transpose(out, (0, 2, 1, 3)).reshape(N, out_c, n_rows * _LANES)
    of = of[:, :, :l_vol].reshape(N, out_c, Dp, Hp, Wp)
    return of[:, :, 0:Do1:s, 0:Ho1:s, 0:Wo1:s]


# ---------------------------- pure-JAX reference ---------------------------- #
def _reference_forward(x, weight, bias, gamma, beta, *, ks, pd, s):
    out_c = weight.shape[0]
    y = lax.conv_general_dilated(
        x, weight, window_strides=(s, s, s), padding=[(pd, pd)] * 3,
        dimension_numbers=("NCDHW", "OIDHW", "NCDHW"))
    y = y + bias.reshape(1, out_c, 1, 1, 1)
    y = jnp.maximum(y, 0.0)
    mean = jnp.mean(y, axis=(1, 2, 3, 4), keepdims=True)
    var = jnp.mean((y - mean) ** 2, axis=(1, 2, 3, 4), keepdims=True)
    y = (y - mean) * lax.rsqrt(var + 1e-5)
    return y * gamma.reshape(1, out_c, 1, 1, 1) + beta.reshape(1, out_c, 1, 1, 1)


# --------------------------------- main ------------------------------------ #
if __name__ == "__main__":
    in_c, out_c, ks, pd, s = 4, 8, 3, 1, 1
    N, D, H, W = 2, 8, 8, 8

    key = jax.random.PRNGKey(0)
    kx, kw_, kb = jax.random.split(key, 3)

    x = jax.random.normal(kx, (N, in_c, D, H, W), dtype=jnp.float32)
    fan_in = in_c * ks ** 3
    bound = 1.0 / math.sqrt(fan_in)
    weight = jax.random.uniform(kw_, (out_c, in_c, ks, ks, ks),
                                minval=-bound, maxval=bound, dtype=jnp.float32)
    bias = jax.random.uniform(kb, (out_c,), minval=-bound, maxval=bound,
                              dtype=jnp.float32)
    gamma = jnp.ones((out_c,), jnp.float32)   # GroupNorm default weight
    beta = jnp.zeros((out_c,), jnp.float32)   # GroupNorm default bias

    out = conv3d_block_forward(x, weight, bias, gamma, beta, ks=ks, pd=pd, s=s)
    out = jax.block_until_ready(out)
    assert out.shape == (N, out_c, D, H, W), out.shape

    # Correctness check vs f32 XLA reference (bf16 kernel operands -> loose tol).
    ref = _reference_forward(x, weight, bias, gamma, beta, ks=ks, pd=pd, s=s)
    err = float(jnp.max(jnp.abs(out - ref)))
    assert err < 6e-2, f"max abs err {err}"
    print("KERNEL_OK")
</pallas_src>

<mosaic_0001>
module attributes {stable_mosaic.version = 11 : i64} {
  func.func @_conv3d_relu_gn_kernel(%arg0: i32, %arg1: memref<1x10x8x128xbf16, #tpu.memory_space<vmem>>, %arg2: memref<8x256xbf16, #tpu.memory_space<vmem>>, %arg3: memref<8x1xf32, #tpu.memory_space<vmem>>, %arg4: memref<8x1xf32, #tpu.memory_space<vmem>>, %arg5: memref<8x1xf32, #tpu.memory_space<vmem>>, %arg6: memref<1x8x8x128xf32, #tpu.memory_space<vmem>>) attributes {dimension_semantics = [#tpu.dimension_semantics<parallel>], iteration_bounds = array<i64: 2>, scalar_prefetch = 0 : i64, scratch_operands = 0 : i64, tpu.core_type = #tpu.core_type<tc>, window_params = [{transform_indices = @transform_0, window_bounds = array<i64: 1, 10, 8, 128>}, {pipeline_mode = #tpu.pipeline_mode<synchronous>, transform_indices = @transform_1, window_bounds = array<i64: 8, 256>}, {pipeline_mode = #tpu.pipeline_mode<synchronous>, transform_indices = @transform_2, window_bounds = array<i64: 8, 1>}, {pipeline_mode = #tpu.pipeline_mode<synchronous>, transform_indices = @transform_3, window_bounds = array<i64: 8, 1>}, {pipeline_mode = #tpu.pipeline_mode<synchronous>, transform_indices = @transform_4, window_bounds = array<i64: 8, 1>}, {transform_indices = @transform_5, window_bounds = array<i64: 1, 8, 8, 128>}]} {
    %c0 = arith.constant 0 : index
    %c0_0 = arith.constant 0 : index
    %0 = vector.load %arg2[%c0, %c0_0] : memref<8x256xbf16, #tpu.memory_space<vmem>>, vector<8x256xbf16>
    %c0_1 = arith.constant 0 : index
    %c0_2 = arith.constant 0 : index
    %1 = vector.load %arg3[%c0_1, %c0_2] : memref<8x1xf32, #tpu.memory_space<vmem>>, vector<8x1xf32>
    %2 = tpu.iota {dimensions = array<i32: 1>} : vector<1x128xi32>
    %cst = arith.constant 0.000000e+00 : bf16
    %3 = vector.broadcast %cst : bf16 to vector<40x128xbf16>
    %cst_3 = arith.constant 0.000000e+00 : f32
    %4 = vector.broadcast %cst_3 : f32 to vector<8x128xf32>
    %c0_i32 = arith.constant 0 : i32
    %c0_i32_4 = arith.constant 0 : i32
    %5 = arith.addi %c0_i32, %c0_i32_4 : i32
    %c0_5 = arith.constant 0 : index
    %6 = arith.index_cast %5 : i32 to index
    %c0_6 = arith.constant 0 : index
    %c0_7 = arith.constant 0 : index
    %7 = vector.load %arg1[%c0_5, %6, %c0_6, %c0_7] : memref<1x10x8x128xbf16, #tpu.memory_space<vmem>>, vector<1x1x8x128xbf16>
    %8 = vector.shape_cast %7 : vector<1x1x8x128xbf16> to vector<8x128xbf16>
    %c1_i32 = arith.constant 1 : i32
    %9 = arith.addi %c0_i32, %c1_i32 : i32
    %c0_8 = arith.constant 0 : index
    %10 = arith.index_cast %9 : i32 to index
    %c0_9 = arith.constant 0 : index
    %c0_10 = arith.constant 0 : index
    %11 = vector.load %arg1[%c0_8, %10, %c0_9, %c0_10] : memref<1x10x8x128xbf16, #tpu.memory_space<vmem>>, vector<1x1x8x128xbf16>
    %12 = vector.shape_cast %11 : vector<1x1x8x128xbf16> to vector<8x128xbf16>
    %13 = tpu.concatenate %8, %12 in 1 : vector<8x128xbf16>, vector<8x128xbf16> -> vector<8x256xbf16>
    %14 = vector.extract_strided_slice %13 {offsets = [0, 1], sizes = [8, 128], strides = [1, 1]} : vector<8x256xbf16> to vector<8x128xbf16>
    %15 = vector.extract_strided_slice %13 {offsets = [0, 2], sizes = [8, 128], strides = [1, 1]} : vector<8x256xbf16> to vector<8x128xbf16>
    %16 = vector.extract_strided_slice %13 {offsets = [0, 10], sizes = [8, 128], strides = [1, 1]} : vector<8x256xbf16> to vector<8x128xbf16>
    %17 = vector.extract_strided_slice %13 {offsets = [0, 11], sizes = [8, 128], strides = [1, 1]} : vector<8x256xbf16> to vector<8x128xbf16>
    %18 = vector.extract_strided_slice %13 {offsets = [0, 12], sizes = [8, 128], strides = [1, 1]} : vector<8x256xbf16> to vector<8x128xbf16>
    %19 = vector.extract_strided_slice %13 {offsets = [0, 20], sizes = [8, 128], strides = [1, 1]} : vector<8x256xbf16> to vector<8x128xbf16>
    %20 = vector.extract_strided_slice %13 {offsets = [0, 21], sizes = [8, 128], strides = [1, 1]} : vector<8x256xbf16> to vector<8x128xbf16>
    %21 = vector.extract_strided_slice %13 {offsets = [0, 22], sizes = [8, 128], strides = [1, 1]} : vector<8x256xbf16> to vector<8x128xbf16>
    %22 = vector.extract_strided_slice %13 {offsets = [0, 100], sizes = [8, 128], strides = [1, 1]} : vector<8x256xbf16> to vector<8x128xbf16>
    %23 = vector.extract_strided_slice %13 {offsets = [0, 101], sizes = [8, 128], strides = [1, 1]} : vector<8x256xbf16> to vector<8x128xbf16>
    %24 = vector.extract_strided_slice %13 {offsets = [0, 102], sizes = [8, 128], strides = [1, 1]} : vector<8x256xbf16> to vector<8x128xbf16>
    %25 = vector.extract_strided_slice %13 {offsets = [0, 110], sizes = [8, 128], strides = [1, 1]} : vector<8x256xbf16> to vector<8x128xbf16>
    %26 = vector.extract_strided_slice %13 {offsets = [0, 111], sizes = [8, 128], strides = [1, 1]} : vector<8x256xbf16> to vector<8x128xbf16>
    %27 = vector.extract_strided_slice %13 {offsets = [0, 112], sizes = [8, 128], strides = [1, 1]} : vector<8x256xbf16> to vector<8x128xbf16>
    %28 = vector.extract_strided_slice %13 {offsets = [0, 120], sizes = [8, 128], strides = [1, 1]} : vector<8x256xbf16> to vector<8x128xbf16>
    %29 = vector.extract_strided_slice %13 {offsets = [0, 121], sizes = [8, 128], strides = [1, 1]} : vector<8x256xbf16> to vector<8x128xbf16>
    %30 = vector.extract_strided_slice %13 {offsets = [0, 122], sizes = [8, 128], strides = [1, 1]} : vector<8x256xbf16> to vector<8x128xbf16>
    %c2_i32 = arith.constant 2 : i32
    %31 = arith.addi %c0_i32, %c2_i32 : i32
    %c0_11 = arith.constant 0 : index
    %32 = arith.index_cast %31 : i32 to index
    %c0_12 = arith.constant 0 : index
    %c0_13 = arith.constant 0 : index
    %33 = vector.load %arg1[%c0_11, %32, %c0_12, %c0_13] : memref<1x10x8x128xbf16, #tpu.memory_space<vmem>>, vector<1x1x8x128xbf16>
    %34 = vector.shape_cast %33 : vector<1x1x8x128xbf16> to vector<8x128xbf16>
    %35 = tpu.concatenate %12, %34 in 1 : vector<8x128xbf16>, vector<8x128xbf16> -> vector<8x256xbf16>
    %36 = vector.extract_strided_slice %35 {offsets = [0, 72], sizes = [8, 128], strides = [1, 1]} : vector<8x256xbf16> to vector<8x128xbf16>
    %37 = vector.extract_strided_slice %35 {offsets = [0, 73], sizes = [8, 128], strides = [1, 1]} : vector<8x256xbf16> to vector<8x128xbf16>
    %38 = vector.extract_strided_slice %35 {offsets = [0, 74], sizes = [8, 128], strides = [1, 1]} : vector<8x256xbf16> to vector<8x128xbf16>
    %39 = vector.extract_strided_slice %35 {offsets = [0, 82], sizes = [8, 128], strides = [1, 1]} : vector<8x256xbf16> to vector<8x128xbf16>
    %40 = vector.extract_strided_slice %35 {offsets = [0, 83], sizes = [8, 128], strides = [1, 1]} : vector<8x256xbf16> to vector<8x128xbf16>
    %41 = vector.extract_strided_slice %35 {offsets = [0, 84], sizes = [8, 128], strides = [1, 1]} : vector<8x256xbf16> to vector<8x128xbf16>
    %42 = vector.extract_strided_slice %35 {offsets = [0, 92], sizes = [8, 128], strides = [1, 1]} : vector<8x256xbf16> to vector<8x128xbf16>
    %43 = vector.extract_strided_slice %35 {offsets = [0, 93], sizes = [8, 128], strides = [1, 1]} : vector<8x256xbf16> to vector<8x128xbf16>
    %44 = vector.extract_strided_slice %35 {offsets = [0, 94], sizes = [8, 128], strides = [1, 1]} : vector<8x256xbf16> to vector<8x128xbf16>
    %45 = tpu.concatenate %8, %14, %15, %16, %17, %18, %19, %20, %21, %22, %23, %24, %25, %26, %27, %28 in 0 : vector<8x128xbf16>, vector<8x128xbf16>, vector<8x128xbf16>, vector<8x128xbf16>, vector<8x128xbf16>, vector<8x128xbf16>, vector<8x128xbf16>, vector<8x128xbf16>, vector<8x128xbf16>, vector<8x128xbf16>, vector<8x128xbf16>, vector<8x128xbf16>, vector<8x128xbf16>, vector<8x128xbf16>, vector<8x128xbf16>, vector<8x128xbf16> -> vector<128x128xbf16>
    %46 = tpu.concatenate %29, %30, %36, %37, %38, %39, %40, %41, %42, %43, %44, %3 in 0 : vector<8x128xbf16>, vector<8x128xbf16>, vector<8x128xbf16>, vector<8x128xbf16>, vector<8x128xbf16>, vector<8x128xbf16>, vector<8x128xbf16>, vector<8x128xbf16>, vector<8x128xbf16>, vector<8x128xbf16>, vector<8x128xbf16>, vector<40x128xbf16> -> vector<128x128xbf16>
    %47 = tpu.concatenate %45, %46 in 0 : vector<128x128xbf16>, vector<128x128xbf16> -> vector<256x128xbf16>
    %cst_14 = arith.constant dense<0.000000e+00> : vector<8x128xf32>
    %48 = tpu.matmul %0, %47, %cst_14 {dimension_numbers = #tpu.dot_dimension_numbers<[1], [0], [0], [1], [0, 0, 1, 1], [], []>} : vector<8x256xbf16>, vector<256x128xbf16>, vector<8x128xf32> -> vector<8x128xf32>
    %49 = vector.broadcast %1 : vector<8x1xf32> to vector<8x128xf32>
    %50 = arith.addf %48, %49 : vector<8x128xf32>
    %cst_15 = arith.constant 0.000000e+00 : f32
    %51 = vector.broadcast %cst_15 : f32 to vector<8x128xf32>
    %52 = arith.maximumf %50, %51 : vector<8x128xf32>
    %c0_16 = arith.constant 0 : index
    %53 = arith.index_cast %c0_i32 : i32 to index
    %c0_17 = arith.constant 0 : index
    %c0_18 = arith.constant 0 : index
    %54 = vector.load %arg6[%c0_16, %53, %c0_17, %c0_18] : memref<1x8x8x128xf32, #tpu.memory_space<vmem>>, vector<1x1x8x128xf32>
    %55 = vector.shape_cast %54 : vector<1x1x8x128xf32> to vector<8x128xf32>
    %56 = vector.shape_cast %52 : vector<8x128xf32> to vector<1x1x8x128xf32>
    tpu.vector_store %arg6[%c0_16, %53, %c0_17, %c0_18], %56 {strides = array<i32>} : memref<1x8x8x128xf32, #tpu.memory_space<vmem>>, vector<1x1x8x128xf32>,
    %c128_i32 = arith.constant 128 : i32
    %57 = arith.muli %c0_i32, %c128_i32 : i32
    %58 = vector.broadcast %57 : i32 to vector<1x128xi32>
    %59 = arith.addi %58, %2 : vector<1x128xi32>
    %60 = arith.sitofp %59 : vector<1x128xi32> to vector<1x128xf32>
    %cst_19 = arith.constant 1.000000e+02 : f32
    %61 = vector.broadcast %cst_19 : f32 to vector<1x128xf32>
    %62 = arith.divf %60, %61 : vector<1x128xf32>
    %63 = math.floor %62 : vector<1x128xf32>
    %cst_20 = arith.constant 1.000000e+02 : f32
    %64 = vector.broadcast %cst_20 : f32 to vector<1x128xf32>
    %65 = arith.mulf %63, %64 : vector<1x128xf32>
    %66 = arith.subf %60, %65 : vector<1x128xf32>
    %cst_21 = arith.constant 1.000000e+01 : f32
    %67 = vector.broadcast %cst_21 : f32 to vector<1x128xf32>
    %68 = arith.divf %66, %67 : vector<1x128xf32>
    %69 = math.floor %68 : vector<1x128xf32>
    %cst_22 = arith.constant 1.000000e+01 : f32
    %70 = vector.broadcast %cst_22 : f32 to vector<1x128xf32>
    %71 = arith.mulf %69, %70 : vector<1x128xf32>
    %72 = arith.subf %66, %71 : vector<1x128xf32>
    %cst_23 = arith.constant 8.000000e+00 : f32
    %73 = vector.broadcast %cst_23 : f32 to vector<1x128xf32>
    %74 = arith.cmpf olt, %63, %73 : vector<1x128xf32>
    %cst_24 = arith.constant 8.000000e+00 : f32
    %75 = vector.broadcast %cst_24 : f32 to vector<1x128xf32>
    %76 = arith.cmpf olt, %69, %75 : vector<1x128xf32>
    %77 = arith.andi %74, %76 : vector<1x128xi1>
    %cst_25 = arith.constant 8.000000e+00 : f32
    %78 = vector.broadcast %cst_25 : f32 to vector<1x128xf32>
    %79 = arith.cmpf olt, %72, %78 : vector<1x128xf32>
    %80 = arith.andi %77, %79 : vector<1x128xi1>
    %81 = arith.extui %80 : vector<1x128xi1> to vector<1x128xi32>
    %82 = arith.sitofp %81 : vector<1x128xi32> to vector<1x128xf32>
    %83 = vector.broadcast %82 : vector<1x128xf32> to vector<8x128xf32>
    %84 = arith.mulf %52, %83 : vector<8x128xf32>
    %85 = arith.addf %4, %84 : vector<8x128xf32>
    %86 = arith.mulf %84, %52 : vector<8x128xf32>
    %87 = arith.addf %4, %86 : vector<8x128xf32>
    %c1_i32_26 = arith.constant 1 : i32
    %c0_i32_27 = arith.constant 0 : i32
    %88 = arith.addi %c1_i32_26, %c0_i32_27 : i32
    %c0_28 = arith.constant 0 : index
    %89 = arith.index_cast %88 : i32 to index
    %c0_29 = arith.constant 0 : index
    %c0_30 = arith.constant 0 : index
    %90 = vector.load %arg1[%c0_28, %89, %c0_29, %c0_30] : memref<1x10x8x128xbf16, #tpu.memory_space<vmem>>, vector<1x1x8x128xbf16>
    %91 = vector.shape_cast %90 : vector<1x1x8x128xbf16> to vector<8x128xbf16>
    %c1_i32_31 = arith.constant 1 : i32
    %92 = arith.addi %c1_i32_26, %c1_i32_31 : i32
    %c0_32 = arith.constant 0 : index
    %93 = arith.index_cast %92 : i32 to index
    %c0_33 = arith.constant 0 : index
    %c0_34 = arith.constant 0 : index
    %94 = vector.load %arg1[%c0_32, %93, %c0_33, %c0_34] : memref<1x10x8x128xbf16, #tpu.memory_space<vmem>>, vector<1x1x8x128xbf16>
    %95 = vector.shape_cast %94 : vector<1x1x8x128xbf16> to vector<8x128xbf16>
    %96 = tpu.concatenate %91, %95 in 1 : vector<8x128xbf16>, vector<8x128xbf16> -> vector<8x256xbf16>
    %97 = vector.extract_strided_slice %96 {offsets = [0, 1], sizes = [8, 128], strides = [1, 1]} : vector<8x256xbf16> to vector<8x128xbf16>
    %98 = vector.extract_strided_slice %96 {offsets = [0, 2], sizes = [8, 128], strides = [1, 1]} : vector<8x256xbf16> to vector<8x128xbf16>
    %99 = vector.extract_strided_slice %96 {offsets = [0, 10], sizes = [8, 128], strides = [1, 1]} : vector<8x256xbf16> to vector<8x128xbf16>
    %100 = vector.extract_strided_slice %96 {offsets = [0, 11], sizes = [8, 128], strides = [1, 1]} : vector<8x256xbf16> to vector<8x128xbf16>
    %101 = vector.extract_strided_slice %96 {offsets = [0, 12], sizes = [8, 128], strides = [1, 1]} : vector<8x256xbf16> to vector<8x128xbf16>
    %102 = vector.extract_strided_slice %96 {offsets = [0, 20], sizes = [8, 128], strides = [1, 1]} : vector<8x256xbf16> to vector<8x128xbf16>
    %103 = vector.extract_strided_slice %96 {offsets = [0, 21], sizes = [8, 128], strides = [1, 1]} : vector<8x256xbf16> to vector<8x128xbf16>
    %104 = vector.extract_strided_slice %96 {offsets = [0, 22], sizes = [8, 128], strides = [1, 1]} : vector<8x256xbf16> to vector<8x128xbf16>
    %105 = vector.extract_strided_slice %96 {offsets = [0, 100], sizes = [8, 128], strides = [1, 1]} : vector<8x256xbf16> to vector<8x128xbf16>
    %106 = vector.extract_strided_slice %96 {offsets = [0, 101], sizes = [8, 128], strides = [1, 1]} : vector<8x256xbf16> to vector<8x128xbf16>
    %107 = vector.extract_strided_slice %96 {offsets = [0, 102], sizes = [8, 128], strides = [1, 1]} : vector<8x256xbf16> to vector<8x128xbf16>
    %108 = vector.extract_strided_slice %96 {offsets = [0, 110], sizes = [8, 128], strides = [1, 1]} : vector<8x256xbf16> to vector<8x128xbf16>
    %109 = vector.extract_strided_slice %96 {offsets = [0, 111], sizes = [8, 128], strides = [1, 1]} : vector<8x256xbf16> to vector<8x128xbf16>
    %110 = vector.extract_strided_slice %96 {offsets = [0, 112], sizes = [8, 128], strides = [1, 1]} : vector<8x256xbf16> to vector<8x128xbf16>
    %111 = vector.extract_strided_slice %96 {offsets = [0, 120], sizes = [8, 128], strides = [1, 1]} : vector<8x256xbf16> to vector<8x128xbf16>
    %112 = vector.extract_strided_slice %96 {offsets = [0, 121], sizes = [8, 128], strides = [1, 1]} : vector<8x256xbf16> to vector<8x128xbf16>
    %113 = vector.extract_strided_slice %96 {offsets = [0, 122], sizes = [8, 128], strides = [1, 1]} : vector<8x256xbf16> to vector<8x128xbf16>
    %c2_i32_35 = arith.constant 2 : i32
    %114 = arith.addi %c1_i32_26, %c2_i32_35 : i32
    %c0_36 = arith.constant 0 : index
    %115 = arith.index_cast %114 : i32 to index
    %c0_37 = arith.constant 0 : index
    %c0_38 = arith.constant 0 : index
    %116 = vector.load %arg1[%c0_36, %115, %c0_37, %c0_38] : memref<1x10x8x128xbf16, #tpu.memory_space<vmem>>, vector<1x1x8x128xbf16>
    %117 = vector.shape_cast %116 : vector<1x1x8x128xbf16> to vector<8x128xbf16>
    %118 = tpu.concatenate %95, %117 in 1 : vector<8x128xbf16>, vector<8x128xbf16> -> vector<8x256xbf16>
    %119 = vector.extract_strided_slice %118 {offsets = [0, 72], sizes = [8, 128], strides = [1, 1]} : vector<8x256xbf16> to vector<8x128xbf16>
    %120 = vector.extract_strided_slice %118 {offsets = [0, 73], sizes = [8, 128], strides = [1, 1]} : vector<8x256xbf16> to vector<8x128xbf16>
    %121 = vector.extract_strided_slice %118 {offsets = [0, 74], sizes = [8, 128], strides = [1, 1]} : vector<8x256xbf16> to vector<8x128xbf16>
    %122 = vector.extract_strided_slice %118 {offsets = [0, 82], sizes = [8, 128], strides = [1, 1]} : vector<8x256xbf16> to vector<8x128xbf16>
    %123 = vector.extract_strided_slice %118 {offsets = [0, 83], sizes = [8, 128], strides = [1, 1]} : vector<8x256xbf16> to vector<8x128xbf16>
    %124 = vector.extract_strided_slice %118 {offsets = [0, 84], sizes = [8, 128], strides = [1, 1]} : vector<8x256xbf16> to vector<8x128xbf16>
    %125 = vector.extract_strided_slice %118 {offsets = [0, 92], sizes = [8, 128], strides = [1, 1]} : vector<8x256xbf16> to vector<8x128xbf16>
    %126 = vector.extract_strided_slice %118 {offsets = [0, 93], sizes = [8, 128], strides = [1, 1]} : vector<8x256xbf16> to vector<8x128xbf16>
    %127 = vector.extract_strided_slice %118 {offsets = [0, 94], sizes = [8, 128], strides = [1, 1]} : vector<8x256xbf16> to vector<8x128xbf16>
    %128 = tpu.concatenate %91, %97, %98, %99, %100, %101, %102, %103, %104, %105, %106, %107, %108, %109, %110, %111 in 0 : vector<8x128xbf16>, vector<8x128xbf16>, vector<8x128xbf16>, vector<8x128xbf16>, vector<8x128xbf16>, vector<8x128xbf16>, vector<8x128xbf16>, vector<8x128xbf16>, vector<8x128xbf16>, vector<8x128xbf16>, vector<8x128xbf16>, vector<8x128xbf16>, vector<8x128xbf16>, vector<8x128xbf16>, vector<8x128xbf16>, vector<8x128xbf16> -> vector<128x128xbf16>
    %129 = tpu.concatenate %112, %113, %119, %120, %121, %122, %123, %124, %125, %126, %127, %3 in 0 : vector<8x128xbf16>, vector<8x128xbf16>, vector<8x128xbf16>, vector<8x128xbf16>, vector<8x128xbf16>, vector<8x128xbf16>, vector<8x128xbf16>, vector<8x128xbf16>, vector<8x128xbf16>, vector<8x128xbf16>, vector<8x128xbf16>, vector<40x128xbf16> -> vector<128x128xbf16>
    %130 = tpu.concatenate %128, %129 in 0 : vector<128x128xbf16>, vector<128x128xbf16> -> vector<256x128xbf16>
    %cst_39 = arith.constant dense<0.000000e+00> : vector<8x128xf32>
    %131 = tpu.matmul %0, %130, %cst_39 {dimension_numbers = #tpu.dot_dimension_numbers<[1], [0], [0], [1], [0, 0, 1, 1], [], []>} : vector<8x256xbf16>, vector<256x128xbf16>, vector<8x128xf32> -> vector<8x128xf32>
    %132 = vector.broadcast %1 : vector<8x1xf32> to vector<8x128xf32>
    %133 = arith.addf %131, %132 : vector<8x128xf32>
    %cst_40 = arith.constant 0.000000e+00 : f32
    %134 = vector.broadcast %cst_40 : f32 to vector<8x128xf32>
    %135 = arith.maximumf %133, %134 : vector<8x128xf32>
    %c0_41 = arith.constant 0 : index
    %136 = arith.index_cast %c1_i32_26 : i32 to index
    %c0_42 = arith.constant 0 : index
    %c0_43 = arith.constant 0 : index
    %137 = vector.load %arg6[%c0_41, %136, %c0_42, %c0_43] : memref<1x8x8x128xf32, #tpu.memory_space<vmem>>, vector<1x1x8x128xf32>
    %138 = vector.shape_cast %137 : vector<1x1x8x128xf32> to vector<8x128xf32>
    %139 = vector.shape_cast %135 : vector<8x128xf32> to vector<1x1x8x128xf32>
    tpu.vector_store %arg6[%c0_41, %136, %c0_42, %c0_43], %139 {strides = array<i32>} : memref<1x8x8x128xf32, #tpu.memory_space<vmem>>, vector<1x1x8x128xf32>,
    %c128_i32_44 = arith.constant 128 : i32
    %140 = arith.muli %c1_i32_26, %c128_i32_44 : i32
    %141 = vector.broadcast %140 : i32 to vector<1x128xi32>
    %142 = arith.addi %141, %2 : vector<1x128xi32>
    %143 = arith.sitofp %142 : vector<1x128xi32> to vector<1x128xf32>
    %cst_45 = arith.constant 1.000000e+02 : f32
    %144 = vector.broadcast %cst_45 : f32 to vector<1x128xf32>
    %145 = arith.divf %143, %144 : vector<1x128xf32>
    %146 = math.floor %145 : vector<1x128xf32>
    %cst_46 = arith.constant 1.000000e+02 : f32
    %147 = vector.broadcast %cst_46 : f32 to vector<1x128xf32>
    %148 = arith.mulf %146, %147 : vector<1x128xf32>
    %149 = arith.subf %143, %148 : vector<1x128xf32>
    %cst_47 = arith.constant 1.000000e+01 : f32
    %150 = vector.broadcast %cst_47 : f32 to vector<1x128xf32>
    %151 = arith.divf %149, %150 : vector<1x128xf32>
    %152 = math.floor %151 : vector<1x128xf32>
    %cst_48 = arith.constant 1.000000e+01 : f32
    %153 = vector.broadcast %cst_48 : f32 to vector<1x128xf32>
    %154 = arith.mulf %152, %153 : vector<1x128xf32>
    %155 = arith.subf %149, %154 : vector<1x128xf32>
    %cst_49 = arith.constant 8.000000e+00 : f32
    %156 = vector.broadcast %cst_49 : f32 to vector<1x128xf32>
    %157 = arith.cmpf olt, %146, %156 : vector<1x128xf32>
    %cst_50 = arith.constant 8.000000e+00 : f32
    %158 = vector.broadcast %cst_50 : f32 to vector<1x128xf32>
    %159 = arith.cmpf olt, %152, %158 : vector<1x128xf32>
    %160 = arith.andi %157, %159 : vector<1x128xi1>
    %cst_51 = arith.constant 8.000000e+00 : f32
    %161 = vector.broadcast %cst_51 : f32 to vector<1x128xf32>
    %162 = arith.cmpf olt, %155, %161 : vector<1x128xf32>
    %163 = arith.andi %160, %162 : vector<1x128xi1>
    %164 = arith.extui %163 : vector<1x128xi1> to vector<1x128xi32>
    %165 = arith.sitofp %164 : vector<1x128xi32> to vector<1x128xf32>
    %166 = vector.broadcast %165 : vector<1x128xf32> to vector<8x128xf32>
    %167 = arith.mulf %135, %166 : vector<8x128xf32>
    %168 = arith.addf %85, %167 : vector<8x128xf32>
    %169 = arith.mulf %167, %135 : vector<8x128xf32>
    %170 = arith.addf %87, %169 : vector<8x128xf32>
    %c2_i32_52 = arith.constant 2 : i32
    %c0_i32_53 = arith.constant 0 : i32
    %171 = arith.addi %c2_i32_52, %c0_i32_53 : i32
    %c0_54 = arith.constant 0 : index
    %172 = arith.index_cast %171 : i32 to index
    %c0_55 = arith.constant 0 : index
    %c0_56 = arith.constant 0 : index
    %173 = vector.load %arg1[%c0_54, %172, %c0_55, %c0_56] : memref<1x10x8x128xbf16, #tpu.memory_space<vmem>>, vector<1x1x8x128xbf16>
    %174 = vector.shape_cast %173 : vector<1x1x8x128xbf16> to vector<8x128xbf16>
    %c1_i32_57 = arith.constant 1 : i32
    %175 = arith.addi %c2_i32_52, %c1_i32_57 : i32
    %c0_58 = arith.constant 0 : index
    %176 = arith.index_cast %175 : i32 to index
    %c0_59 = arith.constant 0 : index
    %c0_60 = arith.constant 0 : index
    %177 = vector.load %arg1[%c0_58, %176, %c0_59, %c0_60] : memref<1x10x8x128xbf16, #tpu.memory_space<vmem>>, vector<1x1x8x128xbf16>
    %178 = vector.shape_cast %177 : vector<1x1x8x128xbf16> to vector<8x128xbf16>
    %179 = tpu.concatenate %174, %178 in 1 : vector<8x128xbf16>, vector<8x128xbf16> -> vector<8x256xbf16>
    %180 = vector.extract_strided_slice %179 {offsets = [0, 1], sizes = [8, 128], strides = [1, 1]} : vector<8x256xbf16> to vector<8x128xbf16>
    %181 = vector.extract_strided_slice %179 {offsets = [0, 2], sizes = [8, 128], strides = [1, 1]} : vector<8x256xbf16> to vector<8x128xbf16>
    %182 = vector.extract_strided_slice %179 {offsets = [0, 10], sizes = [8, 128], strides = [1, 1]} : vector<8x256xbf16> to vector<8x128xbf16>
    %183 = vector.extract_strided_slice %179 {offsets = [0, 11], sizes = [8, 128], strides = [1, 1]} : vector<8x256xbf16> to vector<8x128xbf16>
    %184 = vector.extract_strided_slice %179 {offsets = [0, 12], sizes = [8, 128], strides = [1, 1]} : vector<8x256xbf16> to vector<8x128xbf16>
    %185 = vector.extract_strided_slice %179 {offsets = [0, 20], sizes = [8, 128], strides = [1, 1]} : vector<8x256xbf16> to vector<8x128xbf16>
    %186 = vector.extract_strided_slice %179 {offsets = [0, 21], sizes = [8, 128], strides = [1, 1]} : vector<8x256xbf16> to vector<8x128xbf16>
    %187 = vector.extract_strided_slice %179 {offsets = [0, 22], sizes = [8, 128], strides = [1, 1]} : vector<8x256xbf16> to vector<8x128xbf16>
    %188 = vector.extract_strided_slice %179 {offsets = [0, 100], sizes = [8, 128], strides = [1, 1]} : vector<8x256xbf16> to vector<8x128xbf16>
    %189 = vector.extract_strided_slice %179 {offsets = [0, 101], sizes = [8, 128], strides = [1, 1]} : vector<8x256xbf16> to vector<8x128xbf16>
    %190 = vector.extract_strided_slice %179 {offsets = [0, 102], sizes = [8, 128], strides = [1, 1]} : vector<8x256xbf16> to vector<8x128xbf16>
    %191 = vector.extract_strided_slice %179 {offsets = [0, 110], sizes = [8, 128], strides = [1, 1]} : vector<8x256xbf16> to vector<8x128xbf16>
    %192 = vector.extract_strided_slice %179 {offsets = [0, 111], sizes = [8, 128], strides = [1, 1]} : vector<8x256xbf16> to vector<8x128xbf16>
    %193 = vector.extract_strided_slice %179 {offsets = [0, 112], sizes = [8, 128], strides = [1, 1]} : vector<8x256xbf16> to vector<8x128xbf16>
    %194 = vector.extract_strided_slice %179 {offsets = [0, 120], sizes = [8, 128], strides = [1, 1]} : vector<8x256xbf16> to vector<8x128xbf16>
    %195 = vector.extract_strided_slice %179 {offsets = [0, 121], sizes = [8, 128], strides = [1, 1]} : vector<8x256xbf16> to vector<8x128xbf16>
    %196 = vector.extract_strided_slice %179 {offsets = [0, 122], sizes = [8, 128], strides = [1, 1]} : vector<8x256xbf16> to vector<8x128xbf16>
    %c2_i32_61 = arith.constant 2 : i32
    %197 = arith.addi %c2_i32_52, %c2_i32_61 : i32
    %c0_62 = arith.constant 0 : index
    %198 = arith.index_cast %197 : i32 to index
    %c0_63 = arith.constant 0 : index
    %c0_64 = arith.constant 0 : index
    %199 = vector.load %arg1[%c0_62, %198, %c0_63, %c0_64] : memref<1x10x8x128xbf16, #tpu.memory_space<vmem>>, vector<1x1x8x128xbf16>
    %200 = vector.shape_cast %199 : vector<1x1x8x128xbf16> to vector<8x128xbf16>
    %201 = tpu.concatenate %178, %200 in 1 : vector<8x128xbf16>, vector<8x128xbf16> -> vector<8x256xbf16>
    %202 = vector.extract_strided_slice %201 {offsets = [0, 72], sizes = [8, 128], strides = [1, 1]} : vector<8x256xbf16> to vector<8x128xbf16>
    %203 = vector.extract_strided_slice %201 {offsets = [0, 73], sizes = [8, 128], strides = [1, 1]} : vector<8x256xbf16> to vector<8x128xbf16>
    %204 = vector.extract_strided_slice %201 {offsets = [0, 74], sizes = [8, 128], strides = [1, 1]} : vector<8x256xbf16> to vector<8x128xbf16>
    %205 = vector.extract_strided_slice %201 {offsets = [0, 82], sizes = [8, 128], strides = [1, 1]} : vector<8x256xbf16> to vector<8x128xbf16>
    %206 = vector.extract_strided_slice %201 {offsets = [0, 83], sizes = [8, 128], strides = [1, 1]} : vector<8x256xbf16> to vector<8x128xbf16>
    %207 = vector.extract_strided_slice %201 {offsets = [0, 84], sizes = [8, 128], strides = [1, 1]} : vector<8x256xbf16> to vector<8x128xbf16>
    %208 = vector.extract_strided_slice %201 {offsets = [0, 92], sizes = [8, 128], strides = [1, 1]} : vector<8x256xbf16> to vector<8x128xbf16>
    %209 = vector.extract_strided_slice %201 {offsets = [0, 93], sizes = [8, 128], strides = [1, 1]} : vector<8x256xbf16> to vector<8x128xbf16>
    %210 = vector.extract_strided_slice %201 {offsets = [0, 94], sizes = [8, 128], strides = [1, 1]} : vector<8x256xbf16> to vector<8x128xbf16>
    %211 = tpu.concatenate %174, %180, %181, %182, %183, %184, %185, %186, %187, %188, %189, %190, %191, %192, %193, %194 in 0 : vector<8x128xbf16>, vector<8x128xbf16>, vector<8x128xbf16>, vector<8x128xbf16>, vector<8x128xbf16>, vector<8x128xbf16>, vector<8x128xbf16>, vector<8x128xbf16>, vector<8x128xbf16>, vector<8x128xbf16>, vector<8x128xbf16>, vector<8x128xbf16>, vector<8x128xbf16>, vector<8x128xbf16>, vector<8x128xbf16>, vector<8x128xbf16> -> vector<128x128xbf16>
    %212 = tpu.concatenate %195, %196, %202, %203, %204, %205, %206, %207, %208, %209, %210, %3 in 0 : vector<8x128xbf16>, vector<8x128xbf16>, vector<8x128xbf16>, vector<8x128xbf16>, vector<8x128xbf16>, vector<8x128xbf16>, vector<8x128xbf16>, vector<8x128xbf16>, vector<8x128xbf16>, vector<8x128xbf16>, vector<8x128xbf16>, vector<40x128xbf16> -> vector<128x128xbf16>
    %213 = tpu.concatenate %211, %212 in 0 : vector<128x128xbf16>, vector<128x128xbf16> -> vector<256x128xbf16>
    %cst_65 = arith.constant dense<0.000000e+00> : vector<8x128xf32>
    %214 = tpu.matmul %0, %213, %cst_65 {dimension_numbers = #tpu.dot_dimension_numbers<[1], [0], [0], [1], [0, 0, 1, 1], [], []>} : vector<8x256xbf16>, vector<256x128xbf16>, vector<8x128xf32> -> vector<8x128xf32>
    %215 = vector.broadcast %1 : vector<8x1xf32> to vector<8x128xf32>
    %216 = arith.addf %214, %215 : vector<8x128xf32>
    %cst_66 = arith.constant 0.000000e+00 : f32
    %217 = vector.broadcast %cst_66 : f32 to vector<8x128xf32>
    %218 = arith.maximumf %216, %217 : vector<8x128xf32>
    %c0_67 = arith.constant 0 : index
    %219 = arith.index_cast %c2_i32_52 : i32 to index
    %c0_68 = arith.constant 0 : index
    %c0_69 = arith.constant 0 : index
    %220 = vector.load %arg6[%c0_67, %219, %c0_68, %c0_69] : memref<1x8x8x128xf32, #tpu.memory_space<vmem>>, vector<1x1x8x128xf32>
    %221 = vector.shape_cast %220 : vector<1x1x8x128xf32> to vector<8x128xf32>
    %222 = vector.shape_cast %218 : vector<8x128xf32> to vector<1x1x8x128xf32>
    tpu.vector_store %arg6[%c0_67, %219, %c0_68, %c0_69], %222 {strides = array<i32>} : memref<1x8x8x128xf32, #tpu.memory_space<vmem>>, vector<1x1x8x128xf32>,
    %c128_i32_70 = arith.constant 128 : i32
    %223 = arith.muli %c2_i32_52, %c128_i32_70 : i32
    %224 = vector.broadcast %223 : i32 to vector<1x128xi32>
    %225 = arith.addi %224, %2 : vector<1x128xi32>
    %226 = arith.sitofp %225 : vector<1x128xi32> to vector<1x128xf32>
    %cst_71 = arith.constant 1.000000e+02 : f32
    %227 = vector.broadcast %cst_71 : f32 to vector<1x128xf32>
    %228 = arith.divf %226, %227 : vector<1x128xf32>
    %229 = math.floor %228 : vector<1x128xf32>
    %cst_72 = arith.constant 1.000000e+02 : f32
    %230 = vector.broadcast %cst_72 : f32 to vector<1x128xf32>
    %231 = arith.mulf %229, %230 : vector<1x128xf32>
    %232 = arith.subf %226, %231 : vector<1x128xf32>
    %cst_73 = arith.constant 1.000000e+01 : f32
    %233 = vector.broadcast %cst_73 : f32 to vector<1x128xf32>
    %234 = arith.divf %232, %233 : vector<1x128xf32>
    %235 = math.floor %234 : vector<1x128xf32>
    %cst_74 = arith.constant 1.000000e+01 : f32
    %236 = vector.broadcast %cst_74 : f32 to vector<1x128xf32>
    %237 = arith.mulf %235, %236 : vector<1x128xf32>
    %238 = arith.subf %232, %237 : vector<1x128xf32>
    %cst_75 = arith.constant 8.000000e+00 : f32
    %239 = vector.broadcast %cst_75 : f32 to vector<1x128xf32>
    %240 = arith.cmpf olt, %229, %239 : vector<1x128xf32>
    %cst_76 = arith.constant 8.000000e+00 : f32
    %241 = vector.broadcast %cst_76 : f32 to vector<1x128xf32>
    %242 = arith.cmpf olt, %235, %241 : vector<1x128xf32>
    %243 = arith.andi %240, %242 : vector<1x128xi1>
    %cst_77 = arith.constant 8.000000e+00 : f32
    %244 = vector.broadcast %cst_77 : f32 to vector<1x128xf32>
    %245 = arith.cmpf olt, %238, %244 : vector<1x128xf32>
    %246 = arith.andi %243, %245 : vector<1x128xi1>
    %247 = arith.extui %246 : vector<1x128xi1> to vector<1x128xi32>
    %248 = arith.sitofp %247 : vector<1x128xi32> to vector<1x128xf32>
    %249 = vector.broadcast %248 : vector<1x128xf32> to vector<8x128xf32>
    %250 = arith.mulf %218, %249 : vector<8x128xf32>
    %251 = arith.addf %168, %250 : vector<8x128xf32>
    %252 = arith.mulf %250, %218 : vector<8x128xf32>
    %253 = arith.addf %170, %252 : vector<8x128xf32>
    %c3_i32 = arith.constant 3 : i32
    %c0_i32_78 = arith.constant 0 : i32
    %254 = arith.addi %c3_i32, %c0_i32_78 : i32
    %c0_79 = arith.constant 0 : index
    %255 = arith.index_cast %254 : i32 to index
    %c0_80 = arith.constant 0 : index
    %c0_81 = arith.constant 0 : index
    %256 = vector.load %arg1[%c0_79, %255, %c0_80, %c0_81] : memref<1x10x8x128xbf16, #tpu.memory_space<vmem>>, vector<1x1x8x128xbf16>
    %257 = vector.shape_cast %256 : vector<1x1x8x128xbf16> to vector<8x128xbf16>
    %c1_i32_82 = arith.constant 1 : i32
    %258 = arith.addi %c3_i32, %c1_i32_82 : i32
    %c0_83 = arith.constant 0 : index
    %259 = arith.index_cast %258 : i32 to index
    %c0_84 = arith.constant 0 : index
    %c0_85 = arith.constant 0 : index
    %260 = vector.load %arg1[%c0_83, %259, %c0_84, %c0_85] : memref<1x10x8x128xbf16, #tpu.memory_space<vmem>>, vector<1x1x8x128xbf16>
    %261 = vector.shape_cast %260 : vector<1x1x8x128xbf16> to vector<8x128xbf16>
    %262 = tpu.concatenate %257, %261 in 1 : vector<8x128xbf16>, vector<8x128xbf16> -> vector<8x256xbf16>
    %263 = vector.extract_strided_slice %262 {offsets = [0, 1], sizes = [8, 128], strides = [1, 1]} : vector<8x256xbf16> to vector<8x128xbf16>
    %264 = vector.extract_strided_slice %262 {offsets = [0, 2], sizes = [8, 128], strides = [1, 1]} : vector<8x256xbf16> to vector<8x128xbf16>
    %265 = vector.extract_strided_slice %262 {offsets = [0, 10], sizes = [8, 128], strides = [1, 1]} : vector<8x256xbf16> to vector<8x128xbf16>
    %266 = vector.extract_strided_slice %262 {offsets = [0, 11], sizes = [8, 128], strides = [1, 1]} : vector<8x256xbf16> to vector<8x128xbf16>
    %267 = vector.extract_strided_slice %262 {offsets = [0, 12], sizes = [8, 128], strides = [1, 1]} : vector<8x256xbf16> to vector<8x128xbf16>
    %268 = vector.extract_strided_slice %262 {offsets = [0, 20], sizes = [8, 128], strides = [1, 1]} : vector<8x256xbf16> to vector<8x128xbf16>
    %269 = vector.extract_strided_slice %262 {offsets = [0, 21], sizes = [8, 128], strides = [1, 1]} : vector<8x256xbf16> to vector<8x128xbf16>
    %270 = vector.extract_strided_slice %262 {offsets = [0, 22], sizes = [8, 128], strides = [1, 1]} : vector<8x256xbf16> to vector<8x128xbf16>
    %271 = vector.extract_strided_slice %262 {offsets = [0, 100], sizes = [8, 128], strides = [1, 1]} : vector<8x256xbf16> to vector<8x128xbf16>
    %272 = vector.extract_strided_slice %262 {offsets = [0, 101], sizes = [8, 128], strides = [1, 1]} : vector<8x256xbf16> to vector<8x128xbf16>
    %273 = vector.extract_strided_slice %262 {offsets = [0, 102], sizes = [8, 128], strides = [1, 1]} : vector<8x256xbf16> to vector<8x128xbf16>
    %274 = vector.extract_strided_slice %262 {offsets = [0, 110], sizes = [8, 128], strides = [1, 1]} : vector<8x256xbf16> to vector<8x128xbf16>
    %275 = vector.extract_strided_slice %262 {offsets = [0, 111], sizes = [8, 128], strides = [1, 1]} : vector<8x256xbf16> to vector<8x128xbf16>
    %276 = vector.extract_strided_slice %262 {offsets = [0, 112], sizes = [8, 128], strides = [1, 1]} : vector<8x256xbf16> to vector<8x128xbf16>
    %277 = vector.extract_strided_slice %262 {offsets = [0, 120], sizes = [8, 128], strides = [1, 1]} : vector<8x256xbf16> to vector<8x128xbf16>
    %278 = vector.extract_strided_slice %262 {offsets = [0, 121], sizes = [8, 128], strides = [1, 1]} : vector<8x256xbf16> to vector<8x128xbf16>
    %279 = vector.extract_strided_slice %262 {offsets = [0, 122], sizes = [8, 128], strides = [1, 1]} : vector<8x256xbf16> to vector<8x128xbf16>
    %c2_i32_86 = arith.constant 2 : i32
    %280 = arith.addi %c3_i32, %c2_i32_86 : i32
    %c0_87 = arith.constant 0 : index
    %281 = arith.index_cast %280 : i32 to index
    %c0_88 = arith.constant 0 : index
    %c0_89 = arith.constant 0 : index
    %282 = vector.load %arg1[%c0_87, %281, %c0_88, %c0_89] : memref<1x10x8x128xbf16, #tpu.memory_space<vmem>>, vector<1x1x8x128xbf16>
    %283 = vector.shape_cast %282 : vector<1x1x8x128xbf16> to vector<8x128xbf16>
    %284 = tpu.concatenate %261, %283 in 1 : vector<8x128xbf16>, vector<8x128xbf16> -> vector<8x256xbf16>
    %285 = vector.extract_strided_slice %284 {offsets = [0, 72], sizes = [8, 128], strides = [1, 1]} : vector<8x256xbf16> to vector<8x128xbf16>
    %286 = vector.extract_strided_slice %284 {offsets = [0, 73], sizes = [8, 128], strides = [1, 1]} : vector<8x256xbf16> to vector<8x128xbf16>
    %287 = vector.extract_strided_slice %284 {offsets = [0, 74], sizes = [8, 128], strides = [1, 1]} : vector<8x256xbf16> to vector<8x128xbf16>
    %288 = vector.extract_strided_slice %284 {offsets = [0, 82], sizes = [8, 128], strides = [1, 1]} : vector<8x256xbf16> to vector<8x128xbf16>
    %289 = vector.extract_strided_slice %284 {offsets = [0, 83], sizes = [8, 128], strides = [1, 1]} : vector<8x256xbf16> to vector<8x128xbf16>
    %290 = vector.extract_strided_slice %284 {offsets = [0, 84], sizes = [8, 128], strides = [1, 1]} : vector<8x256xbf16> to vector<8x128xbf16>
    %291 = vector.extract_strided_slice %284 {offsets = [0, 92], sizes = [8, 128], strides = [1, 1]} : vector<8x256xbf16> to vector<8x128xbf16>
    %292 = vector.extract_strided_slice %284 {offsets = [0, 93], sizes = [8, 128], strides = [1, 1]} : vector<8x256xbf16> to vector<8x128xbf16>
    %293 = vector.extract_strided_slice %284 {offsets = [0, 94], sizes = [8, 128], strides = [1, 1]} : vector<8x256xbf16> to vector<8x128xbf16>
    %294 = tpu.concatenate %257, %263, %264, %265, %266, %267, %268, %269, %270, %271, %272, %273, %274, %275, %276, %277 in 0 : vector<8x128xbf16>, vector<8x128xbf16>, vector<8x128xbf16>, vector<8x128xbf16>, vector<8x128xbf16>, vector<8x128xbf16>, vector<8x128xbf16>, vector<8x128xbf16>, vector<8x128xbf16>, vector<8x128xbf16>, vector<8x128xbf16>, vector<8x128xbf16>, vector<8x128xbf16>, vector<8x128xbf16>, vector<8x128xbf16>, vector<8x128xbf16> -> vector<128x128xbf16>
    %295 = tpu.concatenate %278, %279, %285, %286, %287, %288, %289, %290, %291, %292, %293, %3 in 0 : vector<8x128xbf16>, vector<8x128xbf16>, vector<8x128xbf16>, vector<8x128xbf16>, vector<8x128xbf16>, vector<8x128xbf16>, vector<8x128xbf16>, vector<8x128xbf16>, vector<8x128xbf16>, vector<8x128xbf16>, vector<8x128xbf16>, vector<40x128xbf16> -> vector<128x128xbf16>
    %296 = tpu.concatenate %294, %295 in 0 : vector<128x128xbf16>, vector<128x128xbf16> -> vector<256x128xbf16>
    %cst_90 = arith.constant dense<0.000000e+00> : vector<8x128xf32>
    %297 = tpu.matmul %0, %296, %cst_90 {dimension_numbers = #tpu.dot_dimension_numbers<[1], [0], [0], [1], [0, 0, 1, 1], [], []>} : vector<8x256xbf16>, vector<256x128xbf16>, vector<8x128xf32> -> vector<8x128xf32>
    %298 = vector.broadcast %1 : vector<8x1xf32> to vector<8x128xf32>
    %299 = arith.addf %297, %298 : vector<8x128xf32>
    %cst_91 = arith.constant 0.000000e+00 : f32
    %300 = vector.broadcast %cst_91 : f32 to vector<8x128xf32>
    %301 = arith.maximumf %299, %300 : vector<8x128xf32>
    %c0_92 = arith.constant 0 : index
    %302 = arith.index_cast %c3_i32 : i32 to index
    %c0_93 = arith.constant 0 : index
    %c0_94 = arith.constant 0 : index
    %303 = vector.load %arg6[%c0_92, %302, %c0_93, %c0_94] : memref<1x8x8x128xf32, #tpu.memory_space<vmem>>, vector<1x1x8x128xf32>
    %304 = vector.shape_cast %303 : vector<1x1x8x128xf32> to vector<8x128xf32>
    %305 = vector.shape_cast %301 : vector<8x128xf32> to vector<1x1x8x128xf32>
    tpu.vector_store %arg6[%c0_92, %302, %c0_93, %c0_94], %305 {strides = array<i32>} : memref<1x8x8x128xf32, #tpu.memory_space<vmem>>, vector<1x1x8x128xf32>,
    %c128_i32_95 = arith.constant 128 : i32
    %306 = arith.muli %c3_i32, %c128_i32_95 : i32
    %307 = vector.broadcast %306 : i32 to vector<1x128xi32>
    %308 = arith.addi %307, %2 : vector<1x128xi32>
    %309 = arith.sitofp %308 : vector<1x128xi32> to vector<1x128xf32>
    %cst_96 = arith.constant 1.000000e+02 : f32
    %310 = vector.broadcast %cst_96 : f32 to vector<1x128xf32>
    %311 = arith.divf %309, %310 : vector<1x128xf32>
    %312 = math.floor %311 : vector<1x128xf32>
    %cst_97 = arith.constant 1.000000e+02 : f32
    %313 = vector.broadcast %cst_97 : f32 to vector<1x128xf32>
    %314 = arith.mulf %312, %313 : vector<1x128xf32>
    %315 = arith.subf %309, %314 : vector<1x128xf32>
    %cst_98 = arith.constant 1.000000e+01 : f32
    %316 = vector.broadcast %cst_98 : f32 to vector<1x128xf32>
    %317 = arith.divf %315, %316 : vector<1x128xf32>
    %318 = math.floor %317 : vector<1x128xf32>
    %cst_99 = arith.constant 1.000000e+01 : f32
    %319 = vector.broadcast %cst_99 : f32 to vector<1x128xf32>
    %320 = arith.mulf %318, %319 : vector<1x128xf32>
    %321 = arith.subf %315, %320 : vector<1x128xf32>
    %cst_100 = arith.constant 8.000000e+00 : f32
    %322 = vector.broadcast %cst_100 : f32 to vector<1x128xf32>
    %323 = arith.cmpf olt, %312, %322 : vector<1x128xf32>
    %cst_101 = arith.constant 8.000000e+00 : f32
    %324 = vector.broadcast %cst_101 : f32 to vector<1x128xf32>
    %325 = arith.cmpf olt, %318, %324 : vector<1x128xf32>
    %326 = arith.andi %323, %325 : vector<1x128xi1>
    %cst_102 = arith.constant 8.000000e+00 : f32
    %327 = vector.broadcast %cst_102 : f32 to vector<1x128xf32>
    %328 = arith.cmpf olt, %321, %327 : vector<1x128xf32>
    %329 = arith.andi %326, %328 : vector<1x128xi1>
    %330 = arith.extui %329 : vector<1x128xi1> to vector<1x128xi32>
    %331 = arith.sitofp %330 : vector<1x128xi32> to vector<1x128xf32>
    %332 = vector.broadcast %331 : vector<1x128xf32> to vector<8x128xf32>
    %333 = arith.mulf %301, %332 : vector<8x128xf32>
    %334 = arith.addf %251, %333 : vector<8x128xf32>
    %335 = arith.mulf %333, %301 : vector<8x128xf32>
    %336 = arith.addf %253, %335 : vector<8x128xf32>
    %c4_i32 = arith.constant 4 : i32
    %c0_i32_103 = arith.constant 0 : i32
    %337 = arith.addi %c4_i32, %c0_i32_103 : i32
    %c0_104 = arith.constant 0 : index
    %338 = arith.index_cast %337 : i32 to index
    %c0_105 = arith.constant 0 : index
    %c0_106 = arith.constant 0 : index
    %339 = vector.load %arg1[%c0_104, %338, %c0_105, %c0_106] : memref<1x10x8x128xbf16, #tpu.memory_space<vmem>>, vector<1x1x8x128xbf16>
    %340 = vector.shape_cast %339 : vector<1x1x8x128xbf16> to vector<8x128xbf16>
    %c1_i32_107 = arith.constant 1 : i32
    %341 = arith.addi %c4_i32, %c1_i32_107 : i32
    %c0_108 = arith.constant 0 : index
    %342 = arith.index_cast %341 : i32 to index
    %c0_109 = arith.constant 0 : index
    %c0_110 = arith.constant 0 : index
    %343 = vector.load %arg1[%c0_108, %342, %c0_109, %c0_110] : memref<1x10x8x128xbf16, #tpu.memory_space<vmem>>, vector<1x1x8x128xbf16>
    %344 = vector.shape_cast %343 : vector<1x1x8x128xbf16> to vector<8x128xbf16>
    %345 = tpu.concatenate %340, %344 in 1 : vector<8x128xbf16>, vector<8x128xbf16> -> vector<8x256xbf16>
    %346 = vector.extract_strided_slice %345 {offsets = [0, 1], sizes = [8, 128], strides = [1, 1]} : vector<8x256xbf16> to vector<8x128xbf16>
    %347 = vector.extract_strided_slice %345 {offsets = [0, 2], sizes = [8, 128], strides = [1, 1]} : vector<8x256xbf16> to vector<8x128xbf16>
    %348 = vector.extract_strided_slice %345 {offsets = [0, 10], sizes = [8, 128], strides = [1, 1]} : vector<8x256xbf16> to vector<8x128xbf16>
    %349 = vector.extract_strided_slice %345 {offsets = [0, 11], sizes = [8, 128], strides = [1, 1]} : vector<8x256xbf16> to vector<8x128xbf16>
    %350 = vector.extract_strided_slice %345 {offsets = [0, 12], sizes = [8, 128], strides = [1, 1]} : vector<8x256xbf16> to vector<8x128xbf16>
    %351 = vector.extract_strided_slice %345 {offsets = [0, 20], sizes = [8, 128], strides = [1, 1]} : vector<8x256xbf16> to vector<8x128xbf16>
    %352 = vector.extract_strided_slice %345 {offsets = [0, 21], sizes = [8, 128], strides = [1, 1]} : vector<8x256xbf16> to vector<8x128xbf16>
    %353 = vector.extract_strided_slice %345 {offsets = [0, 22], sizes = [8, 128], strides = [1, 1]} : vector<8x256xbf16> to vector<8x128xbf16>
    %354 = vector.extract_strided_slice %345 {offsets = [0, 100], sizes = [8, 128], strides = [1, 1]} : vector<8x256xbf16> to vector<8x128xbf16>
    %355 = vector.extract_strided_slice %345 {offsets = [0, 101], sizes = [8, 128], strides = [1, 1]} : vector<8x256xbf16> to vector<8x128xbf16>
    %356 = vector.extract_strided_slice %345 {offsets = [0, 102], sizes = [8, 128], strides = [1, 1]} : vector<8x256xbf16> to vector<8x128xbf16>
    %357 = vector.extract_strided_slice %345 {offsets = [0, 110], sizes = [8, 128], strides = [1, 1]} : vector<8x256xbf16> to vector<8x128xbf16>
    %358 = vector.extract_strided_slice %345 {offsets = [0, 111], sizes = [8, 128], strides = [1, 1]} : vector<8x256xbf16> to vector<8x128xbf16>
    %359 = vector.extract_strided_slice %345 {offsets = [0, 112], sizes = [8, 128], strides = [1, 1]} : vector<8x256xbf16> to vector<8x128xbf16>
    %360 = vector.extract_strided_slice %345 {offsets = [0, 120], sizes = [8, 128], strides = [1, 1]} : vector<8x256xbf16> to vector<8x128xbf16>
    %361 = vector.extract_strided_slice %345 {offsets = [0, 121], sizes = [8, 128], strides = [1, 1]} : vector<8x256xbf16> to vector<8x128xbf16>
    %362 = vector.extract_strided_slice %345 {offsets = [0, 122], sizes = [8, 128], strides = [1, 1]} : vector<8x256xbf16> to vector<8x128xbf16>
    %c2_i32_111 = arith.constant 2 : i32
    %363 = arith.addi %c4_i32, %c2_i32_111 : i32
    %c0_112 = arith.constant 0 : index
    %364 = arith.index_cast %363 : i32 to index
    %c0_113 = arith.constant 0 : index
    %c0_114 = arith.constant 0 : index
    %365 = vector.load %arg1[%c0_112, %364, %c0_113, %c0_114] : memref<1x10x8x128xbf16, #tpu.memory_space<vmem>>, vector<1x1x8x128xbf16>
    %366 = vector.shape_cast %365 : vector<1x1x8x128xbf16> to vector<8x128xbf16>
    %367 = tpu.concatenate %344, %366 in 1 : vector<8x128xbf16>, vector<8x128xbf16> -> vector<8x256xbf16>
    %368 = vector.extract_strided_slice %367 {offsets = [0, 72], sizes = [8, 128], strides = [1, 1]} : vector<8x256xbf16> to vector<8x128xbf16>
    %369 = vector.extract_strided_slice %367 {offsets = [0, 73], sizes = [8, 128], strides = [1, 1]} : vector<8x256xbf16> to vector<8x128xbf16>
    %370 = vector.extract_strided_slice %367 {offsets = [0, 74], sizes = [8, 128], strides = [1, 1]} : vector<8x256xbf16> to vector<8x128xbf16>
    %371 = vector.extract_strided_slice %367 {offsets = [0, 82], sizes = [8, 128], strides = [1, 1]} : vector<8x256xbf16> to vector<8x128xbf16>
    %372 = vector.extract_strided_slice %367 {offsets = [0, 83], sizes = [8, 128], strides = [1, 1]} : vector<8x256xbf16> to vector<8x128xbf16>
    %373 = vector.extract_strided_slice %367 {offsets = [0, 84], sizes = [8, 128], strides = [1, 1]} : vector<8x256xbf16> to vector<8x128xbf16>
    %374 = vector.extract_strided_slice %367 {offsets = [0, 92], sizes = [8, 128], strides = [1, 1]} : vector<8x256xbf16> to vector<8x128xbf16>
    %375 = vector.extract_strided_slice %367 {offsets = [0, 93], sizes = [8, 128], strides = [1, 1]} : vector<8x256xbf16> to vector<8x128xbf16>
    %376 = vector.extract_strided_slice %367 {offsets = [0, 94], sizes = [8, 128], strides = [1, 1]} : vector<8x256xbf16> to vector<8x128xbf16>
    %377 = tpu.concatenate %340, %346, %347, %348, %349, %350, %351, %352, %353, %354, %355, %356, %357, %358, %359, %360 in 0 : vector<8x128xbf16>, vector<8x128xbf16>, vector<8x128xbf16>, vector<8x128xbf16>, vector<8x128xbf16>, vector<8x128xbf16>, vector<8x128xbf16>, vector<8x128xbf16>, vector<8x128xbf16>, vector<8x128xbf16>, vector<8x128xbf16>, vector<8x128xbf16>, vector<8x128xbf16>, vector<8x128xbf16>, vector<8x128xbf16>, vector<8x128xbf16> -> vector<128x128xbf16>
    %378 = tpu.concatenate %361, %362, %368, %369, %370, %371, %372, %373, %374, %375, %376, %3 in 0 : vector<8x128xbf16>, vector<8x128xbf16>, vector<8x128xbf16>, vector<8x128xbf16>, vector<8x128xbf16>, vector<8x128xbf16>, vector<8x128xbf16>, vector<8x128xbf16>, vector<8x128xbf16>, vector<8x128xbf16>, vector<8x128xbf16>, vector<40x128xbf16> -> vector<128x128xbf16>
    %379 = tpu.concatenate %377, %378 in 0 : vector<128x128xbf16>, vector<128x128xbf16> -> vector<256x128xbf16>
    %cst_115 = arith.constant dense<0.000000e+00> : vector<8x128xf32>
    %380 = tpu.matmul %0, %379, %cst_115 {dimension_numbers = #tpu.dot_dimension_numbers<[1], [0], [0], [1], [0, 0, 1, 1], [], []>} : vector<8x256xbf16>, vector<256x128xbf16>, vector<8x128xf32> -> vector<8x128xf32>
    %381 = vector.broadcast %1 : vector<8x1xf32> to vector<8x128xf32>
    %382 = arith.addf %380, %381 : vector<8x128xf32>
    %cst_116 = arith.constant 0.000000e+00 : f32
    %383 = vector.broadcast %cst_116 : f32 to vector<8x128xf32>
    %384 = arith.maximumf %382, %383 : vector<8x128xf32>
    %c0_117 = arith.constant 0 : index
    %385 = arith.index_cast %c4_i32 : i32 to index
    %c0_118 = arith.constant 0 : index
    %c0_119 = arith.constant 0 : index
    %386 = vector.load %arg6[%c0_117, %385, %c0_118, %c0_119] : memref<1x8x8x128xf32, #tpu.memory_space<vmem>>, vector<1x1x8x128xf32>
    %387 = vector.shape_cast %386 : vector<1x1x8x128xf32> to vector<8x128xf32>
    %388 = vector.shape_cast %384 : vector<8x128xf32> to vector<1x1x8x128xf32>
    tpu.vector_store %arg6[%c0_117, %385, %c0_118, %c0_119], %388 {strides = array<i32>} : memref<1x8x8x128xf32, #tpu.memory_space<vmem>>, vector<1x1x8x128xf32>,
    %c128_i32_120 = arith.constant 128 : i32
    %389 = arith.muli %c4_i32, %c128_i32_120 : i32
    %390 = vector.broadcast %389 : i32 to vector<1x128xi32>
    %391 = arith.addi %390, %2 : vector<1x128xi32>
    %392 = arith.sitofp %391 : vector<1x128xi32> to vector<1x128xf32>
    %cst_121 = arith.constant 1.000000e+02 : f32
    %393 = vector.broadcast %cst_121 : f32 to vector<1x128xf32>
    %394 = arith.divf %392, %393 : vector<1x128xf32>
    %395 = math.floor %394 : vector<1x128xf32>
    %cst_122 = arith.constant 1.000000e+02 : f32
    %396 = vector.broadcast %cst_122 : f32 to vector<1x128xf32>
    %397 = arith.mulf %395, %396 : vector<1x128xf32>
    %398 = arith.subf %392, %397 : vector<1x128xf32>
    %cst_123 = arith.constant 1.000000e+01 : f32
    %399 = vector.broadcast %cst_123 : f32 to vector<1x128xf32>
    %400 = arith.divf %398, %399 : vector<1x128xf32>
    %401 = math.floor %400 : vector<1x128xf32>
    %cst_124 = arith.constant 1.000000e+01 : f32
    %402 = vector.broadcast %cst_124 : f32 to vector<1x128xf32>
    %403 = arith.mulf %401, %402 : vector<1x128xf32>
    %404 = arith.subf %398, %403 : vector<1x128xf32>
    %cst_125 = arith.constant 8.000000e+00 : f32
    %405 = vector.broadcast %cst_125 : f32 to vector<1x128xf32>
    %406 = arith.cmpf olt, %395, %405 : vector<1x128xf32>
    %cst_126 = arith.constant 8.000000e+00 : f32
    %407 = vector.broadcast %cst_126 : f32 to vector<1x128xf32>
    %408 = arith.cmpf olt, %401, %407 : vector<1x128xf32>
    %409 = arith.andi %406, %408 : vector<1x128xi1>
    %cst_127 = arith.constant 8.000000e+00 : f32
    %410 = vector.broadcast %cst_127 : f32 to vector<1x128xf32>
    %411 = arith.cmpf olt, %404, %410 : vector<1x128xf32>
    %412 = arith.andi %409, %411 : vector<1x128xi1>
    %413 = arith.extui %412 : vector<1x128xi1> to vector<1x128xi32>
    %414 = arith.sitofp %413 : vector<1x128xi32> to vector<1x128xf32>
    %415 = vector.broadcast %414 : vector<1x128xf32> to vector<8x128xf32>
    %416 = arith.mulf %384, %415 : vector<8x128xf32>
    %417 = arith.addf %334, %416 : vector<8x128xf32>
    %418 = arith.mulf %416, %384 : vector<8x128xf32>
    %419 = arith.addf %336, %418 : vector<8x128xf32>
    %c5_i32 = arith.constant 5 : i32
    %c0_i32_128 = arith.constant 0 : i32
    %420 = arith.addi %c5_i32, %c0_i32_128 : i32
    %c0_129 = arith.constant 0 : index
    %421 = arith.index_cast %420 : i32 to index
    %c0_130 = arith.constant 0 : index
    %c0_131 = arith.constant 0 : index
    %422 = vector.load %arg1[%c0_129, %421, %c0_130, %c0_131] : memref<1x10x8x128xbf16, #tpu.memory_space<vmem>>, vector<1x1x8x128xbf16>
    %423 = vector.shape_cast %422 : vector<1x1x8x128xbf16> to vector<8x128xbf16>
    %c1_i32_132 = arith.constant 1 : i32
    %424 = arith.addi %c5_i32, %c1_i32_132 : i32
    %c0_133 = arith.constant 0 : index
    %425 = arith.index_cast %424 : i32 to index
    %c0_134 = arith.constant 0 : index
    %c0_135 = arith.constant 0 : index
    %426 = vector.load %arg1[%c0_133, %425, %c0_134, %c0_135] : memref<1x10x8x128xbf16, #tpu.memory_space<vmem>>, vector<1x1x8x128xbf16>
    %427 = vector.shape_cast %426 : vector<1x1x8x128xbf16> to vector<8x128xbf16>
    %428 = tpu.concatenate %423, %427 in 1 : vector<8x128xbf16>, vector<8x128xbf16> -> vector<8x256xbf16>
    %429 = vector.extract_strided_slice %428 {offsets = [0, 1], sizes = [8, 128], strides = [1, 1]} : vector<8x256xbf16> to vector<8x128xbf16>
    %430 = vector.extract_strided_slice %428 {offsets = [0, 2], sizes = [8, 128], strides = [1, 1]} : vector<8x256xbf16> to vector<8x128xbf16>
    %431 = vector.extract_strided_slice %428 {offsets = [0, 10], sizes = [8, 128], strides = [1, 1]} : vector<8x256xbf16> to vector<8x128xbf16>
    %432 = vector.extract_strided_slice %428 {offsets = [0, 11], sizes = [8, 128], strides = [1, 1]} : vector<8x256xbf16> to vector<8x128xbf16>
    %433 = vector.extract_strided_slice %428 {offsets = [0, 12], sizes = [8, 128], strides = [1, 1]} : vector<8x256xbf16> to vector<8x128xbf16>
    %434 = vector.extract_strided_slice %428 {offsets = [0, 20], sizes = [8, 128], strides = [1, 1]} : vector<8x256xbf16> to vector<8x128xbf16>
    %435 = vector.extract_strided_slice %428 {offsets = [0, 21], sizes = [8, 128], strides = [1, 1]} : vector<8x256xbf16> to vector<8x128xbf16>
    %436 = vector.extract_strided_slice %428 {offsets = [0, 22], sizes = [8, 128], strides = [1, 1]} : vector<8x256xbf16> to vector<8x128xbf16>
    %437 = vector.extract_strided_slice %428 {offsets = [0, 100], sizes = [8, 128], strides = [1, 1]} : vector<8x256xbf16> to vector<8x128xbf16>
    %438 = vector.extract_strided_slice %428 {offsets = [0, 101], sizes = [8, 128], strides = [1, 1]} : vector<8x256xbf16> to vector<8x128xbf16>
    %439 = vector.extract_strided_slice %428 {offsets = [0, 102], sizes = [8, 128], strides = [1, 1]} : vector<8x256xbf16> to vector<8x128xbf16>
    %440 = vector.extract_strided_slice %428 {offsets = [0, 110], sizes = [8, 128], strides = [1, 1]} : vector<8x256xbf16> to vector<8x128xbf16>
    %441 = vector.extract_strided_slice %428 {offsets = [0, 111], sizes = [8, 128], strides = [1, 1]} : vector<8x256xbf16> to vector<8x128xbf16>
    %442 = vector.extract_strided_slice %428 {offsets = [0, 112], sizes = [8, 128], strides = [1, 1]} : vector<8x256xbf16> to vector<8x128xbf16>
    %443 = vector.extract_strided_slice %428 {offsets = [0, 120], sizes = [8, 128], strides = [1, 1]} : vector<8x256xbf16> to vector<8x128xbf16>
    %444 = vector.extract_strided_slice %428 {offsets = [0, 121], sizes = [8, 128], strides = [1, 1]} : vector<8x256xbf16> to vector<8x128xbf16>
    %445 = vector.extract_strided_slice %428 {offsets = [0, 122], sizes = [8, 128], strides = [1, 1]} : vector<8x256xbf16> to vector<8x128xbf16>
    %c2_i32_136 = arith.constant 2 : i32
    %446 = arith.addi %c5_i32, %c2_i32_136 : i32
    %c0_137 = arith.constant 0 : index
    %447 = arith.index_cast %446 : i32 to index
    %c0_138 = arith.constant 0 : index
    %c0_139 = arith.constant 0 : index
    %448 = vector.load %arg1[%c0_137, %447, %c0_138, %c0_139] : memref<1x10x8x128xbf16, #tpu.memory_space<vmem>>, vector<1x1x8x128xbf16>
    %449 = vector.shape_cast %448 : vector<1x1x8x128xbf16> to vector<8x128xbf16>
    %450 = tpu.concatenate %427, %449 in 1 : vector<8x128xbf16>, vector<8x128xbf16> -> vector<8x256xbf16>
    %451 = vector.extract_strided_slice %450 {offsets = [0, 72], sizes = [8, 128], strides = [1, 1]} : vector<8x256xbf16> to vector<8x128xbf16>
    %452 = vector.extract_strided_slice %450 {offsets = [0, 73], sizes = [8, 128], strides = [1, 1]} : vector<8x256xbf16> to vector<8x128xbf16>
    %453 = vector.extract_strided_slice %450 {offsets = [0, 74], sizes = [8, 128], strides = [1, 1]} : vector<8x256xbf16> to vector<8x128xbf16>
    %454 = vector.extract_strided_slice %450 {offsets = [0, 82], sizes = [8, 128], strides = [1, 1]} : vector<8x256xbf16> to vector<8x128xbf16>
    %455 = vector.extract_strided_slice %450 {offsets = [0, 83], sizes = [8, 128], strides = [1, 1]} : vector<8x256xbf16> to vector<8x128xbf16>
    %456 = vector.extract_strided_slice %450 {offsets = [0, 84], sizes = [8, 128], strides = [1, 1]} : vector<8x256xbf16> to vector<8x128xbf16>
    %457 = vector.extract_strided_slice %450 {offsets = [0, 92], sizes = [8, 128], strides = [1, 1]} : vector<8x256xbf16> to vector<8x128xbf16>
    %458 = vector.extract_strided_slice %450 {offsets = [0, 93], sizes = [8, 128], strides = [1, 1]} : vector<8x256xbf16> to vector<8x128xbf16>
    %459 = vector.extract_strided_slice %450 {offsets = [0, 94], sizes = [8, 128], strides = [1, 1]} : vector<8x256xbf16> to vector<8x128xbf16>
    %460 = tpu.concatenate %423, %429, %430, %431, %432, %433, %434, %435, %436, %437, %438, %439, %440, %441, %442, %443 in 0 : vector<8x128xbf16>, vector<8x128xbf16>, vector<8x128xbf16>, vector<8x128xbf16>, vector<8x128xbf16>, vector<8x128xbf16>, vector<8x128xbf16>, vector<8x128xbf16>, vector<8x128xbf16>, vector<8x128xbf16>, vector<8x128xbf16>, vector<8x128xbf16>, vector<8x128xbf16>, vector<8x128xbf16>, vector<8x128xbf16>, vector<8x128xbf16> -> vector<128x128xbf16>
    %461 = tpu.concatenate %444, %445, %451, %452, %453, %454, %455, %456, %457, %458, %459, %3 in 0 : vector<8x128xbf16>, vector<8x128xbf16>, vector<8x128xbf16>, vector<8x128xbf16>, vector<8x128xbf16>, vector<8x128xbf16>, vector<8x128xbf16>, vector<8x128xbf16>, vector<8x128xbf16>, vector<8x128xbf16>, vector<8x128xbf16>, vector<40x128xbf16> -> vector<128x128xbf16>
    %462 = tpu.concatenate %460, %461 in 0 : vector<128x128xbf16>, vector<128x128xbf16> -> vector<256x128xbf16>
    %cst_140 = arith.constant dense<0.000000e+00> : vector<8x128xf32>
    %463 = tpu.matmul %0, %462, %cst_140 {dimension_numbers = #tpu.dot_dimension_numbers<[1], [0], [0], [1], [0, 0, 1, 1], [], []>} : vector<8x256xbf16>, vector<256x128xbf16>, vector<8x128xf32> -> vector<8x128xf32>
    %464 = vector.broadcast %1 : vector<8x1xf32> to vector<8x128xf32>
    %465 = arith.addf %463, %464 : vector<8x128xf32>
    %cst_141 = arith.constant 0.000000e+00 : f32
    %466 = vector.broadcast %cst_141 : f32 to vector<8x128xf32>
    %467 = arith.maximumf %465, %466 : vector<8x128xf32>
    %c0_142 = arith.constant 0 : index
    %468 = arith.index_cast %c5_i32 : i32 to index
    %c0_143 = arith.constant 0 : index
    %c0_144 = arith.constant 0 : index
    %469 = vector.load %arg6[%c0_142, %468, %c0_143, %c0_144] : memref<1x8x8x128xf32, #tpu.memory_space<vmem>>, vector<1x1x8x128xf32>
    %470 = vector.shape_cast %469 : vector<1x1x8x128xf32> to vector<8x128xf32>
    %471 = vector.shape_cast %467 : vector<8x128xf32> to vector<1x1x8x128xf32>
    tpu.vector_store %arg6[%c0_142, %468, %c0_143, %c0_144], %471 {strides = array<i32>} : memref<1x8x8x128xf32, #tpu.memory_space<vmem>>, vector<1x1x8x128xf32>,
    %c128_i32_145 = arith.constant 128 : i32
    %472 = arith.muli %c5_i32, %c128_i32_145 : i32
    %473 = vector.broadcast %472 : i32 to vector<1x128xi32>
    %474 = arith.addi %473, %2 : vector<1x128xi32>
    %475 = arith.sitofp %474 : vector<1x128xi32> to vector<1x128xf32>
    %cst_146 = arith.constant 1.000000e+02 : f32
    %476 = vector.broadcast %cst_146 : f32 to vector<1x128xf32>
    %477 = arith.divf %475, %476 : vector<1x128xf32>
    %478 = math.floor %477 : vector<1x128xf32>
    %cst_147 = arith.constant 1.000000e+02 : f32
    %479 = vector.broadcast %cst_147 : f32 to vector<1x128xf32>
    %480 = arith.mulf %478, %479 : vector<1x128xf32>
    %481 = arith.subf %475, %480 : vector<1x128xf32>
    %cst_148 = arith.constant 1.000000e+01 : f32
    %482 = vector.broadcast %cst_148 : f32 to vector<1x128xf32>
    %483 = arith.divf %481, %482 : vector<1x128xf32>
    %484 = math.floor %483 : vector<1x128xf32>
    %cst_149 = arith.constant 1.000000e+01 : f32
    %485 = vector.broadcast %cst_149 : f32 to vector<1x128xf32>
    %486 = arith.mulf %484, %485 : vector<1x128xf32>
    %487 = arith.subf %481, %486 : vector<1x128xf32>
    %cst_150 = arith.constant 8.000000e+00 : f32
    %488 = vector.broadcast %cst_150 : f32 to vector<1x128xf32>
    %489 = arith.cmpf olt, %478, %488 : vector<1x128xf32>
    %cst_151 = arith.constant 8.000000e+00 : f32
    %490 = vector.broadcast %cst_151 : f32 to vector<1x128xf32>
    %491 = arith.cmpf olt, %484, %490 : vector<1x128xf32>
    %492 = arith.andi %489, %491 : vector<1x128xi1>
    %cst_152 = arith.constant 8.000000e+00 : f32
    %493 = vector.broadcast %cst_152 : f32 to vector<1x128xf32>
    %494 = arith.cmpf olt, %487, %493 : vector<1x128xf32>
    %495 = arith.andi %492, %494 : vector<1x128xi1>
    %496 = arith.extui %495 : vector<1x128xi1> to vector<1x128xi32>
    %497 = arith.sitofp %496 : vector<1x128xi32> to vector<1x128xf32>
    %498 = vector.broadcast %497 : vector<1x128xf32> to vector<8x128xf32>
    %499 = arith.mulf %467, %498 : vector<8x128xf32>
    %500 = arith.addf %417, %499 : vector<8x128xf32>
    %501 = arith.mulf %499, %467 : vector<8x128xf32>
    %502 = arith.addf %419, %501 : vector<8x128xf32>
    %c6_i32 = arith.constant 6 : i32
    %c0_i32_153 = arith.constant 0 : i32
    %503 = arith.addi %c6_i32, %c0_i32_153 : i32
    %c0_154 = arith.constant 0 : index
    %504 = arith.index_cast %503 : i32 to index
    %c0_155 = arith.constant 0 : index
    %c0_156 = arith.constant 0 : index
    %505 = vector.load %arg1[%c0_154, %504, %c0_155, %c0_156] : memref<1x10x8x128xbf16, #tpu.memory_space<vmem>>, vector<1x1x8x128xbf16>
    %506 = vector.shape_cast %505 : vector<1x1x8x128xbf16> to vector<8x128xbf16>
    %c1_i32_157 = arith.constant 1 : i32
    %507 = arith.addi %c6_i32, %c1_i32_157 : i32
    %c0_158 = arith.constant 0 : index
    %508 = arith.index_cast %507 : i32 to index
    %c0_159 = arith.constant 0 : index
    %c0_160 = arith.constant 0 : index
    %509 = vector.load %arg1[%c0_158, %508, %c0_159, %c0_160] : memref<1x10x8x128xbf16, #tpu.memory_space<vmem>>, vector<1x1x8x128xbf16>
    %510 = vector.shape_cast %509 : vector<1x1x8x128xbf16> to vector<8x128xbf16>
    %511 = tpu.concatenate %506, %510 in 1 : vector<8x128xbf16>, vector<8x128xbf16> -> vector<8x256xbf16>
    %512 = vector.extract_strided_slice %511 {offsets = [0, 1], sizes = [8, 128], strides = [1, 1]} : vector<8x256xbf16> to vector<8x128xbf16>
    %513 = vector.extract_strided_slice %511 {offsets = [0, 2], sizes = [8, 128], strides = [1, 1]} : vector<8x256xbf16> to vector<8x128xbf16>
    %514 = vector.extract_strided_slice %511 {offsets = [0, 10], sizes = [8, 128], strides = [1, 1]} : vector<8x256xbf16> to vector<8x128xbf16>
    %515 = vector.extract_strided_slice %511 {offsets = [0, 11], sizes = [8, 128], strides = [1, 1]} : vector<8x256xbf16> to vector<8x128xbf16>
    %516 = vector.extract_strided_slice %511 {offsets = [0, 12], sizes = [8, 128], strides = [1, 1]} : vector<8x256xbf16> to vector<8x128xbf16>
    %517 = vector.extract_strided_slice %511 {offsets = [0, 20], sizes = [8, 128], strides = [1, 1]} : vector<8x256xbf16> to vector<8x128xbf16>
    %518 = vector.extract_strided_slice %511 {offsets = [0, 21], sizes = [8, 128], strides = [1, 1]} : vector<8x256xbf16> to vector<8x128xbf16>
    %519 = vector.extract_strided_slice %511 {offsets = [0, 22], sizes = [8, 128], strides = [1, 1]} : vector<8x256xbf16> to vector<8x128xbf16>
    %520 = vector.extract_strided_slice %511 {offsets = [0, 100], sizes = [8, 128], strides = [1, 1]} : vector<8x256xbf16> to vector<8x128xbf16>
    %521 = vector.extract_strided_slice %511 {offsets = [0, 101], sizes = [8, 128], strides = [1, 1]} : vector<8x256xbf16> to vector<8x128xbf16>
    %522 = vector.extract_strided_slice %511 {offsets = [0, 102], sizes = [8, 128], strides = [1, 1]} : vector<8x256xbf16> to vector<8x128xbf16>
    %523 = vector.extract_strided_slice %511 {offsets = [0, 110], sizes = [8, 128], strides = [1, 1]} : vector<8x256xbf16> to vector<8x128xbf16>
    %524 = vector.extract_strided_slice %511 {offsets = [0, 111], sizes = [8, 128], strides = [1, 1]} : vector<8x256xbf16> to vector<8x128xbf16>
    %525 = vector.extract_strided_slice %511 {offsets = [0, 112], sizes = [8, 128], strides = [1, 1]} : vector<8x256xbf16> to vector<8x128xbf16>
    %526 = vector.extract_strided_slice %511 {offsets = [0, 120], sizes = [8, 128], strides = [1, 1]} : vector<8x256xbf16> to vector<8x128xbf16>
    %527 = vector.extract_strided_slice %511 {offsets = [0, 121], sizes = [8, 128], strides = [1, 1]} : vector<8x256xbf16> to vector<8x128xbf16>
    %528 = vector.extract_strided_slice %511 {offsets = [0, 122], sizes = [8, 128], strides = [1, 1]} : vector<8x256xbf16> to vector<8x128xbf16>
    %c2_i32_161 = arith.constant 2 : i32
    %529 = arith.addi %c6_i32, %c2_i32_161 : i32
    %c0_162 = arith.constant 0 : index
    %530 = arith.index_cast %529 : i32 to index
    %c0_163 = arith.constant 0 : index
    %c0_164 = arith.constant 0 : index
    %531 = vector.load %arg1[%c0_162, %530, %c0_163, %c0_164] : memref<1x10x8x128xbf16, #tpu.memory_space<vmem>>, vector<1x1x8x128xbf16>
    %532 = vector.shape_cast %531 : vector<1x1x8x128xbf16> to vector<8x128xbf16>
    %533 = tpu.concatenate %510, %532 in 1 : vector<8x128xbf16>, vector<8x128xbf16> -> vector<8x256xbf16>
    %534 = vector.extract_strided_slice %533 {offsets = [0, 72], sizes = [8, 128], strides = [1, 1]} : vector<8x256xbf16> to vector<8x128xbf16>
    %535 = vector.extract_strided_slice %533 {offsets = [0, 73], sizes = [8, 128], strides = [1, 1]} : vector<8x256xbf16> to vector<8x128xbf16>
    %536 = vector.extract_strided_slice %533 {offsets = [0, 74], sizes = [8, 128], strides = [1, 1]} : vector<8x256xbf16> to vector<8x128xbf16>
    %537 = vector.extract_strided_slice %533 {offsets = [0, 82], sizes = [8, 128], strides = [1, 1]} : vector<8x256xbf16> to vector<8x128xbf16>
    %538 = vector.extract_strided_slice %533 {offsets = [0, 83], sizes = [8, 128], strides = [1, 1]} : vector<8x256xbf16> to vector<8x128xbf16>
    %539 = vector.extract_strided_slice %533 {offsets = [0, 84], sizes = [8, 128], strides = [1, 1]} : vector<8x256xbf16> to vector<8x128xbf16>
    %540 = vector.extract_strided_slice %533 {offsets = [0, 92], sizes = [8, 128], strides = [1, 1]} : vector<8x256xbf16> to vector<8x128xbf16>
    %541 = vector.extract_strided_slice %533 {offsets = [0, 93], sizes = [8, 128], strides = [1, 1]} : vector<8x256xbf16> to vector<8x128xbf16>
    %542 = vector.extract_strided_slice %533 {offsets = [0, 94], sizes = [8, 128], strides = [1, 1]} : vector<8x256xbf16> to vector<8x128xbf16>
    %543 = tpu.concatenate %506, %512, %513, %514, %515, %516, %517, %518, %519, %520, %521, %522, %523, %524, %525, %526 in 0 : vector<8x128xbf16>, vector<8x128xbf16>, vector<8x128xbf16>, vector<8x128xbf16>, vector<8x128xbf16>, vector<8x128xbf16>, vector<8x128xbf16>, vector<8x128xbf16>, vector<8x128xbf16>, vector<8x128xbf16>, vector<8x128xbf16>, vector<8x128xbf16>, vector<8x128xbf16>, vector<8x128xbf16>, vector<8x128xbf16>, vector<8x128xbf16> -> vector<128x128xbf16>
    %544 = tpu.concatenate %527, %528, %534, %535, %536, %537, %538, %539, %540, %541, %542, %3 in 0 : vector<8x128xbf16>, vector<8x128xbf16>, vector<8x128xbf16>, vector<8x128xbf16>, vector<8x128xbf16>, vector<8x128xbf16>, vector<8x128xbf16>, vector<8x128xbf16>, vector<8x128xbf16>, vector<8x128xbf16>, vector<8x128xbf16>, vector<40x128xbf16> -> vector<128x128xbf16>
    %545 = tpu.concatenate %543, %544 in 0 : vector<128x128xbf16>, vector<128x128xbf16> -> vector<256x128xbf16>
    %cst_165 = arith.constant dense<0.000000e+00> : vector<8x128xf32>
    %546 = tpu.matmul %0, %545, %cst_165 {dimension_numbers = #tpu.dot_dimension_numbers<[1], [0], [0], [1], [0, 0, 1, 1], [], []>} : vector<8x256xbf16>, vector<256x128xbf16>, vector<8x128xf32> -> vector<8x128xf32>
    %547 = vector.broadcast %1 : vector<8x1xf32> to vector<8x128xf32>
    %548 = arith.addf %546, %547 : vector<8x128xf32>
    %cst_166 = arith.constant 0.000000e+00 : f32
    %549 = vector.broadcast %cst_166 : f32 to vector<8x128xf32>
    %550 = arith.maximumf %548, %549 : vector<8x128xf32>
    %c0_167 = arith.constant 0 : index
    %551 = arith.index_cast %c6_i32 : i32 to index
    %c0_168 = arith.constant 0 : index
    %c0_169 = arith.constant 0 : index
    %552 = vector.load %arg6[%c0_167, %551, %c0_168, %c0_169] : memref<1x8x8x128xf32, #tpu.memory_space<vmem>>, vector<1x1x8x128xf32>
    %553 = vector.shape_cast %552 : vector<1x1x8x128xf32> to vector<8x128xf32>
    %554 = vector.shape_cast %550 : vector<8x128xf32> to vector<1x1x8x128xf32>
    tpu.vector_store %arg6[%c0_167, %551, %c0_168, %c0_169], %554 {strides = array<i32>} : memref<1x8x8x128xf32, #tpu.memory_space<vmem>>, vector<1x1x8x128xf32>,
    %c128_i32_170 = arith.constant 128 : i32
    %555 = arith.muli %c6_i32, %c128_i32_170 : i32
    %556 = vector.broadcast %555 : i32 to vector<1x128xi32>
    %557 = arith.addi %556, %2 : vector<1x128xi32>
    %558 = arith.sitofp %557 : vector<1x128xi32> to vector<1x128xf32>
    %cst_171 = arith.constant 1.000000e+02 : f32
    %559 = vector.broadcast %cst_171 : f32 to vector<1x128xf32>
    %560 = arith.divf %558, %559 : vector<1x128xf32>
    %561 = math.floor %560 : vector<1x128xf32>
    %cst_172 = arith.constant 1.000000e+02 : f32
    %562 = vector.broadcast %cst_172 : f32 to vector<1x128xf32>
    %563 = arith.mulf %561, %562 : vector<1x128xf32>
    %564 = arith.subf %558, %563 : vector<1x128xf32>
    %cst_173 = arith.constant 1.000000e+01 : f32
    %565 = vector.broadcast %cst_173 : f32 to vector<1x128xf32>
    %566 = arith.divf %564, %565 : vector<1x128xf32>
    %567 = math.floor %566 : vector<1x128xf32>
    %cst_174 = arith.constant 1.000000e+01 : f32
    %568 = vector.broadcast %cst_174 : f32 to vector<1x128xf32>
    %569 = arith.mulf %567, %568 : vector<1x128xf32>
    %570 = arith.subf %564, %569 : vector<1x128xf32>
    %cst_175 = arith.constant 8.000000e+00 : f32
    %571 = vector.broadcast %cst_175 : f32 to vector<1x128xf32>
    %572 = arith.cmpf olt, %561, %571 : vector<1x128xf32>
    %cst_176 = arith.constant 8.000000e+00 : f32
    %573 = vector.broadcast %cst_176 : f32 to vector<1x128xf32>
    %574 = arith.cmpf olt, %567, %573 : vector<1x128xf32>
    %575 = arith.andi %572, %574 : vector<1x128xi1>
    %cst_177 = arith.constant 8.000000e+00 : f32
    %576 = vector.broadcast %cst_177 : f32 to vector<1x128xf32>
    %577 = arith.cmpf olt, %570, %576 : vector<1x128xf32>
    %578 = arith.andi %575, %577 : vector<1x128xi1>
    %579 = arith.extui %578 : vector<1x128xi1> to vector<1x128xi32>
    %580 = arith.sitofp %579 : vector<1x128xi32> to vector<1x128xf32>
    %581 = vector.broadcast %580 : vector<1x128xf32> to vector<8x128xf32>
    %582 = arith.mulf %550, %581 : vector<8x128xf32>
    %583 = arith.addf %500, %582 : vector<8x128xf32>
    %584 = arith.mulf %582, %550 : vector<8x128xf32>
    %585 = arith.addf %502, %584 : vector<8x128xf32>
    %c7_i32 = arith.constant 7 : i32
    %c0_i32_178 = arith.constant 0 : i32
    %586 = arith.addi %c7_i32, %c0_i32_178 : i32
    %c0_179 = arith.constant 0 : index
    %587 = arith.index_cast %586 : i32 to index
    %c0_180 = arith.constant 0 : index
    %c0_181 = arith.constant 0 : index
    %588 = vector.load %arg1[%c0_179, %587, %c0_180, %c0_181] : memref<1x10x8x128xbf16, #tpu.memory_space<vmem>>, vector<1x1x8x128xbf16>
    %589 = vector.shape_cast %588 : vector<1x1x8x128xbf16> to vector<8x128xbf16>
    %c1_i32_182 = arith.constant 1 : i32
    %590 = arith.addi %c7_i32, %c1_i32_182 : i32
    %c0_183 = arith.constant 0 : index
    %591 = arith.index_cast %590 : i32 to index
    %c0_184 = arith.constant 0 : index
    %c0_185 = arith.constant 0 : index
    %592 = vector.load %arg1[%c0_183, %591, %c0_184, %c0_185] : memref<1x10x8x128xbf16, #tpu.memory_space<vmem>>, vector<1x1x8x128xbf16>
    %593 = vector.shape_cast %592 : vector<1x1x8x128xbf16> to vector<8x128xbf16>
    %594 = tpu.concatenate %589, %593 in 1 : vector<8x128xbf16>, vector<8x128xbf16> -> vector<8x256xbf16>
    %595 = vector.extract_strided_slice %594 {offsets = [0, 1], sizes = [8, 128], strides = [1, 1]} : vector<8x256xbf16> to vector<8x128xbf16>
    %596 = vector.extract_strided_slice %594 {offsets = [0, 2], sizes = [8, 128], strides = [1, 1]} : vector<8x256xbf16> to vector<8x128xbf16>
    %597 = vector.extract_strided_slice %594 {offsets = [0, 10], sizes = [8, 128], strides = [1, 1]} : vector<8x256xbf16> to vector<8x128xbf16>
    %598 = vector.extract_strided_slice %594 {offsets = [0, 11], sizes = [8, 128], strides = [1, 1]} : vector<8x256xbf16> to vector<8x128xbf16>
    %599 = vector.extract_strided_slice %594 {offsets = [0, 12], sizes = [8, 128], strides = [1, 1]} : vector<8x256xbf16> to vector<8x128xbf16>
    %600 = vector.extract_strided_slice %594 {offsets = [0, 20], sizes = [8, 128], strides = [1, 1]} : vector<8x256xbf16> to vector<8x128xbf16>
    %601 = vector.extract_strided_slice %594 {offsets = [0, 21], sizes = [8, 128], strides = [1, 1]} : vector<8x256xbf16> to vector<8x128xbf16>
    %602 = vector.extract_strided_slice %594 {offsets = [0, 22], sizes = [8, 128], strides = [1, 1]} : vector<8x256xbf16> to vector<8x128xbf16>
    %603 = vector.extract_strided_slice %594 {offsets = [0, 100], sizes = [8, 128], strides = [1, 1]} : vector<8x256xbf16> to vector<8x128xbf16>
    %604 = vector.extract_strided_slice %594 {offsets = [0, 101], sizes = [8, 128], strides = [1, 1]} : vector<8x256xbf16> to vector<8x128xbf16>
    %605 = vector.extract_strided_slice %594 {offsets = [0, 102], sizes = [8, 128], strides = [1, 1]} : vector<8x256xbf16> to vector<8x128xbf16>
    %606 = vector.extract_strided_slice %594 {offsets = [0, 110], sizes = [8, 128], strides = [1, 1]} : vector<8x256xbf16> to vector<8x128xbf16>
    %607 = vector.extract_strided_slice %594 {offsets = [0, 111], sizes = [8, 128], strides = [1, 1]} : vector<8x256xbf16> to vector<8x128xbf16>
    %608 = vector.extract_strided_slice %594 {offsets = [0, 112], sizes = [8, 128], strides = [1, 1]} : vector<8x256xbf16> to vector<8x128xbf16>
    %609 = vector.extract_strided_slice %594 {offsets = [0, 120], sizes = [8, 128], strides = [1, 1]} : vector<8x256xbf16> to vector<8x128xbf16>
    %610 = vector.extract_strided_slice %594 {offsets = [0, 121], sizes = [8, 128], strides = [1, 1]} : vector<8x256xbf16> to vector<8x128xbf16>
    %611 = vector.extract_strided_slice %594 {offsets = [0, 122], sizes = [8, 128], strides = [1, 1]} : vector<8x256xbf16> to vector<8x128xbf16>
    %c2_i32_186 = arith.constant 2 : i32
    %612 = arith.addi %c7_i32, %c2_i32_186 : i32
    %c0_187 = arith.constant 0 : index
    %613 = arith.index_cast %612 : i32 to index
    %c0_188 = arith.constant 0 : index
    %c0_189 = arith.constant 0 : index
    %614 = vector.load %arg1[%c0_187, %613, %c0_188, %c0_189] : memref<1x10x8x128xbf16, #tpu.memory_space<vmem>>, vector<1x1x8x128xbf16>
    %615 = vector.shape_cast %614 : vector<1x1x8x128xbf16> to vector<8x128xbf16>
    %616 = tpu.concatenate %593, %615 in 1 : vector<8x128xbf16>, vector<8x128xbf16> -> vector<8x256xbf16>
    %617 = vector.extract_strided_slice %616 {offsets = [0, 72], sizes = [8, 128], strides = [1, 1]} : vector<8x256xbf16> to vector<8x128xbf16>
    %618 = vector.extract_strided_slice %616 {offsets = [0, 73], sizes = [8, 128], strides = [1, 1]} : vector<8x256xbf16> to vector<8x128xbf16>
    %619 = vector.extract_strided_slice %616 {offsets = [0, 74], sizes = [8, 128], strides = [1, 1]} : vector<8x256xbf16> to vector<8x128xbf16>
    %620 = vector.extract_strided_slice %616 {offsets = [0, 82], sizes = [8, 128], strides = [1, 1]} : vector<8x256xbf16> to vector<8x128xbf16>
    %621 = vector.extract_strided_slice %616 {offsets = [0, 83], sizes = [8, 128], strides = [1, 1]} : vector<8x256xbf16> to vector<8x128xbf16>
    %622 = vector.extract_strided_slice %616 {offsets = [0, 84], sizes = [8, 128], strides = [1, 1]} : vector<8x256xbf16> to vector<8x128xbf16>
    %623 = vector.extract_strided_slice %616 {offsets = [0, 92], sizes = [8, 128], strides = [1, 1]} : vector<8x256xbf16> to vector<8x128xbf16>
    %624 = vector.extract_strided_slice %616 {offsets = [0, 93], sizes = [8, 128], strides = [1, 1]} : vector<8x256xbf16> to vector<8x128xbf16>
    %625 = vector.extract_strided_slice %616 {offsets = [0, 94], sizes = [8, 128], strides = [1, 1]} : vector<8x256xbf16> to vector<8x128xbf16>
    %626 = tpu.concatenate %589, %595, %596, %597, %598, %599, %600, %601, %602, %603, %604, %605, %606, %607, %608, %609 in 0 : vector<8x128xbf16>, vector<8x128xbf16>, vector<8x128xbf16>, vector<8x128xbf16>, vector<8x128xbf16>, vector<8x128xbf16>, vector<8x128xbf16>, vector<8x128xbf16>, vector<8x128xbf16>, vector<8x128xbf16>, vector<8x128xbf16>, vector<8x128xbf16>, vector<8x128xbf16>, vector<8x128xbf16>, vector<8x128xbf16>, vector<8x128xbf16> -> vector<128x128xbf16>
    %627 = tpu.concatenate %610, %611, %617, %618, %619, %620, %621, %622, %623, %624, %625, %3 in 0 : vector<8x128xbf16>, vector<8x128xbf16>, vector<8x128xbf16>, vector<8x128xbf16>, vector<8x128xbf16>, vector<8x128xbf16>, vector<8x128xbf16>, vector<8x128xbf16>, vector<8x128xbf16>, vector<8x128xbf16>, vector<8x128xbf16>, vector<40x128xbf16> -> vector<128x128xbf16>
    %628 = tpu.concatenate %626, %627 in 0 : vector<128x128xbf16>, vector<128x128xbf16> -> vector<256x128xbf16>
    %cst_190 = arith.constant dense<0.000000e+00> : vector<8x128xf32>
    %629 = tpu.matmul %0, %628, %cst_190 {dimension_numbers = #tpu.dot_dimension_numbers<[1], [0], [0], [1], [0, 0, 1, 1], [], []>} : vector<8x256xbf16>, vector<256x128xbf16>, vector<8x128xf32> -> vector<8x128xf32>
    %630 = vector.broadcast %1 : vector<8x1xf32> to vector<8x128xf32>
    %631 = arith.addf %629, %630 : vector<8x128xf32>
    %cst_191 = arith.constant 0.000000e+00 : f32
    %632 = vector.broadcast %cst_191 : f32 to vector<8x128xf32>
    %633 = arith.maximumf %631, %632 : vector<8x128xf32>
    %c0_192 = arith.constant 0 : index
    %634 = arith.index_cast %c7_i32 : i32 to index
    %c0_193 = arith.constant 0 : index
    %c0_194 = arith.constant 0 : index
    %635 = vector.load %arg6[%c0_192, %634, %c0_193, %c0_194] : memref<1x8x8x128xf32, #tpu.memory_space<vmem>>, vector<1x1x8x128xf32>
    %636 = vector.shape_cast %635 : vector<1x1x8x128xf32> to vector<8x128xf32>
    %637 = vector.shape_cast %633 : vector<8x128xf32> to vector<1x1x8x128xf32>
    tpu.vector_store %arg6[%c0_192, %634, %c0_193, %c0_194], %637 {strides = array<i32>} : memref<1x8x8x128xf32, #tpu.memory_space<vmem>>, vector<1x1x8x128xf32>,
    %c128_i32_195 = arith.constant 128 : i32
    %638 = arith.muli %c7_i32, %c128_i32_195 : i32
    %639 = vector.broadcast %638 : i32 to vector<1x128xi32>
    %640 = arith.addi %639, %2 : vector<1x128xi32>
    %641 = arith.sitofp %640 : vector<1x128xi32> to vector<1x128xf32>
    %cst_196 = arith.constant 1.000000e+02 : f32
    %642 = vector.broadcast %cst_196 : f32 to vector<1x128xf32>
    %643 = arith.divf %641, %642 : vector<1x128xf32>
    %644 = math.floor %643 : vector<1x128xf32>
    %cst_197 = arith.constant 1.000000e+02 : f32
    %645 = vector.broadcast %cst_197 : f32 to vector<1x128xf32>
    %646 = arith.mulf %644, %645 : vector<1x128xf32>
    %647 = arith.subf %641, %646 : vector<1x128xf32>
    %cst_198 = arith.constant 1.000000e+01 : f32
    %648 = vector.broadcast %cst_198 : f32 to vector<1x128xf32>
    %649 = arith.divf %647, %648 : vector<1x128xf32>
    %650 = math.floor %649 : vector<1x128xf32>
    %cst_199 = arith.constant 1.000000e+01 : f32
    %651 = vector.broadcast %cst_199 : f32 to vector<1x128xf32>
    %652 = arith.mulf %650, %651 : vector<1x128xf32>
    %653 = arith.subf %647, %652 : vector<1x128xf32>
    %cst_200 = arith.constant 8.000000e+00 : f32
    %654 = vector.broadcast %cst_200 : f32 to vector<1x128xf32>
    %655 = arith.cmpf olt, %644, %654 : vector<1x128xf32>
    %cst_201 = arith.constant 8.000000e+00 : f32
    %656 = vector.broadcast %cst_201 : f32 to vector<1x128xf32>
    %657 = arith.cmpf olt, %650, %656 : vector<1x128xf32>
    %658 = arith.andi %655, %657 : vector<1x128xi1>
    %cst_202 = arith.constant 8.000000e+00 : f32
    %659 = vector.broadcast %cst_202 : f32 to vector<1x128xf32>
    %660 = arith.cmpf olt, %653, %659 : vector<1x128xf32>
    %661 = arith.andi %658, %660 : vector<1x128xi1>
    %662 = arith.extui %661 : vector<1x128xi1> to vector<1x128xi32>
    %663 = arith.sitofp %662 : vector<1x128xi32> to vector<1x128xf32>
    %664 = vector.broadcast %663 : vector<1x128xf32> to vector<8x128xf32>
    %665 = arith.mulf %633, %664 : vector<8x128xf32>
    %666 = arith.addf %583, %665 : vector<8x128xf32>
    %667 = arith.mulf %665, %633 : vector<8x128xf32>
    %668 = arith.addf %585, %667 : vector<8x128xf32>
    %c8_i32 = arith.constant 8 : i32
    %669 = vector.shape_cast %666 : vector<8x128xf32> to vector<1x8x128xf32>
    %cst_203 = arith.constant dense<0.000000e+00> : vector<1xf32>
    %670 = vector.multi_reduction <add>, %669, %cst_203 [1, 2] : vector<1x8x128xf32> to vector<1xf32>
    %671 = vector.shape_cast %670 : vector<1xf32> to vector<1x1x1xf32>
    %672 = vector.extract %671[0, 0, 0] : f32 from vector<1x1x1xf32>
    %cst_204 = arith.constant 2.44140625E-4 : f32
    %673 = arith.mulf %672, %cst_204 : f32
    %674 = vector.shape_cast %668 : vector<8x128xf32> to vector<1x8x128xf32>
    %cst_205 = arith.constant dense<0.000000e+00> : vector<1xf32>
    %675 = vector.multi_reduction <add>, %674, %cst_205 [1, 2] : vector<1x8x128xf32> to vector<1xf32>
    %676 = vector.shape_cast %675 : vector<1xf32> to vector<1x1x1xf32>
    %677 = vector.extract %676[0, 0, 0] : f32 from vector<1x1x1xf32>
    %cst_206 = arith.constant 2.44140625E-4 : f32
    %678 = arith.mulf %677, %cst_206 : f32
    %679 = arith.mulf %673, %673 : f32
    %680 = arith.subf %678, %679 : f32
    %cst_207 = arith.constant 0.000000e+00 : f32
    %681 = arith.maximumf %680, %cst_207 : f32
    %cst_208 = arith.constant 9.99999974E-6 : f32
    %682 = arith.addf %681, %cst_208 : f32
    %683 = math.rsqrt %682 : f32
    %c0_209 = arith.constant 0 : index
    %c0_210 = arith.constant 0 : index
    %684 = vector.load %arg4[%c0_209, %c0_210] : memref<8x1xf32, #tpu.memory_space<vmem>>, vector<8x1xf32>
    %685 = vector.broadcast %683 : f32 to vector<8x1xf32>
    %686 = arith.mulf %684, %685 : vector<8x1xf32>
    %c0_211 = arith.constant 0 : index
    %c0_212 = arith.constant 0 : index
    %687 = vector.load %arg5[%c0_211, %c0_212] : memref<8x1xf32, #tpu.memory_space<vmem>>, vector<8x1xf32>
    %688 = vector.broadcast %673 : f32 to vector<8x1xf32>
    %689 = arith.mulf %688, %686 : vector<8x1xf32>
    %690 = arith.subf %687, %689 : vector<8x1xf32>
    %c0_i32_213 = arith.constant 0 : i32
    %c0_214 = arith.constant 0 : index
    %691 = arith.index_cast %c0_i32_213 : i32 to index
    %c0_215 = arith.constant 0 : index
    %c0_216 = arith.constant 0 : index
    %692 = vector.load %arg6[%c0_214, %691, %c0_215, %c0_216] : memref<1x8x8x128xf32, #tpu.memory_space<vmem>>, vector<1x1x8x128xf32>
    %693 = vector.shape_cast %692 : vector<1x1x8x128xf32> to vector<8x128xf32>
    %694 = vector.broadcast %686 : vector<8x1xf32> to vector<8x128xf32>
    %695 = arith.mulf %693, %694 : vector<8x128xf32>
    %696 = vector.broadcast %690 : vector<8x1xf32> to vector<8x128xf32>
    %697 = arith.addf %695, %696 : vector<8x128xf32>
    %c0_217 = arith.constant 0 : index
    %698 = arith.index_cast %c0_i32_213 : i32 to index
    %c0_218 = arith.constant 0 : index
    %c0_219 = arith.constant 0 : index
    %699 = vector.load %arg6[%c0_217, %698, %c0_218, %c0_219] : memref<1x8x8x128xf32, #tpu.memory_space<vmem>>, vector<1x1x8x128xf32>
    %700 = vector.shape_cast %699 : vector<1x1x8x128xf32> to vector<8x128xf32>
    %701 = vector.shape_cast %697 : vector<8x128xf32> to vector<1x1x8x128xf32>
    tpu.vector_store %arg6[%c0_217, %698, %c0_218, %c0_219], %701 {strides = array<i32>} : memref<1x8x8x128xf32, #tpu.memory_space<vmem>>, vector<1x1x8x128xf32>,
    %c1_i32_220 = arith.constant 1 : i32
    %c0_221 = arith.constant 0 : index
    %702 = arith.index_cast %c1_i32_220 : i32 to index
    %c0_222 = arith.constant 0 : index
    %c0_223 = arith.constant 0 : index
    %703 = vector.load %arg6[%c0_221, %702, %c0_222, %c0_223] : memref<1x8x8x128xf32, #tpu.memory_space<vmem>>, vector<1x1x8x128xf32>
    %704 = vector.shape_cast %703 : vector<1x1x8x128xf32> to vector<8x128xf32>
    %705 = vector.broadcast %686 : vector<8x1xf32> to vector<8x128xf32>
    %706 = arith.mulf %704, %705 : vector<8x128xf32>
    %707 = vector.broadcast %690 : vector<8x1xf32> to vector<8x128xf32>
    %708 = arith.addf %706, %707 : vector<8x128xf32>
    %c0_224 = arith.constant 0 : index
    %709 = arith.index_cast %c1_i32_220 : i32 to index
    %c0_225 = arith.constant 0 : index
    %c0_226 = arith.constant 0 : index
    %710 = vector.load %arg6[%c0_224, %709, %c0_225, %c0_226] : memref<1x8x8x128xf32, #tpu.memory_space<vmem>>, vector<1x1x8x128xf32>
    %711 = vector.shape_cast %710 : vector<1x1x8x128xf32> to vector<8x128xf32>
    %712 = vector.shape_cast %708 : vector<8x128xf32> to vector<1x1x8x128xf32>
    tpu.vector_store %arg6[%c0_224, %709, %c0_225, %c0_226], %712 {strides = array<i32>} : memref<1x8x8x128xf32, #tpu.memory_space<vmem>>, vector<1x1x8x128xf32>,
    %c2_i32_227 = arith.constant 2 : i32
    %c0_228 = arith.constant 0 : index
    %713 = arith.index_cast %c2_i32_227 : i32 to index
    %c0_229 = arith.constant 0 : index
    %c0_230 = arith.constant 0 : index
    %714 = vector.load %arg6[%c0_228, %713, %c0_229, %c0_230] : memref<1x8x8x128xf32, #tpu.memory_space<vmem>>, vector<1x1x8x128xf32>
    %715 = vector.shape_cast %714 : vector<1x1x8x128xf32> to vector<8x128xf32>
    %716 = vector.broadcast %686 : vector<8x1xf32> to vector<8x128xf32>
    %717 = arith.mulf %715, %716 : vector<8x128xf32>
    %718 = vector.broadcast %690 : vector<8x1xf32> to vector<8x128xf32>
    %719 = arith.addf %717, %718 : vector<8x128xf32>
    %c0_231 = arith.constant 0 : index
    %720 = arith.index_cast %c2_i32_227 : i32 to index
    %c0_232 = arith.constant 0 : index
    %c0_233 = arith.constant 0 : index
    %721 = vector.load %arg6[%c0_231, %720, %c0_232, %c0_233] : memref<1x8x8x128xf32, #tpu.memory_space<vmem>>, vector<1x1x8x128xf32>
    %722 = vector.shape_cast %721 : vector<1x1x8x128xf32> to vector<8x128xf32>
    %723 = vector.shape_cast %719 : vector<8x128xf32> to vector<1x1x8x128xf32>
    tpu.vector_store %arg6[%c0_231, %720, %c0_232, %c0_233], %723 {strides = array<i32>} : memref<1x8x8x128xf32, #tpu.memory_space<vmem>>, vector<1x1x8x128xf32>,
    %c3_i32_234 = arith.constant 3 : i32
    %c0_235 = arith.constant 0 : index
    %724 = arith.index_cast %c3_i32_234 : i32 to index
    %c0_236 = arith.constant 0 : index
    %c0_237 = arith.constant 0 : index
    %725 = vector.load %arg6[%c0_235, %724, %c0_236, %c0_237] : memref<1x8x8x128xf32, #tpu.memory_space<vmem>>, vector<1x1x8x128xf32>
    %726 = vector.shape_cast %725 : vector<1x1x8x128xf32> to vector<8x128xf32>
    %727 = vector.broadcast %686 : vector<8x1xf32> to vector<8x128xf32>
    %728 = arith.mulf %726, %727 : vector<8x128xf32>
    %729 = vector.broadcast %690 : vector<8x1xf32> to vector<8x128xf32>
    %730 = arith.addf %728, %729 : vector<8x128xf32>
    %c0_238 = arith.constant 0 : index
    %731 = arith.index_cast %c3_i32_234 : i32 to index
    %c0_239 = arith.constant 0 : index
    %c0_240 = arith.constant 0 : index
    %732 = vector.load %arg6[%c0_238, %731, %c0_239, %c0_240] : memref<1x8x8x128xf32, #tpu.memory_space<vmem>>, vector<1x1x8x128xf32>
    %733 = vector.shape_cast %732 : vector<1x1x8x128xf32> to vector<8x128xf32>
    %734 = vector.shape_cast %730 : vector<8x128xf32> to vector<1x1x8x128xf32>
    tpu.vector_store %arg6[%c0_238, %731, %c0_239, %c0_240], %734 {strides = array<i32>} : memref<1x8x8x128xf32, #tpu.memory_space<vmem>>, vector<1x1x8x128xf32>,
    %c4_i32_241 = arith.constant 4 : i32
    %c0_242 = arith.constant 0 : index
    %735 = arith.index_cast %c4_i32_241 : i32 to index
    %c0_243 = arith.constant 0 : index
    %c0_244 = arith.constant 0 : index
    %736 = vector.load %arg6[%c0_242, %735, %c0_243, %c0_244] : memref<1x8x8x128xf32, #tpu.memory_space<vmem>>, vector<1x1x8x128xf32>
    %737 = vector.shape_cast %736 : vector<1x1x8x128xf32> to vector<8x128xf32>
    %738 = vector.broadcast %686 : vector<8x1xf32> to vector<8x128xf32>
    %739 = arith.mulf %737, %738 : vector<8x128xf32>
    %740 = vector.broadcast %690 : vector<8x1xf32> to vector<8x128xf32>
    %741 = arith.addf %739, %740 : vector<8x128xf32>
    %c0_245 = arith.constant 0 : index
    %742 = arith.index_cast %c4_i32_241 : i32 to index
    %c0_246 = arith.constant 0 : index
    %c0_247 = arith.constant 0 : index
    %743 = vector.load %arg6[%c0_245, %742, %c0_246, %c0_247] : memref<1x8x8x128xf32, #tpu.memory_space<vmem>>, vector<1x1x8x128xf32>
    %744 = vector.shape_cast %743 : vector<1x1x8x128xf32> to vector<8x128xf32>
    %745 = vector.shape_cast %741 : vector<8x128xf32> to vector<1x1x8x128xf32>
    tpu.vector_store %arg6[%c0_245, %742, %c0_246, %c0_247], %745 {strides = array<i32>} : memref<1x8x8x128xf32, #tpu.memory_space<vmem>>, vector<1x1x8x128xf32>,
    %c5_i32_248 = arith.constant 5 : i32
    %c0_249 = arith.constant 0 : index
    %746 = arith.index_cast %c5_i32_248 : i32 to index
    %c0_250 = arith.constant 0 : index
    %c0_251 = arith.constant 0 : index
    %747 = vector.load %arg6[%c0_249, %746, %c0_250, %c0_251] : memref<1x8x8x128xf32, #tpu.memory_space<vmem>>, vector<1x1x8x128xf32>
    %748 = vector.shape_cast %747 : vector<1x1x8x128xf32> to vector<8x128xf32>
    %749 = vector.broadcast %686 : vector<8x1xf32> to vector<8x128xf32>
    %750 = arith.mulf %748, %749 : vector<8x128xf32>
    %751 = vector.broadcast %690 : vector<8x1xf32> to vector<8x128xf32>
    %752 = arith.addf %750, %751 : vector<8x128xf32>
    %c0_252 = arith.constant 0 : index
    %753 = arith.index_cast %c5_i32_248 : i32 to index
    %c0_253 = arith.constant 0 : index
    %c0_254 = arith.constant 0 : index
    %754 = vector.load %arg6[%c0_252, %753, %c0_253, %c0_254] : memref<1x8x8x128xf32, #tpu.memory_space<vmem>>, vector<1x1x8x128xf32>
    %755 = vector.shape_cast %754 : vector<1x1x8x128xf32> to vector<8x128xf32>
    %756 = vector.shape_cast %752 : vector<8x128xf32> to vector<1x1x8x128xf32>
    tpu.vector_store %arg6[%c0_252, %753, %c0_253, %c0_254], %756 {strides = array<i32>} : memref<1x8x8x128xf32, #tpu.memory_space<vmem>>, vector<1x1x8x128xf32>,
    %c6_i32_255 = arith.constant 6 : i32
    %c0_256 = arith.constant 0 : index
    %757 = arith.index_cast %c6_i32_255 : i32 to index
    %c0_257 = arith.constant 0 : index
    %c0_258 = arith.constant 0 : index
    %758 = vector.load %arg6[%c0_256, %757, %c0_257, %c0_258] : memref<1x8x8x128xf32, #tpu.memory_space<vmem>>, vector<1x1x8x128xf32>
    %759 = vector.shape_cast %758 : vector<1x1x8x128xf32> to vector<8x128xf32>
    %760 = vector.broadcast %686 : vector<8x1xf32> to vector<8x128xf32>
    %761 = arith.mulf %759, %760 : vector<8x128xf32>
    %762 = vector.broadcast %690 : vector<8x1xf32> to vector<8x128xf32>
    %763 = arith.addf %761, %762 : vector<8x128xf32>
    %c0_259 = arith.constant 0 : index
    %764 = arith.index_cast %c6_i32_255 : i32 to index
    %c0_260 = arith.constant 0 : index
    %c0_261 = arith.constant 0 : index
    %765 = vector.load %arg6[%c0_259, %764, %c0_260, %c0_261] : memref<1x8x8x128xf32, #tpu.memory_space<vmem>>, vector<1x1x8x128xf32>
    %766 = vector.shape_cast %765 : vector<1x1x8x128xf32> to vector<8x128xf32>
    %767 = vector.shape_cast %763 : vector<8x128xf32> to vector<1x1x8x128xf32>
    tpu.vector_store %arg6[%c0_259, %764, %c0_260, %c0_261], %767 {strides = array<i32>} : memref<1x8x8x128xf32, #tpu.memory_space<vmem>>, vector<1x1x8x128xf32>,
    %c7_i32_262 = arith.constant 7 : i32
    %c0_263 = arith.constant 0 : index
    %768 = arith.index_cast %c7_i32_262 : i32 to index
    %c0_264 = arith.constant 0 : index
    %c0_265 = arith.constant 0 : index
    %769 = vector.load %arg6[%c0_263, %768, %c0_264, %c0_265] : memref<1x8x8x128xf32, #tpu.memory_space<vmem>>, vector<1x1x8x128xf32>
    %770 = vector.shape_cast %769 : vector<1x1x8x128xf32> to vector<8x128xf32>
    %771 = vector.broadcast %686 : vector<8x1xf32> to vector<8x128xf32>
    %772 = arith.mulf %770, %771 : vector<8x128xf32>
    %773 = vector.broadcast %690 : vector<8x1xf32> to vector<8x128xf32>
    %774 = arith.addf %772, %773 : vector<8x128xf32>
    %c0_266 = arith.constant 0 : index
    %775 = arith.index_cast %c7_i32_262 : i32 to index
    %c0_267 = arith.constant 0 : index
    %c0_268 = arith.constant 0 : index
    %776 = vector.load %arg6[%c0_266, %775, %c0_267, %c0_268] : memref<1x8x8x128xf32, #tpu.memory_space<vmem>>, vector<1x1x8x128xf32>
    %777 = vector.shape_cast %776 : vector<1x1x8x128xf32> to vector<8x128xf32>
    %778 = vector.shape_cast %774 : vector<8x128xf32> to vector<1x1x8x128xf32>
    tpu.vector_store %arg6[%c0_266, %775, %c0_267, %c0_268], %778 {strides = array<i32>} : memref<1x8x8x128xf32, #tpu.memory_space<vmem>>, vector<1x1x8x128xf32>,
    %c8_i32_269 = arith.constant 8 : i32
    return
  }
  func.func @transform_0(%arg0: i32) -> (i32, i32, i32, i32) {
    %c0_i32 = arith.constant 0 : i32
    %c0_i32_0 = arith.constant 0 : i32
    %c0_i32_1 = arith.constant 0 : i32
    %c0_i32_2 = arith.constant 0 : i32
    return %arg0, %c0_i32, %c0_i32_0, %c0_i32_1 : i32, i32, i32, i32
  }
  func.func @transform_1(%arg0: i32) -> (i32, i32) {
    %c0_i32 = arith.constant 0 : i32
    %c0_i32_0 = arith.constant 0 : i32
    %c0_i32_1 = arith.constant 0 : i32
    return %c0_i32, %c0_i32_0 : i32, i32
  }
  func.func @transform_2(%arg0: i32) -> (i32, i32) {
    %c0_i32 = arith.constant 0 : i32
    %c0_i32_0 = arith.constant 0 : i32
    %c0_i32_1 = arith.constant 0 : i32
    return %c0_i32, %c0_i32_0 : i32, i32
  }
  func.func @transform_3(%arg0: i32) -> (i32, i32) {
    %c0_i32 = arith.constant 0 : i32
    %c0_i32_0 = arith.constant 0 : i32
    %c0_i32_1 = arith.constant 0 : i32
    return %c0_i32, %c0_i32_0 : i32, i32
  }
  func.func @transform_4(%arg0: i32) -> (i32, i32) {
    %c0_i32 = arith.constant 0 : i32
    %c0_i32_0 = arith.constant 0 : i32
    %c0_i32_1 = arith.constant 0 : i32
    return %c0_i32, %c0_i32_0 : i32, i32
  }
  func.func @transform_5(%arg0: i32) -> (i32, i32, i32, i32) {
    %c0_i32 = arith.constant 0 : i32
    %c0_i32_0 = arith.constant 0 : i32
    %c0_i32_1 = arith.constant 0 : i32
    %c0_i32_2 = arith.constant 0 : i32
    return %arg0, %c0_i32, %c0_i32_0, %c0_i32_1 : i32, i32, i32, i32
  }
}

</mosaic_0001>

<llo_original>
// kernel: conv3d_block_forward.1
$region0: #{conv3d_block_forward.1}
  #allocation0 [shape = 'u32[]', space=smem, size = 0x4, offset = 0x4, fixed_abs, tag = 'smem constant byte address 0x4 - core index']
  #allocation1 [shape = 'u32[144,128]{1,0:T(1,128)}', space=vmem, size = 0x12000, scoped, tag = 'internal scratch']
  %s0 = inlined_call_operand.vmem [shape: bf16[2,10,8,128], index: 0, kind: input, shape index: {}]
  %s1 = inlined_call_operand.vmem [shape: bf16[8,256], index: 1, kind: input, shape index: {}]
  %s2 = inlined_call_operand.vmem [shape: f32[8,1], index: 2, kind: input, shape index: {}]
  %s3 = inlined_call_operand.vmem [shape: f32[8,1], index: 3, kind: input, shape index: {}]
  %s4 = inlined_call_operand.vmem [shape: f32[8,1], index: 4, kind: input, shape index: {}]
  %s5 = inlined_call_operand.vmem [shape: f32[2,8,8,128], index: 5, kind: output, shape index: {}]
  %s6 = sld [smem:[#allocation0]]
  $region53: #{conv3d_block_forward.1} parent=0
    _
  %s8 = ssub.s32 1, %s6
  %s9 = scalar_select 0, %s8, %s6
  loop: start=0, step=1, limit=4
  $region2: #{conv3d_block_forward.1} parent=0 // loop_pre_header
    _
  $region3: #{conv3d_block_forward.1} parent=0 // loop_header
    %s11 = sphi 0, %s15
    %p12 = scmp.ge.s32.totalorder %s11, 4
    %s21 = sphi 0, %s23
    %s24 = sphi 0, %s21
    %s25 = sphi 0, %s24
    %s41 = sphi 0, %s25
    %s45 = sphi 0, %s45
    %s47 = sphi 0, %s45
    %s48 = sphi 0, %s47
    %s62 = sphi 0, %s48
    %s66 = sphi 0, %s66
    %s68 = sphi 0, %s66
    %s69 = sphi 0, %s68
    %s83 = sphi 0, %s69
    %s87 = sphi 0, %s87
    %s89 = sphi 0, %s87
    %s90 = sphi 0, %s89
    %s104 = sphi 0, %s90
    %s108 = sphi 0, %s108
    %s110 = sphi 0, %s108
    %s111 = sphi 0, %s110
    %s125 = sphi 0, %s111
    %s131 = sphi 0, %s133
    %s134 = sphi 0, %s131
    %s135 = sphi 0, %s134
    %s151 = sphi 0, %s135
  $region4: #{conv3d_block_forward.1} parent=0 // loop_header_branch
    %14 = sbr.rel (%p12) target = $region8
  $region5: #{conv3d_block_forward.1} parent=0 // loop_body
    %s16 = ssub.s32 %s11, 1
    %s17 = ssub.s32 %s11, 2
    %s18 = sadd.s32 %s11, 1
    %s19 = ssub.s32 %s11, %s18
    %p20 = scmp.eq.s32.totalorder %s19, 0
    %s22 = sadd.s32 %s21, 1
    %s23 = scalar_select %p20, %s21, %s22
    %p26 = pneg %p20
    %p27 = scmp.eq.s32.totalorder %s11, 1
    %p28 = por %p26, %p27
    %p29 = scmp.ne.s32.totalorder %s21, %s24
    %p30 = scmp.eq.s32.totalorder %s11, 0
    %p31 = por %p29, %p30
    %p32 = scmp.ne.s32.totalorder %s21, %s24
    %p33 = scmp.eq.s32.totalorder %s16, 1
    %p34 = por %p32, %p33
    %p35 = scmp.ne.s32.totalorder %s24, %s25
    %p36 = scmp.eq.s32.totalorder %s16, 0
    %p37 = por %p35, %p36
    %p38 = scmp.ne.s32.totalorder %s24, %s25
    %p39 = scmp.eq.s32.totalorder %s17, 1
    %p40 = por %p38, %p39
    %p42 = scmp.ne.s32.totalorder %s25, %s41
    %p43 = scmp.eq.s32.totalorder %s17, 0
    %p44 = por %p42, %p43
    %s46 = sadd.s32 %s45, 1
    %p49 = scmp.eq.s32.totalorder %s11, 1
    %p50 = scmp.ne.s32.totalorder %s45, %s47
    %p51 = scmp.eq.s32.totalorder %s11, 0
    %p52 = por %p50, %p51
    %p53 = scmp.ne.s32.totalorder %s45, %s47
    %p54 = scmp.eq.s32.totalorder %s16, 1
    %p55 = por %p53, %p54
    %p56 = scmp.ne.s32.totalorder %s47, %s48
    %p57 = scmp.eq.s32.totalorder %s16, 0
    %p58 = por %p56, %p57
    %p59 = scmp.ne.s32.totalorder %s47, %s48
    %p60 = scmp.eq.s32.totalorder %s17, 1
    %p61 = por %p59, %p60
    %p63 = scmp.ne.s32.totalorder %s48, %s62
    %p64 = scmp.eq.s32.totalorder %s17, 0
    %p65 = por %p63, %p64
    %s67 = sadd.s32 %s66, 1
    %p70 = scmp.eq.s32.totalorder %s11, 1
    %p71 = scmp.ne.s32.totalorder %s66, %s68
    %p72 = scmp.eq.s32.totalorder %s11, 0
    %p73 = por %p71, %p72
    %p74 = scmp.ne.s32.totalorder %s66, %s68
    %p75 = scmp.eq.s32.totalorder %s16, 1
    %p76 = por %p74, %p75
    %p77 = scmp.ne.s32.totalorder %s68, %s69
    %p78 = scmp.eq.s32.totalorder %s16, 0
    %p79 = por %p77, %p78
    %p80 = scmp.ne.s32.totalorder %s68, %s69
    %p81 = scmp.eq.s32.totalorder %s17, 1
    %p82 = por %p80, %p81
    %p84 = scmp.ne.s32.totalorder %s69, %s83
    %p85 = scmp.eq.s32.totalorder %s17, 0
    %p86 = por %p84, %p85
    %s88 = sadd.s32 %s87, 1
    %p91 = scmp.eq.s32.totalorder %s11, 1
    %p92 = scmp.ne.s32.totalorder %s87, %s89
    %p93 = scmp.eq.s32.totalorder %s11, 0
    %p94 = por %p92, %p93
    %p95 = scmp.ne.s32.totalorder %s87, %s89
    %p96 = scmp.eq.s32.totalorder %s16, 1
    %p97 = por %p95, %p96
    %p98 = scmp.ne.s32.totalorder %s89, %s90
    %p99 = scmp.eq.s32.totalorder %s16, 0
    %p100 = por %p98, %p99
    %p101 = scmp.ne.s32.totalorder %s89, %s90
    %p102 = scmp.eq.s32.totalorder %s17, 1
    %p103 = por %p101, %p102
    %p105 = scmp.ne.s32.totalorder %s90, %s104
    %p106 = scmp.eq.s32.totalorder %s17, 0
    %p107 = por %p105, %p106
    %s109 = sadd.s32 %s108, 1
    %p112 = scmp.eq.s32.totalorder %s11, 1
    %p113 = scmp.ne.s32.totalorder %s108, %s110
    %p114 = scmp.eq.s32.totalorder %s11, 0
    %p115 = por %p113, %p114
    %p116 = scmp.ne.s32.totalorder %s108, %s110
    %p117 = scmp.eq.s32.totalorder %s16, 1
    %p118 = por %p116, %p117
    %p119 = scmp.ne.s32.totalorder %s110, %s111
    %p120 = scmp.eq.s32.totalorder %s16, 0
    %p121 = por %p119, %p120
    %p122 = scmp.ne.s32.totalorder %s110, %s111
    %p123 = scmp.eq.s32.totalorder %s17, 1
    %p124 = por %p122, %p123
    %p126 = scmp.ne.s32.totalorder %s111, %s125
    %p127 = scmp.eq.s32.totalorder %s17, 0
    %p128 = por %p126, %p127
    %s129 = ssub.s32 %s11, %s18
    %p130 = scmp.eq.s32.totalorder %s129, 0
    %s132 = sadd.s32 %s131, 1
    %s133 = scalar_select %p130, %s131, %s132
    %p136 = pneg %p130
    %p137 = scmp.eq.s32.totalorder %s11, 1
    %p138 = por %p136, %p137
    %p139 = scmp.ne.s32.totalorder %s131, %s134
    %p140 = scmp.eq.s32.totalorder %s11, 0
    %p141 = por %p139, %p140
    %p142 = scmp.ne.s32.totalorder %s131, %s134
    %p143 = scmp.eq.s32.totalorder %s16, 1
    %p144 = por %p142, %p143
    %p145 = scmp.ne.s32.totalorder %s134, %s135
    %p146 = scmp.eq.s32.totalorder %s16, 0
    %p147 = por %p145, %p146
    %p148 = scmp.ne.s32.totalorder %s134, %s135
    %p149 = scmp.eq.s32.totalorder %s17, 1
    %p150 = por %p148, %p149
    %p152 = scmp.ne.s32.totalorder %s135, %s151
    %p153 = scmp.eq.s32.totalorder %s17, 0
    %p154 = por %p152, %p153
    %p155 = scmp.le.s32.totalorder 1, %s11
    %p156 = scmp.lt.s32.totalorder %s11, 3
    %p157 = pnand %p155, %p156
    %p158 = pneg %p157
    // Predicated region
    $region9: #{conv3d_block_forward.1} parent=5 // pred_check
      _
    $region10: #{conv3d_block_forward.1} parent=5 // pred_check_branch
      %160 = sbr.rel (%p157) target = $region12
    $region11: #{conv3d_block_forward.1} parent=5 // pred_region
      %s161 = ssub.s32 %s11, 1
      // Predicated region
      $region13: #{conv3d_block_forward.1} parent=11 // pred_check
        %p162 = pneg %p58
      $region14: #{conv3d_block_forward.1} parent=11 // pred_check_branch
        %164 = sbr.rel (%p162) target = $region16
      $region15: #{conv3d_block_forward.1} parent=11 // pred_region
        _
      $region16: #{conv3d_block_forward.1} parent=11 // pred_fallthru
        _
      // Predicated region
      $region17: #{conv3d_block_forward.1} parent=11 // pred_check
        %p165 = pneg %p79
      $region18: #{conv3d_block_forward.1} parent=11 // pred_check_branch
        %167 = sbr.rel (%p165) target = $region20
      $region19: #{conv3d_block_forward.1} parent=11 // pred_region
        _
      $region20: #{conv3d_block_forward.1} parent=11 // pred_fallthru
        _
      // Predicated region
      $region21: #{conv3d_block_forward.1} parent=11 // pred_check
        %p168 = pneg %p100
      $region22: #{conv3d_block_forward.1} parent=11 // pred_check_branch
        %170 = sbr.rel (%p168) target = $region24
      $region23: #{conv3d_block_forward.1} parent=11 // pred_region
        _
      $region24: #{conv3d_block_forward.1} parent=11 // pred_fallthru
        _
      // Predicated region
      $region25: #{conv3d_block_forward.1} parent=11 // pred_check
        %p171 = pneg %p121
      $region26: #{conv3d_block_forward.1} parent=11 // pred_check_branch
        %173 = sbr.rel (%p171) target = $region28
      $region27: #{conv3d_block_forward.1} parent=11 // pred_region
        _
      $region28: #{conv3d_block_forward.1} parent=11 // pred_fallthru
        _
    $region12: #{conv3d_block_forward.1} parent=5 // pred_fallthru
      _
    %p174 = scmp.lt.s32.totalorder %s11, 2
    // Predicated region
    $region29: #{conv3d_block_forward.1} parent=5 // pred_check
      %p175 = pneg %p174
    $region30: #{conv3d_block_forward.1} parent=5 // pred_check_branch
      %177 = sbr.rel (%p175) target = $region32
    $region31: #{conv3d_block_forward.1} parent=5 // pred_region
      // Predicated region
      $region33: #{conv3d_block_forward.1} parent=31 // pred_check
        %p178 = pneg %p31
      $region34: #{conv3d_block_forward.1} parent=31 // pred_check_branch
        %180 = sbr.rel (%p178) target = $region36
      $region35: #{conv3d_block_forward.1} parent=31 // pred_region
        %p181 = scmp.lt.s32.totalorder %s11, 1
        %s182 = scalar_select %p181, %s11, 1
        %s183 = smul.addr %s182, 10
        %s184 = smul.addr %s183, 4
        %s185 = scalar_lea.vmem %s0, %s184
      $region36: #{conv3d_block_forward.1} parent=31 // pred_fallthru
        _
    $region32: #{conv3d_block_forward.1} parent=5 // pred_fallthru
      _
    %p186 = scmp.le.s32.totalorder 1, %s11
    %p187 = scmp.lt.s32.totalorder %s11, 3
    %p188 = pnand %p186, %p187
    %p189 = pneg %p188
    // Predicated region
    $region37: #{conv3d_block_forward.1} parent=5 // pred_check
      _
    $region38: #{conv3d_block_forward.1} parent=5 // pred_check_branch
      %191 = sbr.rel (%p188) target = $region40
    $region39: #{conv3d_block_forward.1} parent=5 // pred_region
      %s192 = ssub.s32 %s11, 1
      %p193 = scmp.lt.s32.totalorder %s16, 1
      %s194 = scalar_select %p193, %s16, 1
      %s195 = smul.addr %s194, 10
      %s196 = smul.addr %s195, 4
      %s197 = scalar_lea.vmem %s0, %s196
      %p198 = pneg %p37
      %p199 = pneg %p34
      %p200 = pneg %p58
      %p201 = pneg %p55
      %p202 = pneg %p79
      %p203 = pneg %p76
      %p204 = pneg %p100
      %p205 = pneg %p97
      %p206 = pneg %p121
      %p207 = pneg %p118
      %p208 = pneg %p147
      %p209 = pneg %p144
      %p210 = scmp.lt.s32.totalorder %s16, 1
      %s211 = scalar_select %p210, %s16, 1
      %s212 = smul.addr %s211, 8
      %s213 = smul.addr %s212, 8
      %s214 = scalar_lea.vmem %s5, %s213
      %p215 = scmp.lt.s32.totalorder %s16, 1
      %s216 = scalar_select %p215, %s16, 1
      %s217 = smul.addr %s216, 10
      %s218 = smul.addr %s217, 4
      %s219 = scalar_lea.vmem %s0, %s218
      %p220 = scmp.lt.s32.totalorder %s16, 1
      %s221 = scalar_select %p220, %s16, 1
      %s222 = smul.addr %s221, 8
      %s223 = smul.addr %s222, 8
      %s224 = scalar_lea.vmem %s5, %s223
      %v226 = vld [vmem:[%s1] sm:$0xff]
      %v227 = vld [vmem:[%s2] sm:$0xff]
      %v228 = vlaneseq
      %v229 = vand.u32 %v228, 127
      %v230 = vld [vmem:[%s219] sm:$0xf]
      %s231 = scalar_lea.vmem %s219, 4
      %v232 = vld [vmem:[%s231] sm:$0xf]
      %s233 = scalar_lea.vmem %s219, 8
      %v234 = vld [vmem:[%s233] sm:$0xf]
      %v237 = vrot.slane %v230, 4
      %v238 = vrot.slane %v232, 4
      %239 = vrot.lane.b32.xlu0 %v237, 127
      %v240 = vpop.permute.xlu0 %239
      %241 = vrot.lane.b32.xlu0 %v238, 127
      %v242 = vpop.permute.xlu0 %241
      %vm243 = vcmask 1039360
      %v244 = vsel %vm243, %v240, %v242
      %245 = vrot.lane.b32.xlu0 %v230, 126
      %v246 = vpop.permute.xlu0 %245
      %247 = vrot.lane.b32.xlu0 %v232, 126
      %v248 = vpop.permute.xlu0 %247
      %vm249 = vcmask 1031168
      %v250 = vsel %vm249, %v246, %v248
      %251 = vrot.lane.b32.xlu0 %v237, 118
      %v252 = vpop.permute.xlu0 %251
      %253 = vrot.lane.b32.xlu0 %v238, 118
      %v254 = vpop.permute.xlu0 %253
      %vm255 = vcmask 965632
      %v256 = vsel %vm255, %v252, %v254
      %257 = vrot.lane.b32.xlu0 %v230, 117
      %v258 = vpop.permute.xlu0 %257
      %259 = vrot.lane.b32.xlu0 %v232, 117
      %v260 = vpop.permute.xlu0 %259
      %vm261 = vcmask 957440
      %v262 = vsel %vm261, %v258, %v260
      %263 = vrot.lane.b32.xlu0 %v237, 116
      %v264 = vpop.permute.xlu0 %263
      %265 = vrot.lane.b32.xlu0 %v238, 116
      %v266 = vpop.permute.xlu0 %265
      %vm267 = vcmask 949248
      %v268 = vsel %vm267, %v264, %v266
      %269 = vrot.lane.b32.xlu0 %v230, 108
      %v270 = vpop.permute.xlu0 %269
      %271 = vrot.lane.b32.xlu0 %v232, 108
      %v272 = vpop.permute.xlu0 %271
      %vm273 = vcmask 883712
      %v274 = vsel %vm273, %v270, %v272
      %275 = vrot.lane.b32.xlu0 %v237, 107
      %v276 = vpop.permute.xlu0 %275
      %277 = vrot.lane.b32.xlu0 %v238, 107
      %v278 = vpop.permute.xlu0 %277
      %vm279 = vcmask 875520
      %v280 = vsel %vm279, %v276, %v278
      %281 = vrot.lane.b32.xlu0 %v230, 106
      %v282 = vpop.permute.xlu0 %281
      %283 = vrot.lane.b32.xlu0 %v232, 106
      %v284 = vpop.permute.xlu0 %283
      %vm285 = vcmask 867328
      %v286 = vsel %vm285, %v282, %v284
      %287 = vrot.lane.b32.xlu0 %v237, 28
      %v288 = vpop.permute.xlu0 %287
      %289 = vrot.lane.b32.xlu0 %v238, 28
      %v290 = vpop.permute.xlu0 %289
      %vm291 = vcmask 228352
      %v292 = vsel %vm291, %v288, %v290
      %293 = vrot.lane.b32.xlu0 %v230, 27
      %v294 = vpop.permute.xlu0 %293
      %295 = vrot.lane.b32.xlu0 %v232, 27
      %v296 = vpop.permute.xlu0 %295
      %vm297 = vcmask 220160
      %v298 = vsel %vm297, %v294, %v296
      %299 = vrot.lane.b32.xlu0 %v237, 26
      %v300 = vpop.permute.xlu0 %299
      %301 = vrot.lane.b32.xlu0 %v238, 26
      %v302 = vpop.permute.xlu0 %301
      %vm303 = vcmask 211968
      %v304 = vsel %vm303, %v300, %v302
      %305 = vrot.lane.b32.xlu0 %v230, 18
      %v306 = vpop.permute.xlu0 %305
      %307 = vrot.lane.b32.xlu0 %v232, 18
      %v308 = vpop.permute.xlu0 %307
      %vm309 = vcmask 146432
      %v310 = vsel %vm309, %v306, %v308
      %311 = vrot.lane.b32.xlu0 %v237, 17
      %v312 = vpop.permute.xlu0 %311
      %313 = vrot.lane.b32.xlu0 %v238, 17
      %v314 = vpop.permute.xlu0 %313
      %vm315 = vcmask 138240
      %v316 = vsel %vm315, %v312, %v314
      %317 = vrot.lane.b32.xlu0 %v230, 16
      %v318 = vpop.permute.xlu0 %317
      %319 = vrot.lane.b32.xlu0 %v232, 16
      %v320 = vpop.permute.xlu0 %319
      %vm321 = vcmask 130048
      %v322 = vsel %vm321, %v318, %v320
      %323 = vrot.lane.b32.xlu0 %v237, 8
      %v324 = vpop.permute.xlu0 %323
      %325 = vrot.lane.b32.xlu0 %v238, 8
      %v326 = vpop.permute.xlu0 %325
      %vm327 = vcmask 64512
      %v328 = vsel %vm327, %v324, %v326
      %vm329 = vcmask 1043456
      %v332 = vsel %vm329, %v230, %v244
      %v336 = vsel %vm329, %v250, %v256
      %v340 = vsel %vm329, %v262, %v268
      %v344 = vsel %vm329, %v274, %v280
      %v348 = vsel %vm329, %v286, %v292
      %v352 = vsel %vm329, %v298, %v304
      %v356 = vsel %vm329, %v310, %v316
      %v360 = vsel %vm329, %v322, %v328
      %363 = vrot.lane.b32.xlu0 %v232, 49
      %v364 = vpop.permute.xlu0 %363
      %365 = vrot.lane.b32.xlu0 %v234, 49
      %v366 = vpop.permute.xlu0 %365
      %vm367 = vcmask 400384
      %v368 = vsel %vm367, %v364, %v366
      %v369 = vrot.slane %v234, 4
      %370 = vrot.lane.b32.xlu0 %v238, 48
      %v371 = vpop.permute.xlu0 %370
      %372 = vrot.lane.b32.xlu0 %v369, 48
      %v373 = vpop.permute.xlu0 %372
      %vm374 = vcmask 392192
      %v375 = vsel %vm374, %v371, %v373
      %376 = vrot.lane.b32.xlu0 %v232, 47
      %v377 = vpop.permute.xlu0 %376
      %378 = vrot.lane.b32.xlu0 %v234, 47
      %v379 = vpop.permute.xlu0 %378
      %vm380 = vcmask 384000
      %v381 = vsel %vm380, %v377, %v379
      %382 = vrot.lane.b32.xlu0 %v238, 39
      %v383 = vpop.permute.xlu0 %382
      %384 = vrot.lane.b32.xlu0 %v369, 39
      %v385 = vpop.permute.xlu0 %384
      %vm386 = vcmask 318464
      %v387 = vsel %vm386, %v383, %v385
      %388 = vrot.lane.b32.xlu0 %v232, 38
      %v389 = vpop.permute.xlu0 %388
      %390 = vrot.lane.b32.xlu0 %v234, 38
      %v391 = vpop.permute.xlu0 %390
      %vm392 = vcmask 310272
      %v393 = vsel %vm392, %v389, %v391
      %394 = vrot.lane.b32.xlu0 %v238, 37
      %v395 = vpop.permute.xlu0 %394
      %396 = vrot.lane.b32.xlu0 %v369, 37
      %v397 = vpop.permute.xlu0 %396
      %vm398 = vcmask 302080
      %v399 = vsel %vm398, %v395, %v397
      %400 = vrot.lane.b32.xlu0 %v232, 29
      %v401 = vpop.permute.xlu0 %400
      %402 = vrot.lane.b32.xlu0 %v234, 29
      %v403 = vpop.permute.xlu0 %402
      %vm404 = vcmask 236544
      %v405 = vsel %vm404, %v401, %v403
      %406 = vrot.lane.b32.xlu0 %v369, 28
      %v407 = vpop.permute.xlu0 %406
      %v408 = vsel %vm291, %v290, %v407
      %409 = vrot.lane.b32.xlu0 %v234, 27
      %v410 = vpop.permute.xlu0 %409
      %v411 = vsel %vm297, %v296, %v410
      %v414 = vsel %vm329, %v232, %v242
      %v417 = vsel %vm329, %v364, %v371
      %v420 = vsel %vm329, %v368, %v375
      %v423 = vsel %vm329, %v377, %v383
      %v426 = vsel %vm329, %v381, %v387
      %v429 = vsel %vm329, %v389, %v395
      %v432 = vsel %vm329, %v393, %v399
      %v435 = vsel %vm329, %v401, %v290
      %v438 = vsel %vm329, %v405, %v408
      %v441 = vsel %vm329, %v296, 0
      %v443 = vsel %vm329, %v411, 0
      %457 = vrot.lane.b32.xlu0 %v332, 7
      %v458 = vpop.permute.xlu0 %457
      %459 = vrot.lane.b32.xlu0 %v414, 7
      %v460 = vpop.permute.xlu0 %459
      %461 = vrot.lane.b32.xlu0 %v417, 7
      %v462 = vpop.permute.xlu0 %461
      %463 = vrot.lane.b32.xlu0 %v420, 7
      %v464 = vpop.permute.xlu0 %463
      %465 = vrot.lane.b32.xlu0 %v423, 7
      %v466 = vpop.permute.xlu0 %465
      %467 = vrot.lane.b32.xlu0 %v426, 7
      %v468 = vpop.permute.xlu0 %467
      %469 = vrot.lane.b32.xlu0 %v429, 7
      %v470 = vpop.permute.xlu0 %469
      %471 = vrot.lane.b32.xlu0 %v432, 7
      %v472 = vpop.permute.xlu0 %471
      %473 = vrot.lane.b32.xlu0 %v435, 7
      %v474 = vpop.permute.xlu0 %473
      %475 = vrot.lane.b32.xlu0 %v438, 7
      %v476 = vpop.permute.xlu0 %475
      %477 = vrot.lane.b32.xlu0 %v441, 7
      %v478 = vpop.permute.xlu0 %477
      %479 = vrot.lane.b32.xlu0 %v443, 7
      %v480 = vpop.permute.xlu0 %479
      %481 = vrot.lane.b32.xlu0 0, 7
      %v482 = vpop.permute.xlu0 %481
      %vm483 = vcmask 56320
      %v484 = vsel %vm483, %v458, %v460
      %v485 = vsel %vm483, %v462, %v464
      %v486 = vsel %vm483, %v466, %v468
      %v487 = vsel %vm483, %v470, %v472
      %v488 = vsel %vm483, %v474, %v476
      %v489 = vsel %vm483, %v478, %v480
      %498 = vset.pattern.permute.xlu0 0
      %499 = vperm.xlu0 %498, %v227
      %v500 = vpop.permute.xlu0 %499
      %v503 = vunpack.c.l.b16 %v226
      %v504 = vunpack.c.h.b16 %v226
      %v505 = vpack.c.b16 %v503, %v503
      %v506 = vpack.c.b16 %v504, %v504
      %509 = vmatprep.subr.bf16.mxu0 0
      %510 = vmatpush1.bf16.msra.mxu0 %v360
      %511 = vmatprep.subr.bf16.mxu0 0
      %512 = vmatpush1.bf16.msra.mxu0 %v356
      %513 = vmatprep.subr.bf16.mxu0 0
      %514 = vmatpush1.bf16.msra.mxu0 %v352
      %515 = vmatprep.subr.bf16.mxu0 0
      %516 = vmatpush1.bf16.msra.mxu0 %v348
      %517 = vmatprep.subr.bf16.mxu0 0
      %518 = vmatpush1.bf16.msra.mxu0 %v344
      %519 = vmatprep.subr.bf16.mxu0 0
      %520 = vmatpush1.bf16.msra.mxu0 %v340
      %521 = vmatprep.subr.bf16.mxu0 0
      %522 = vmatpush1.bf16.msra.mxu0 %v336
      %523 = vmatprep.subr.bf16.mxu0 0
      %524 = vmatpush1.bf16.msra.mxu0 %v332
      %525 = vmatprep.subr.bf16.mxu0 0
      %526 = vmatpush2.bf16.msra.mxu0 %v482
      %527 = vmatprep.subr.bf16.mxu0 0
      %528 = vmatpush2.bf16.msra.mxu0 %v482
      %529 = vmatprep.subr.bf16.mxu0 0
      %530 = vmatpush2.bf16.msra.mxu0 %v489
      %531 = vmatprep.subr.bf16.mxu0 0
      %532 = vmatpush2.bf16.msra.mxu0 %v488
      %533 = vmatprep.subr.bf16.mxu0 0
      %534 = vmatpush2.bf16.msra.mxu0 %v487
      %535 = vmatprep.subr.bf16.mxu0 0
      %536 = vmatpush2.bf16.msra.mxu0 %v486
      %537 = vmatprep.subr.bf16.mxu0 0
      %538 = vmatpush2.bf16.msra.mxu0 %v485
      %539 = vmatprep.subr.bf16.mxu0 0
      %540 = vmatpush2.bf16.msra.mxu0 %v484
      %541 = vmatprep.mubr.bf16.mxu0 %v506
      %542 = vmatmul.mubr.bf16.gmra.mxu0 %v505
      %v543 = vpop.f32.mrf.mxu0
      %v544 = vadd.f32 %v500, %v543
      %v545 = vpop.f32.mrf.mxu0
      %v546 = vpop.f32.mrf.mxu0
      %v547 = vpop.f32.mrf.mxu0
      %548 = vdwg.mxu0
      %v549 = vmax.f32 %v544, 0.0
      %550 = vst [vmem:[%s224] sm:$0xff] %v549
      %v551 = vcvt.s32.f32 %v229
      %v552 = vrcp.pop 100.0
      %v553 = vmul.f32 %v551, %v552
      %v554 = vfloor.f32 %v553
      %v555 = vmul.f32 %v554, 100.0
      %v556 = vsub.f32 %v551, %v555
      %v557 = vrcp.pop 10.0
      %v558 = vmul.f32 %v556, %v557
      %v559 = vfloor.f32 %v558
      %v560 = vmul.f32 %v559, 10.0
      %v561 = vsub.f32 %v556, %v560
      %vm562 = vcmp.lt.f32.partialorder %v554, 8.0
      %vm563 = vcmp.lt.f32.partialorder %v559, 8.0
      %vm564 = vmand %vm562, %vm563
      %vm565 = vcmp.lt.f32.partialorder %v561, 8.0
      %vm566 = vmand %vm564, %vm565
      %v567 = vsel %vm566, 1, 0
      %v568 = vcvt.s32.f32 %v567
      %v569 = vmul.f32 %v549, %v568
      %v570 = vadd.f32 %v569, 0.0
      %v571 = vmul.f32 %v569, %v549
      %v572 = vadd.f32 %v571, 0.0
      %v573 = vld [vmem:[%s231] sm:$0xf]
      %v574 = vld [vmem:[%s233] sm:$0xf]
      %s575 = scalar_lea.vmem %s219, 12
      %v576 = vld [vmem:[%s575] sm:$0xf]
      %v579 = vrot.slane %v573, 4
      %v580 = vrot.slane %v574, 4
      %581 = vrot.lane.b32.xlu0 %v579, 127
      %v582 = vpop.permute.xlu0 %581
      %583 = vrot.lane.b32.xlu0 %v580, 127
      %v584 = vpop.permute.xlu0 %583
      %v585 = vsel %vm243, %v582, %v584
      %586 = vrot.lane.b32.xlu0 %v573, 126
      %v587 = vpop.permute.xlu0 %586
      %588 = vrot.lane.b32.xlu0 %v574, 126
      %v589 = vpop.permute.xlu0 %588
      %v590 = vsel %vm249, %v587, %v589
      %591 = vrot.lane.b32.xlu0 %v579, 118
      %v592 = vpop.permute.xlu0 %591
      %593 = vrot.lane.b32.xlu0 %v580, 118
      %v594 = vpop.permute.xlu0 %593
      %v595 = vsel %vm255, %v592, %v594
      %596 = vrot.lane.b32.xlu0 %v573, 117
      %v597 = vpop.permute.xlu0 %596
      %598 = vrot.lane.b32.xlu0 %v574, 117
      %v599 = vpop.permute.xlu0 %598
      %v600 = vsel %vm261, %v597, %v599
      %601 = vrot.lane.b32.xlu0 %v579, 116
      %v602 = vpop.permute.xlu0 %601
      %603 = vrot.lane.b32.xlu0 %v580, 116
      %v604 = vpop.permute.xlu0 %603
      %v605 = vsel %vm267, %v602, %v604
      %606 = vrot.lane.b32.xlu0 %v573, 108
      %v607 = vpop.permute.xlu0 %606
      %608 = vrot.lane.b32.xlu0 %v574, 108
      %v609 = vpop.permute.xlu0 %608
      %v610 = vsel %vm273, %v607, %v609
      %611 = vrot.lane.b32.xlu0 %v579, 107
      %v612 = vpop.permute.xlu0 %611
      %613 = vrot.lane.b32.xlu0 %v580, 107
      %v614 = vpop.permute.xlu0 %613
      %v615 = vsel %vm279, %v612, %v614
      %616 = vrot.lane.b32.xlu0 %v573, 106
      %v617 = vpop.permute.xlu0 %616
      %618 = vrot.lane.b32.xlu0 %v574, 106
      %v619 = vpop.permute.xlu0 %618
      %v620 = vsel %vm285, %v617, %v619
      %621 = vrot.lane.b32.xlu0 %v579, 28
      %v622 = vpop.permute.xlu0 %621
      %623 = vrot.lane.b32.xlu0 %v580, 28
      %v624 = vpop.permute.xlu0 %623
      %v625 = vsel %vm291, %v622, %v624
      %626 = vrot.lane.b32.xlu0 %v573, 27
      %v627 = vpop.permute.xlu0 %626
      %628 = vrot.lane.b32.xlu0 %v574, 27
      %v629 = vpop.permute.xlu0 %628
      %v630 = vsel %vm297, %v627, %v629
      %631 = vrot.lane.b32.xlu0 %v579, 26
      %v632 = vpop.permute.xlu0 %631
      %633 = vrot.lane.b32.xlu0 %v580, 26
      %v634 = vpop.permute.xlu0 %633
      %v635 = vsel %vm303, %v632, %v634
      %636 = vrot.lane.b32.xlu0 %v573, 18
      %v637 = vpop.permute.xlu0 %636
      %638 = vrot.lane.b32.xlu0 %v574, 18
      %v639 = vpop.permute.xlu0 %638
      %v640 = vsel %vm309, %v637, %v639
      %641 = vrot.lane.b32.xlu0 %v579, 17
      %v642 = vpop.permute.xlu0 %641
      %643 = vrot.lane.b32.xlu0 %v580, 17
      %v644 = vpop.permute.xlu0 %643
      %v645 = vsel %vm315, %v642, %v644
      %646 = vrot.lane.b32.xlu0 %v573, 16
      %v647 = vpop.permute.xlu0 %646
      %648 = vrot.lane.b32.xlu0 %v574, 16
      %v649 = vpop.permute.xlu0 %648
      %v650 = vsel %vm321, %v647, %v649
      %651 = vrot.lane.b32.xlu0 %v579, 8
      %v652 = vpop.permute.xlu0 %651
      %653 = vrot.lane.b32.xlu0 %v580, 8
      %v654 = vpop.permute.xlu0 %653
      %v655 = vsel %vm327, %v652, %v654
      %v658 = vsel %vm329, %v573, %v585
      %v662 = vsel %vm329, %v590, %v595
      %v666 = vsel %vm329, %v600, %v605
      %v670 = vsel %vm329, %v610, %v615
      %v674 = vsel %vm329, %v620, %v625
      %v678 = vsel %vm329, %v630, %v635
      %v682 = vsel %vm329, %v640, %v645
      %v686 = vsel %vm329, %v650, %v655
      %689 = vrot.lane.b32.xlu0 %v574, 49
      %v690 = vpop.permute.xlu0 %689
      %691 = vrot.lane.b32.xlu0 %v576, 49
      %v692 = vpop.permute.xlu0 %691
      %v693 = vsel %vm367, %v690, %v692
      %v694 = vrot.slane %v576, 4
      %695 = vrot.lane.b32.xlu0 %v580, 48
      %v696 = vpop.permute.xlu0 %695
      %697 = vrot.lane.b32.xlu0 %v694, 48
      %v698 = vpop.permute.xlu0 %697
      %v699 = vsel %vm374, %v696, %v698
      %700 = vrot.lane.b32.xlu0 %v574, 47
      %v701 = vpop.permute.xlu0 %700
      %702 = vrot.lane.b32.xlu0 %v576, 47
      %v703 = vpop.permute.xlu0 %702
      %v704 = vsel %vm380, %v701, %v703
      %705 = vrot.lane.b32.xlu0 %v580, 39
      %v706 = vpop.permute.xlu0 %705
      %707 = vrot.lane.b32.xlu0 %v694, 39
      %v708 = vpop.permute.xlu0 %707
      %v709 = vsel %vm386, %v706, %v708
      %710 = vrot.lane.b32.xlu0 %v574, 38
      %v711 = vpop.permute.xlu0 %710
      %712 = vrot.lane.b32.xlu0 %v576, 38
      %v713 = vpop.permute.xlu0 %712
      %v714 = vsel %vm392, %v711, %v713
      %715 = vrot.lane.b32.xlu0 %v580, 37
      %v716 = vpop.permute.xlu0 %715
      %717 = vrot.lane.b32.xlu0 %v694, 37
      %v718 = vpop.permute.xlu0 %717
      %v719 = vsel %vm398, %v716, %v718
      %720 = vrot.lane.b32.xlu0 %v574, 29
      %v721 = vpop.permute.xlu0 %720
      %722 = vrot.lane.b32.xlu0 %v576, 29
      %v723 = vpop.permute.xlu0 %722
      %v724 = vsel %vm404, %v721, %v723
      %725 = vrot.lane.b32.xlu0 %v694, 28
      %v726 = vpop.permute.xlu0 %725
      %v727 = vsel %vm291, %v624, %v726
      %728 = vrot.lane.b32.xlu0 %v576, 27
      %v729 = vpop.permute.xlu0 %728
      %v730 = vsel %vm297, %v629, %v729
      %v733 = vsel %vm329, %v574, %v584
      %v736 = vsel %vm329, %v690, %v696
      %v739 = vsel %vm329, %v693, %v699
      %v742 = vsel %vm329, %v701, %v706
      %v745 = vsel %vm329, %v704, %v709
      %v748 = vsel %vm329, %v711, %v716
      %v751 = vsel %vm329, %v714, %v719
      %v754 = vsel %vm329, %v721, %v624
      %v757 = vsel %vm329, %v724, %v727
      %v759 = vsel %vm329, %v629, 0
      %v761 = vsel %vm329, %v730, 0
      %774 = vrot.lane.b32.xlu0 %v658, 7
      %v775 = vpop.permute.xlu0 %774
      %776 = vrot.lane.b32.xlu0 %v733, 7
      %v777 = vpop.permute.xlu0 %776
      %778 = vrot.lane.b32.xlu0 %v736, 7
      %v779 = vpop.permute.xlu0 %778
      %780 = vrot.lane.b32.xlu0 %v739, 7
      %v781 = vpop.permute.xlu0 %780
      %782 = vrot.lane.b32.xlu0 %v742, 7
      %v783 = vpop.permute.xlu0 %782
      %784 = vrot.lane.b32.xlu0 %v745, 7
      %v785 = vpop.permute.xlu0 %784
      %786 = vrot.lane.b32.xlu0 %v748, 7
      %v787 = vpop.permute.xlu0 %786
      %788 = vrot.lane.b32.xlu0 %v751, 7
      %v789 = vpop.permute.xlu0 %788
      %790 = vrot.lane.b32.xlu0 %v754, 7
      %v791 = vpop.permute.xlu0 %790
      %792 = vrot.lane.b32.xlu0 %v757, 7
      %v793 = vpop.permute.xlu0 %792
      %794 = vrot.lane.b32.xlu0 %v759, 7
      %v795 = vpop.permute.xlu0 %794
      %796 = vrot.lane.b32.xlu0 %v761, 7
      %v797 = vpop.permute.xlu0 %796
      %v798 = vsel %vm483, %v775, %v777
      %v799 = vsel %vm483, %v779, %v781
      %v800 = vsel %vm483, %v783, %v785
      %v801 = vsel %vm483, %v787, %v789
      %v802 = vsel %vm483, %v791, %v793
      %v803 = vsel %vm483, %v795, %v797
      %810 = vmatprep.subr.bf16.mxu0 0
      %811 = vmatpush1.bf16.msra.mxu0 %v686
      %812 = vmatprep.subr.bf16.mxu0 0
      %813 = vmatpush1.bf16.msra.mxu0 %v682
      %814 = vmatprep.subr.bf16.mxu0 0
      %815 = vmatpush1.bf16.msra.mxu0 %v678
      %816 = vmatprep.subr.bf16.mxu0 0
      %817 = vmatpush1.bf16.msra.mxu0 %v674
      %818 = vmatprep.subr.bf16.mxu0 0
      %819 = vmatpush1.bf16.msra.mxu0 %v670
      %820 = vmatprep.subr.bf16.mxu0 0
      %821 = vmatpush1.bf16.msra.mxu0 %v666
      %822 = vmatprep.subr.bf16.mxu0 0
      %823 = vmatpush1.bf16.msra.mxu0 %v662
      %824 = vmatprep.subr.bf16.mxu0 0
      %825 = vmatpush1.bf16.msra.mxu0 %v658
      %826 = vmatprep.subr.bf16.mxu0 0
      %827 = vmatpush2.bf16.msra.mxu0 %v482
      %828 = vmatprep.subr.bf16.mxu0 0
      %829 = vmatpush2.bf16.msra.mxu0 %v482
      %830 = vmatprep.subr.bf16.mxu0 0
      %831 = vmatpush2.bf16.msra.mxu0 %v803
      %832 = vmatprep.subr.bf16.mxu0 0
      %833 = vmatpush2.bf16.msra.mxu0 %v802
      %834 = vmatprep.subr.bf16.mxu0 0
      %835 = vmatpush2.bf16.msra.mxu0 %v801
      %836 = vmatprep.subr.bf16.mxu0 0
      %837 = vmatpush2.bf16.msra.mxu0 %v800
      %838 = vmatprep.subr.bf16.mxu0 0
      %839 = vmatpush2.bf16.msra.mxu0 %v799
      %840 = vmatprep.subr.bf16.mxu0 0
      %841 = vmatpush2.bf16.msra.mxu0 %v798
      %842 = vmatprep.mubr.bf16.mxu0 %v506
      %843 = vmatmul.mubr.bf16.gmra.mxu0 %v505
      %v844 = vpop.f32.mrf.mxu0
      %v845 = vadd.f32 %v500, %v844
      %v846 = vpop.f32.mrf.mxu0
      %v847 = vpop.f32.mrf.mxu0
      %v848 = vpop.f32.mrf.mxu0
      %849 = vdwg.mxu0
      %v850 = vmax.f32 %v845, 0.0
      %s851 = scalar_lea.vmem %s224, 8
      %852 = vst [vmem:[%s851] sm:$0xff] %v850
      %v853 = vadd.s32 %v229, 128
      %v854 = vcvt.s32.f32 %v853
      %v855 = vmul.f32 %v854, %v552
      %v856 = vfloor.f32 %v855
      %v857 = vmul.f32 %v856, 100.0
      %v858 = vsub.f32 %v854, %v857
      %v859 = vmul.f32 %v858, %v557
      %v860 = vfloor.f32 %v859
      %v861 = vmul.f32 %v860, 10.0
      %v862 = vsub.f32 %v858, %v861
      %vm863 = vcmp.lt.f32.partialorder %v856, 8.0
      %vm864 = vcmp.lt.f32.partialorder %v860, 8.0
      %vm865 = vmand %vm863, %vm864
      %vm866 = vcmp.lt.f32.partialorder %v862, 8.0
      %vm867 = vmand %vm865, %vm866
      %v868 = vsel %vm867, 1, 0
      %v869 = vcvt.s32.f32 %v868
      %v870 = vmul.f32 %v850, %v869
      %v871 = vadd.f32 %v570, %v870
      %v872 = vmul.f32 %v870, %v850
      %v873 = vadd.f32 %v572, %v872
      %v874 = vld [vmem:[%s233] sm:$0xf]
      %v875 = vld [vmem:[%s575] sm:$0xf]
      %s876 = scalar_lea.vmem %s219, 16
      %v877 = vld [vmem:[%s876] sm:$0xf]
      %v880 = vrot.slane %v874, 4
      %v881 = vrot.slane %v875, 4
      %882 = vrot.lane.b32.xlu0 %v880, 127
      %v883 = vpop.permute.xlu0 %882
      %884 = vrot.lane.b32.xlu0 %v881, 127
      %v885 = vpop.permute.xlu0 %884
      %v886 = vsel %vm243, %v883, %v885
      %887 = vrot.lane.b32.xlu0 %v874, 126
      %v888 = vpop.permute.xlu0 %887
      %889 = vrot.lane.b32.xlu0 %v875, 126
      %v890 = vpop.permute.xlu0 %889
      %v891 = vsel %vm249, %v888, %v890
      %892 = vrot.lane.b32.xlu0 %v880, 118
      %v893 = vpop.permute.xlu0 %892
      %894 = vrot.lane.b32.xlu0 %v881, 118
      %v895 = vpop.permute.xlu0 %894
      %v896 = vsel %vm255, %v893, %v895
      %897 = vrot.lane.b32.xlu0 %v874, 117
      %v898 = vpop.permute.xlu0 %897
      %899 = vrot.lane.b32.xlu0 %v875, 117
      %v900 = vpop.permute.xlu0 %899
      %v901 = vsel %vm261, %v898, %v900
      %902 = vrot.lane.b32.xlu0 %v880, 116
      %v903 = vpop.permute.xlu0 %902
      %904 = vrot.lane.b32.xlu0 %v881, 116
      %v905 = vpop.permute.xlu0 %904
      %v906 = vsel %vm267, %v903, %v905
      %907 = vrot.lane.b32.xlu0 %v874, 108
      %v908 = vpop.permute.xlu0 %907
      %909 = vrot.lane.b32.xlu0 %v875, 108
      %v910 = vpop.permute.xlu0 %909
      %v911 = vsel %vm273, %v908, %v910
      %912 = vrot.lane.b32.xlu0 %v880, 107
      %v913 = vpop.permute.xlu0 %912
      %914 = vrot.lane.b32.xlu0 %v881, 107
      %v915 = vpop.permute.xlu0 %914
      %v916 = vsel %vm279, %v913, %v915
      %917 = vrot.lane.b32.xlu0 %v874, 106
      %v918 = vpop.permute.xlu0 %917
      %919 = vrot.lane.b32.xlu0 %v875, 106
      %v920 = vpop.permute.xlu0 %919
      %v921 = vsel %vm285, %v918, %v920
      %922 = vrot.lane.b32.xlu0 %v880, 28
      %v923 = vpop.permute.xlu0 %922
      %924 = vrot.lane.b32.xlu0 %v881, 28
      %v925 = vpop.permute.xlu0 %924
      %v926 = vsel %vm291, %v923, %v925
      %927 = vrot.lane.b32.xlu0 %v874, 27
      %v928 = vpop.permute.xlu0 %927
      %929 = vrot.lane.b32.xlu0 %v875, 27
      %v930 = vpop.permute.xlu0 %929
      %v931 = vsel %vm297, %v928, %v930
      %932 = vrot.lane.b32.xlu0 %v880, 26
      %v933 = vpop.permute.xlu0 %932
      %934 = vrot.lane.b32.xlu0 %v881, 26
      %v935 = vpop.permute.xlu0 %934
      %v936 = vsel %vm303, %v933, %v935
      %937 = vrot.lane.b32.xlu0 %v874, 18
      %v938 = vpop.permute.xlu0 %937
      %939 = vrot.lane.b32.xlu0 %v875, 18
      %v940 = vpop.permute.xlu0 %939
      %v941 = vsel %vm309, %v938, %v940
      %942 = vrot.lane.b32.xlu0 %v880, 17
      %v943 = vpop.permute.xlu0 %942
      %944 = vrot.lane.b32.xlu0 %v881, 17
      %v945 = vpop.permute.xlu0 %944
      %v946 = vsel %vm315, %v943, %v945
      %947 = vrot.lane.b32.xlu0 %v874, 16
      %v948 = vpop.permute.xlu0 %947
      %949 = vrot.lane.b32.xlu0 %v875, 16
      %v950 = vpop.permute.xlu0 %949
      %v951 = vsel %vm321, %v948, %v950
      %952 = vrot.lane.b32.xlu0 %v880, 8
      %v953 = vpop.permute.xlu0 %952
      %954 = vrot.lane.b32.xlu0 %v881, 8
      %v955 = vpop.permute.xlu0 %954
      %v956 = vsel %vm327, %v953, %v955
      %v959 = vsel %vm329, %v874, %v886
      %v963 = vsel %vm329, %v891, %v896
      %v967 = vsel %vm329, %v901, %v906
      %v971 = vsel %vm329, %v911, %v916
      %v975 = vsel %vm329, %v921, %v926
      %v979 = vsel %vm329, %v931, %v936
      %v983 = vsel %vm329, %v941, %v946
      %v987 = vsel %vm329, %v951, %v956
      %990 = vrot.lane.b32.xlu0 %v875, 49
      %v991 = vpop.permute.xlu0 %990
      %992 = vrot.lane.b32.xlu0 %v877, 49
      %v993 = vpop.permute.xlu0 %992
      %v994 = vsel %vm367, %v991, %v993
      %v995 = vrot.slane %v877, 4
      %996 = vrot.lane.b32.xlu0 %v881, 48
      %v997 = vpop.permute.xlu0 %996
      %998 = vrot.lane.b32.xlu0 %v995, 48
      %v999 = vpop.permute.xlu0 %998
      %v1000 = vsel %vm374, %v997, %v999
      %1001 = vrot.lane.b32.xlu0 %v875, 47
      %v1002 = vpop.permute.xlu0 %1001
      %1003 = vrot.lane.b32.xlu0 %v877, 47
      %v1004 = vpop.permute.xlu0 %1003
      %v1005 = vsel %vm380, %v1002, %v1004
      %1006 = vrot.lane.b32.xlu0 %v881, 39
      %v1007 = vpop.permute.xlu0 %1006
      %1008 = vrot.lane.b32.xlu0 %v995, 39
      %v1009 = vpop.permute.xlu0 %1008
      %v1010 = vsel %vm386, %v1007, %v1009
      %1011 = vrot.lane.b32.xlu0 %v875, 38
      %v1012 = vpop.permute.xlu0 %1011
      %1013 = vrot.lane.b32.xlu0 %v877, 38
      %v1014 = vpop.permute.xlu0 %1013
      %v1015 = vsel %vm392, %v1012, %v1014
      %1016 = vrot.lane.b32.xlu0 %v881, 37
      %v1017 = vpop.permute.xlu0 %1016
      %1018 = vrot.lane.b32.xlu0 %v995, 37
      %v1019 = vpop.permute.xlu0 %1018
      %v1020 = vsel %vm398, %v1017, %v1019
      %1021 = vrot.lane.b32.xlu0 %v875, 29
      %v1022 = vpop.permute.xlu0 %1021
      %1023 = vrot.lane.b32.xlu0 %v877, 29
      %v1024 = vpop.permute.xlu0 %1023
      %v1025 = vsel %vm404, %v1022, %v1024
      %1026 = vrot.lane.b32.xlu0 %v995, 28
      %v1027 = vpop.permute.xlu0 %1026
      %v1028 = vsel %vm291, %v925, %v1027
      %1029 = vrot.lane.b32.xlu0 %v877, 27
      %v1030 = vpop.permute.xlu0 %1029
      %v1031 = vsel %vm297, %v930, %v1030
      %v1034 = vsel %vm329, %v875, %v885
      %v1037 = vsel %vm329, %v991, %v997
      %v1040 = vsel %vm329, %v994, %v1000
      %v1043 = vsel %vm329, %v1002, %v1007
      %v1046 = vsel %vm329, %v1005, %v1010
      %v1049 = vsel %vm329, %v1012, %v1017
      %v1052 = vsel %vm329, %v1015, %v1020
      %v1055 = vsel %vm329, %v1022, %v925
      %v1058 = vsel %vm329, %v1025, %v1028
      %v1060 = vsel %vm329, %v930, 0
      %v1062 = vsel %vm329, %v1031, 0
      %1075 = vrot.lane.b32.xlu0 %v959, 7
      %v1076 = vpop.permute.xlu0 %1075
      %1077 = vrot.lane.b32.xlu0 %v1034, 7
      %v1078 = vpop.permute.xlu0 %1077
      %1079 = vrot.lane.b32.xlu0 %v1037, 7
      %v1080 = vpop.permute.xlu0 %1079
      %1081 = vrot.lane.b32.xlu0 %v1040, 7
      %v1082 = vpop.permute.xlu0 %1081
      %1083 = vrot.lane.b32.xlu0 %v1043, 7
      %v1084 = vpop.permute.xlu0 %1083
      %1085 = vrot.lane.b32.xlu0 %v1046, 7
      %v1086 = vpop.permute.xlu0 %1085
      %1087 = vrot.lane.b32.xlu0 %v1049, 7
      %v1088 = vpop.permute.xlu0 %1087
      %1089 = vrot.lane.b32.xlu0 %v1052, 7
      %v1090 = vpop.permute.xlu0 %1089
      %1091 = vrot.lane.b32.xlu0 %v1055, 7
      %v1092 = vpop.permute.xlu0 %1091
      %1093 = vrot.lane.b32.xlu0 %v1058, 7
      %v1094 = vpop.permute.xlu0 %1093
      %1095 = vrot.lane.b32.xlu0 %v1060, 7
      %v1096 = vpop.permute.xlu0 %1095
      %1097 = vrot.lane.b32.xlu0 %v1062, 7
      %v1098 = vpop.permute.xlu0 %1097
      %v1099 = vsel %vm483, %v1076, %v1078
      %v1100 = vsel %vm483, %v1080, %v1082
      %v1101 = vsel %vm483, %v1084, %v1086
      %v1102 = vsel %vm483, %v1088, %v1090
      %v1103 = vsel %vm483, %v1092, %v1094
      %v1104 = vsel %vm483, %v1096, %v1098
      %1111 = vmatprep.subr.bf16.mxu0 0
      %1112 = vmatpush1.bf16.msra.mxu0 %v987
      %1113 = vmatprep.subr.bf16.mxu0 0
      %1114 = vmatpush1.bf16.msra.mxu0 %v983
      %1115 = vmatprep.subr.bf16.mxu0 0
      %1116 = vmatpush1.bf16.msra.mxu0 %v979
      %1117 = vmatprep.subr.bf16.mxu0 0
      %1118 = vmatpush1.bf16.msra.mxu0 %v975
      %1119 = vmatprep.subr.bf16.mxu0 0
      %1120 = vmatpush1.bf16.msra.mxu0 %v971
      %1121 = vmatprep.subr.bf16.mxu0 0
      %1122 = vmatpush1.bf16.msra.mxu0 %v967
      %1123 = vmatprep.subr.bf16.mxu0 0
      %1124 = vmatpush1.bf16.msra.mxu0 %v963
      %1125 = vmatprep.subr.bf16.mxu0 0
      %1126 = vmatpush1.bf16.msra.mxu0 %v959
      %1127 = vmatprep.subr.bf16.mxu0 0
      %1128 = vmatpush2.bf16.msra.mxu0 %v482
      %1129 = vmatprep.subr.bf16.mxu0 0
      %1130 = vmatpush2.bf16.msra.mxu0 %v482
      %1131 = vmatprep.subr.bf16.mxu0 0
      %1132 = vmatpush2.bf16.msra.mxu0 %v1104
      %1133 = vmatprep.subr.bf16.mxu0 0
      %1134 = vmatpush2.bf16.msra.mxu0 %v1103
      %1135 = vmatprep.subr.bf16.mxu0 0
      %1136 = vmatpush2.bf16.msra.mxu0 %v1102
      %1137 = vmatprep.subr.bf16.mxu0 0
      %1138 = vmatpush2.bf16.msra.mxu0 %v1101
      %1139 = vmatprep.subr.bf16.mxu0 0
      %1140 = vmatpush2.bf16.msra.mxu0 %v1100
      %1141 = vmatprep.subr.bf16.mxu0 0
      %1142 = vmatpush2.bf16.msra.mxu0 %v1099
      %1143 = vmatprep.mubr.bf16.mxu0 %v506
      %1144 = vmatmul.mubr.bf16.gmra.mxu0 %v505
      %v1145 = vpop.f32.mrf.mxu0
      %v1146 = vadd.f32 %v500, %v1145
      %v1147 = vpop.f32.mrf.mxu0
      %v1148 = vpop.f32.mrf.mxu0
      %v1149 = vpop.f32.mrf.mxu0
      %1150 = vdwg.mxu0
      %v1151 = vmax.f32 %v1146, 0.0
      %s1152 = scalar_lea.vmem %s224, 16
      %1153 = vst [vmem:[%s1152] sm:$0xff] %v1151
      %v1154 = vadd.s32 %v229, 256
      %v1155 = vcvt.s32.f32 %v1154
      %v1156 = vmul.f32 %v1155, %v552
      %v1157 = vfloor.f32 %v1156
      %v1158 = vmul.f32 %v1157, 100.0
      %v1159 = vsub.f32 %v1155, %v1158
      %v1160 = vmul.f32 %v1159, %v557
      %v1161 = vfloor.f32 %v1160
      %v1162 = vmul.f32 %v1161, 10.0
      %v1163 = vsub.f32 %v1159, %v1162
      %vm1164 = vcmp.lt.f32.partialorder %v1157, 8.0
      %vm1165 = vcmp.lt.f32.partialorder %v1161, 8.0
      %vm1166 = vmand %vm1164, %vm1165
      %vm1167 = vcmp.lt.f32.partialorder %v1163, 8.0
      %vm1168 = vmand %vm1166, %vm1167
      %v1169 = vsel %vm1168, 1, 0
      %v1170 = vcvt.s32.f32 %v1169
      %v1171 = vmul.f32 %v1151, %v1170
      %v1172 = vadd.f32 %v871, %v1171
      %v1173 = vmul.f32 %v1171, %v1151
      %v1174 = vadd.f32 %v873, %v1173
      %v1175 = vld [vmem:[%s575] sm:$0xf]
      %v1176 = vld [vmem:[%s876] sm:$0xf]
      %s1177 = scalar_lea.vmem %s219, 20
      %v1178 = vld [vmem:[%s1177] sm:$0xf]
      %v1181 = vrot.slane %v1175, 4
      %v1182 = vrot.slane %v1176, 4
      %1183 = vrot.lane.b32.xlu0 %v1181, 127
      %v1184 = vpop.permute.xlu0 %1183
      %1185 = vrot.lane.b32.xlu0 %v1182, 127
      %v1186 = vpop.permute.xlu0 %1185
      %v1187 = vsel %vm243, %v1184, %v1186
      %1188 = vrot.lane.b32.xlu0 %v1175, 126
      %v1189 = vpop.permute.xlu0 %1188
      %1190 = vrot.lane.b32.xlu0 %v1176, 126
      %v1191 = vpop.permute.xlu0 %1190
      %v1192 = vsel %vm249, %v1189, %v1191
      %1193 = vrot.lane.b32.xlu0 %v1181, 118
      %v1194 = vpop.permute.xlu0 %1193
      %1195 = vrot.lane.b32.xlu0 %v1182, 118
      %v1196 = vpop.permute.xlu0 %1195
      %v1197 = vsel %vm255, %v1194, %v1196
      %1198 = vrot.lane.b32.xlu0 %v1175, 117
      %v1199 = vpop.permute.xlu0 %1198
      %1200 = vrot.lane.b32.xlu0 %v1176, 117
      %v1201 = vpop.permute.xlu0 %1200
      %v1202 = vsel %vm261, %v1199, %v1201
      %1203 = vrot.lane.b32.xlu0 %v1181, 116
      %v1204 = vpop.permute.xlu0 %1203
      %1205 = vrot.lane.b32.xlu0 %v1182, 116
      %v1206 = vpop.permute.xlu0 %1205
      %v1207 = vsel %vm267, %v1204, %v1206
      %1208 = vrot.lane.b32.xlu0 %v1175, 108
      %v1209 = vpop.permute.xlu0 %1208
      %1210 = vrot.lane.b32.xlu0 %v1176, 108
      %v1211 = vpop.permute.xlu0 %1210
      %v1212 = vsel %vm273, %v1209, %v1211
      %1213 = vrot.lane.b32.xlu0 %v1181, 107
      %v1214 = vpop.permute.xlu0 %1213
      %1215 = vrot.lane.b32.xlu0 %v1182, 107
      %v1216 = vpop.permute.xlu0 %1215
      %v1217 = vsel %vm279, %v1214, %v1216
      %1218 = vrot.lane.b32.xlu0 %v1175, 106
      %v1219 = vpop.permute.xlu0 %1218
      %1220 = vrot.lane.b32.xlu0 %v1176, 106
      %v1221 = vpop.permute.xlu0 %1220
      %v1222 = vsel %vm285, %v1219, %v1221
      %1223 = vrot.lane.b32.xlu0 %v1181, 28
      %v1224 = vpop.permute.xlu0 %1223
      %1225 = vrot.lane.b32.xlu0 %v1182, 28
      %v1226 = vpop.permute.xlu0 %1225
      %v1227 = vsel %vm291, %v1224, %v1226
      %1228 = vrot.lane.b32.xlu0 %v1175, 27
      %v1229 = vpop.permute.xlu0 %1228
      %1230 = vrot.lane.b32.xlu0 %v1176, 27
      %v1231 = vpop.permute.xlu0 %1230
      %v1232 = vsel %vm297, %v1229, %v1231
      %1233 = vrot.lane.b32.xlu0 %v1181, 26
      %v1234 = vpop.permute.xlu0 %1233
      %1235 = vrot.lane.b32.xlu0 %v1182, 26
      %v1236 = vpop.permute.xlu0 %1235
      %v1237 = vsel %vm303, %v1234, %v1236
      %1238 = vrot.lane.b32.xlu0 %v1175, 18
      %v1239 = vpop.permute.xlu0 %1238
      %1240 = vrot.lane.b32.xlu0 %v1176, 18
      %v1241 = vpop.permute.xlu0 %1240
      %v1242 = vsel %vm309, %v1239, %v1241
      %1243 = vrot.lane.b32.xlu0 %v1181, 17
      %v1244 = vpop.permute.xlu0 %1243
      %1245 = vrot.lane.b32.xlu0 %v1182, 17
      %v1246 = vpop.permute.xlu0 %1245
      %v1247 = vsel %vm315, %v1244, %v1246
      %1248 = vrot.lane.b32.xlu0 %v1175, 16
      %v1249 = vpop.permute.xlu0 %1248
      %1250 = vrot.lane.b32.xlu0 %v1176, 16
      %v1251 = vpop.permute.xlu0 %1250
      %v1252 = vsel %vm321, %v1249, %v1251
      %1253 = vrot.lane.b32.xlu0 %v1181, 8
      %v1254 = vpop.permute.xlu0 %1253
      %1255 = vrot.lane.b32.xlu0 %v1182, 8
      %v1256 = vpop.permute.xlu0 %1255
      %v1257 = vsel %vm327, %v1254, %v1256
      %v1260 = vsel %vm329, %v1175, %v1187
      %v1264 = vsel %vm329, %v1192, %v1197
      %v1268 = vsel %vm329, %v1202, %v1207
      %v1272 = vsel %vm329, %v1212, %v1217
      %v1276 = vsel %vm329, %v1222, %v1227
      %v1280 = vsel %vm329, %v1232, %v1237
      %v1284 = vsel %vm329, %v1242, %v1247
      %v1288 = vsel %vm329, %v1252, %v1257
      %1291 = vrot.lane.b32.xlu0 %v1176, 49
      %v1292 = vpop.permute.xlu0 %1291
      %1293 = vrot.lane.b32.xlu0 %v1178, 49
      %v1294 = vpop.permute.xlu0 %1293
      %v1295 = vsel %vm367, %v1292, %v1294
      %v1296 = vrot.slane %v1178, 4
      %1297 = vrot.lane.b32.xlu0 %v1182, 48
      %v1298 = vpop.permute.xlu0 %1297
      %1299 = vrot.lane.b32.xlu0 %v1296, 48
      %v1300 = vpop.permute.xlu0 %1299
      %v1301 = vsel %vm374, %v1298, %v1300
      %1302 = vrot.lane.b32.xlu0 %v1176, 47
      %v1303 = vpop.permute.xlu0 %1302
      %1304 = vrot.lane.b32.xlu0 %v1178, 47
      %v1305 = vpop.permute.xlu0 %1304
      %v1306 = vsel %vm380, %v1303, %v1305
      %1307 = vrot.lane.b32.xlu0 %v1182, 39
      %v1308 = vpop.permute.xlu0 %1307
      %1309 = vrot.lane.b32.xlu0 %v1296, 39
      %v1310 = vpop.permute.xlu0 %1309
      %v1311 = vsel %vm386, %v1308, %v1310
      %1312 = vrot.lane.b32.xlu0 %v1176, 38
      %v1313 = vpop.permute.xlu0 %1312
      %1314 = vrot.lane.b32.xlu0 %v1178, 38
      %v1315 = vpop.permute.xlu0 %1314
      %v1316 = vsel %vm392, %v1313, %v1315
      %1317 = vrot.lane.b32.xlu0 %v1182, 37
      %v1318 = vpop.permute.xlu0 %1317
      %1319 = vrot.lane.b32.xlu0 %v1296, 37
      %v1320 = vpop.permute.xlu0 %1319
      %v1321 = vsel %vm398, %v1318, %v1320
      %1322 = vrot.lane.b32.xlu0 %v1176, 29
      %v1323 = vpop.permute.xlu0 %1322
      %1324 = vrot.lane.b32.xlu0 %v1178, 29
      %v1325 = vpop.permute.xlu0 %1324
      %v1326 = vsel %vm404, %v1323, %v1325
      %1327 = vrot.lane.b32.xlu0 %v1296, 28
      %v1328 = vpop.permute.xlu0 %1327
      %v1329 = vsel %vm291, %v1226, %v1328
      %1330 = vrot.lane.b32.xlu0 %v1178, 27
      %v1331 = vpop.permute.xlu0 %1330
      %v1332 = vsel %vm297, %v1231, %v1331
      %v1335 = vsel %vm329, %v1176, %v1186
      %v1338 = vsel %vm329, %v1292, %v1298
      %v1341 = vsel %vm329, %v1295, %v1301
      %v1344 = vsel %vm329, %v1303, %v1308
      %v1347 = vsel %vm329, %v1306, %v1311
      %v1350 = vsel %vm329, %v1313, %v1318
      %v1353 = vsel %vm329, %v1316, %v1321
      %v1356 = vsel %vm329, %v1323, %v1226
      %v1359 = vsel %vm329, %v1326, %v1329
      %v1361 = vsel %vm329, %v1231, 0
      %v1363 = vsel %vm329, %v1332, 0
      %1376 = vrot.lane.b32.xlu0 %v1260, 7
      %v1377 = vpop.permute.xlu0 %1376
      %1378 = vrot.lane.b32.xlu0 %v1335, 7
      %v1379 = vpop.permute.xlu0 %1378
      %1380 = vrot.lane.b32.xlu0 %v1338, 7
      %v1381 = vpop.permute.xlu0 %1380
      %1382 = vrot.lane.b32.xlu0 %v1341, 7
      %v1383 = vpop.permute.xlu0 %1382
      %1384 = vrot.lane.b32.xlu0 %v1344, 7
      %v1385 = vpop.permute.xlu0 %1384
      %1386 = vrot.lane.b32.xlu0 %v1347, 7
      %v1387 = vpop.permute.xlu0 %1386
      %1388 = vrot.lane.b32.xlu0 %v1350, 7
      %v1389 = vpop.permute.xlu0 %1388
      %1390 = vrot.lane.b32.xlu0 %v1353, 7
      %v1391 = vpop.permute.xlu0 %1390
      %1392 = vrot.lane.b32.xlu0 %v1356, 7
      %v1393 = vpop.permute.xlu0 %1392
      %1394 = vrot.lane.b32.xlu0 %v1359, 7
      %v1395 = vpop.permute.xlu0 %1394
      %1396 = vrot.lane.b32.xlu0 %v1361, 7
      %v1397 = vpop.permute.xlu0 %1396
      %1398 = vrot.lane.b32.xlu0 %v1363, 7
      %v1399 = vpop.permute.xlu0 %1398
      %v1400 = vsel %vm483, %v1377, %v1379
      %v1401 = vsel %vm483, %v1381, %v1383
      %v1402 = vsel %vm483, %v1385, %v1387
      %v1403 = vsel %vm483, %v1389, %v1391
      %v1404 = vsel %vm483, %v1393, %v1395
      %v1405 = vsel %vm483, %v1397, %v1399
      %1412 = vmatprep.subr.bf16.mxu0 0
      %1413 = vmatpush1.bf16.msra.mxu0 %v1288
      %1414 = vmatprep.subr.bf16.mxu0 0
      %1415 = vmatpush1.bf16.msra.mxu0 %v1284
      %1416 = vmatprep.subr.bf16.mxu0 0
      %1417 = vmatpush1.bf16.msra.mxu0 %v1280
      %1418 = vmatprep.subr.bf16.mxu0 0
      %1419 = vmatpush1.bf16.msra.mxu0 %v1276
      %1420 = vmatprep.subr.bf16.mxu0 0
      %1421 = vmatpush1.bf16.msra.mxu0 %v1272
      %1422 = vmatprep.subr.bf16.mxu0 0
      %1423 = vmatpush1.bf16.msra.mxu0 %v1268
      %1424 = vmatprep.subr.bf16.mxu0 0
      %1425 = vmatpush1.bf16.msra.mxu0 %v1264
      %1426 = vmatprep.subr.bf16.mxu0 0
      %1427 = vmatpush1.bf16.msra.mxu0 %v1260
      %1428 = vmatprep.subr.bf16.mxu0 0
      %1429 = vmatpush2.bf16.msra.mxu0 %v482
      %1430 = vmatprep.subr.bf16.mxu0 0
      %1431 = vmatpush2.bf16.msra.mxu0 %v482
      %1432 = vmatprep.subr.bf16.mxu0 0
      %1433 = vmatpush2.bf16.msra.mxu0 %v1405
      %1434 = vmatprep.subr.bf16.mxu0 0
      %1435 = vmatpush2.bf16.msra.mxu0 %v1404
      %1436 = vmatprep.subr.bf16.mxu0 0
      %1437 = vmatpush2.bf16.msra.mxu0 %v1403
      %1438 = vmatprep.subr.bf16.mxu0 0
      %1439 = vmatpush2.bf16.msra.mxu0 %v1402
      %1440 = vmatprep.subr.bf16.mxu0 0
      %1441 = vmatpush2.bf16.msra.mxu0 %v1401
      %1442 = vmatprep.subr.bf16.mxu0 0
      %1443 = vmatpush2.bf16.msra.mxu0 %v1400
      %1444 = vmatprep.mubr.bf16.mxu0 %v506
      %1445 = vmatmul.mubr.bf16.gmra.mxu0 %v505
      %v1446 = vpop.f32.mrf.mxu0
      %v1447 = vadd.f32 %v500, %v1446
      %v1448 = vpop.f32.mrf.mxu0
      %v1449 = vpop.f32.mrf.mxu0
      %v1450 = vpop.f32.mrf.mxu0
      %1451 = vdwg.mxu0
      %v1452 = vmax.f32 %v1447, 0.0
      %s1453 = scalar_lea.vmem %s224, 24
      %1454 = vst [vmem:[%s1453] sm:$0xff] %v1452
      %v1455 = vadd.s32 %v229, 384
      %v1456 = vcvt.s32.f32 %v1455
      %v1457 = vmul.f32 %v1456, %v552
      %v1458 = vfloor.f32 %v1457
      %v1459 = vmul.f32 %v1458, 100.0
      %v1460 = vsub.f32 %v1456, %v1459
      %v1461 = vmul.f32 %v1460, %v557
      %v1462 = vfloor.f32 %v1461
      %v1463 = vmul.f32 %v1462, 10.0
      %v1464 = vsub.f32 %v1460, %v1463
      %vm1465 = vcmp.lt.f32.partialorder %v1458, 8.0
      %vm1466 = vcmp.lt.f32.partialorder %v1462, 8.0
      %vm1467 = vmand %vm1465, %vm1466
      %vm1468 = vcmp.lt.f32.partialorder %v1464, 8.0
      %vm1469 = vmand %vm1467, %vm1468
      %v1470 = vsel %vm1469, 1, 0
      %v1471 = vcvt.s32.f32 %v1470
      %v1472 = vmul.f32 %v1452, %v1471
      %v1473 = vadd.f32 %v1172, %v1472
      %v1474 = vmul.f32 %v1472, %v1452
      %v1475 = vadd.f32 %v1174, %v1474
      %v1476 = vld [vmem:[%s876] sm:$0xf]
      %v1477 = vld [vmem:[%s1177] sm:$0xf]
      %s1478 = scalar_lea.vmem %s219, 24
      %v1479 = vld [vmem:[%s1478] sm:$0xf]
      %v1482 = vrot.slane %v1476, 4
      %v1483 = vrot.slane %v1477, 4
      %1484 = vrot.lane.b32.xlu0 %v1482, 127
      %v1485 = vpop.permute.xlu0 %1484
      %1486 = vrot.lane.b32.xlu0 %v1483, 127
      %v1487 = vpop.permute.xlu0 %1486
      %v1488 = vsel %vm243, %v1485, %v1487
      %1489 = vrot.lane.b32.xlu0 %v1476, 126
      %v1490 = vpop.permute.xlu0 %1489
      %1491 = vrot.lane.b32.xlu0 %v1477, 126
      %v1492 = vpop.permute.xlu0 %1491
      %v1493 = vsel %vm249, %v1490, %v1492
      %1494 = vrot.lane.b32.xlu0 %v1482, 118
      %v1495 = vpop.permute.xlu0 %1494
      %1496 = vrot.lane.b32.xlu0 %v1483, 118
      %v1497 = vpop.permute.xlu0 %1496
      %v1498 = vsel %vm255, %v1495, %v1497
      %1499 = vrot.lane.b32.xlu0 %v1476, 117
      %v1500 = vpop.permute.xlu0 %1499
      %1501 = vrot.lane.b32.xlu0 %v1477, 117
      %v1502 = vpop.permute.xlu0 %1501
      %v1503 = vsel %vm261, %v1500, %v1502
      %1504 = vrot.lane.b32.xlu0 %v1482, 116
      %v1505 = vpop.permute.xlu0 %1504
      %1506 = vrot.lane.b32.xlu0 %v1483, 116
      %v1507 = vpop.permute.xlu0 %1506
      %v1508 = vsel %vm267, %v1505, %v1507
      %1509 = vrot.lane.b32.xlu0 %v1476, 108
      %v1510 = vpop.permute.xlu0 %1509
      %1511 = vrot.lane.b32.xlu0 %v1477, 108
      %v1512 = vpop.permute.xlu0 %1511
      %v1513 = vsel %vm273, %v1510, %v1512
      %1514 = vrot.lane.b32.xlu0 %v1482, 107
      %v1515 = vpop.permute.xlu0 %1514
      %1516 = vrot.lane.b32.xlu0 %v1483, 107
      %v1517 = vpop.permute.xlu0 %1516
      %v1518 = vsel %vm279, %v1515, %v1517
      %1519 = vrot.lane.b32.xlu0 %v1476, 106
      %v1520 = vpop.permute.xlu0 %1519
      %1521 = vrot.lane.b32.xlu0 %v1477, 106
      %v1522 = vpop.permute.xlu0 %1521
      %v1523 = vsel %vm285, %v1520, %v1522
      %1524 = vrot.lane.b32.xlu0 %v1482, 28
      %v1525 = vpop.permute.xlu0 %1524
      %1526 = vrot.lane.b32.xlu0 %v1483, 28
      %v1527 = vpop.permute.xlu0 %1526
      %v1528 = vsel %vm291, %v1525, %v1527
      %1529 = vrot.lane.b32.xlu0 %v1476, 27
      %v1530 = vpop.permute.xlu0 %1529
      %1531 = vrot.lane.b32.xlu0 %v1477, 27
      %v1532 = vpop.permute.xlu0 %1531
      %v1533 = vsel %vm297, %v1530, %v1532
      %1534 = vrot.lane.b32.xlu0 %v1482, 26
      %v1535 = vpop.permute.xlu0 %1534
      %1536 = vrot.lane.b32.xlu0 %v1483, 26
      %v1537 = vpop.permute.xlu0 %1536
      %v1538 = vsel %vm303, %v1535, %v1537
      %1539 = vrot.lane.b32.xlu0 %v1476, 18
      %v1540 = vpop.permute.xlu0 %1539
      %1541 = vrot.lane.b32.xlu0 %v1477, 18
      %v1542 = vpop.permute.xlu0 %1541
      %v1543 = vsel %vm309, %v1540, %v1542
      %1544 = vrot.lane.b32.xlu0 %v1482, 17
      %v1545 = vpop.permute.xlu0 %1544
      %1546 = vrot.lane.b32.xlu0 %v1483, 17
      %v1547 = vpop.permute.xlu0 %1546
      %v1548 = vsel %vm315, %v1545, %v1547
      %1549 = vrot.lane.b32.xlu0 %v1476, 16
      %v1550 = vpop.permute.xlu0 %1549
      %1551 = vrot.lane.b32.xlu0 %v1477, 16
      %v1552 = vpop.permute.xlu0 %1551
      %v1553 = vsel %vm321, %v1550, %v1552
      %1554 = vrot.lane.b32.xlu0 %v1482, 8
      %v1555 = vpop.permute.xlu0 %1554
      %1556 = vrot.lane.b32.xlu0 %v1483, 8
      %v1557 = vpop.permute.xlu0 %1556
      %v1558 = vsel %vm327, %v1555, %v1557
      %v1561 = vsel %vm329, %v1476, %v1488
      %v1565 = vsel %vm329, %v1493, %v1498
      %v1569 = vsel %vm329, %v1503, %v1508
      %v1573 = vsel %vm329, %v1513, %v1518
      %v1577 = vsel %vm329, %v1523, %v1528
      %v1581 = vsel %vm329, %v1533, %v1538
      %v1585 = vsel %vm329, %v1543, %v1548
      %v1589 = vsel %vm329, %v1553, %v1558
      %1592 = vrot.lane.b32.xlu0 %v1477, 49
      %v1593 = vpop.permute.xlu0 %1592
      %1594 = vrot.lane.b32.xlu0 %v1479, 49
      %v1595 = vpop.permute.xlu0 %1594
      %v1596 = vsel %vm367, %v1593, %v1595
      %v1597 = vrot.slane %v1479, 4
      %1598 = vrot.lane.b32.xlu0 %v1483, 48
      %v1599 = vpop.permute.xlu0 %1598
      %1600 = vrot.lane.b32.xlu0 %v1597, 48
      %v1601 = vpop.permute.xlu0 %1600
      %v1602 = vsel %vm374, %v1599, %v1601
      %1603 = vrot.lane.b32.xlu0 %v1477, 47
      %v1604 = vpop.permute.xlu0 %1603
      %1605 = vrot.lane.b32.xlu0 %v1479, 47
      %v1606 = vpop.permute.xlu0 %1605
      %v1607 = vsel %vm380, %v1604, %v1606
      %1608 = vrot.lane.b32.xlu0 %v1483, 39
      %v1609 = vpop.permute.xlu0 %1608
      %1610 = vrot.lane.b32.xlu0 %v1597, 39
      %v1611 = vpop.permute.xlu0 %1610
      %v1612 = vsel %vm386, %v1609, %v1611
      %1613 = vrot.lane.b32.xlu0 %v1477, 38
      %v1614 = vpop.permute.xlu0 %1613
      %1615 = vrot.lane.b32.xlu0 %v1479, 38
      %v1616 = vpop.permute.xlu0 %1615
      %v1617 = vsel %vm392, %v1614, %v1616
      %1618 = vrot.lane.b32.xlu0 %v1483, 37
      %v1619 = vpop.permute.xlu0 %1618
      %1620 = vrot.lane.b32.xlu0 %v1597, 37
      %v1621 = vpop.permute.xlu0 %1620
      %v1622 = vsel %vm398, %v1619, %v1621
      %1623 = vrot.lane.b32.xlu0 %v1477, 29
      %v1624 = vpop.permute.xlu0 %1623
      %1625 = vrot.lane.b32.xlu0 %v1479, 29
      %v1626 = vpop.permute.xlu0 %1625
      %v1627 = vsel %vm404, %v1624, %v1626
      %1628 = vrot.lane.b32.xlu0 %v1597, 28
      %v1629 = vpop.permute.xlu0 %1628
      %v1630 = vsel %vm291, %v1527, %v1629
      %1631 = vrot.lane.b32.xlu0 %v1479, 27
      %v1632 = vpop.permute.xlu0 %1631
      %v1633 = vsel %vm297, %v1532, %v1632
      %v1636 = vsel %vm329, %v1477, %v1487
      %v1639 = vsel %vm329, %v1593, %v1599
      %v1642 = vsel %vm329, %v1596, %v1602
      %v1645 = vsel %vm329, %v1604, %v1609
      %v1648 = vsel %vm329, %v1607, %v1612
      %v1651 = vsel %vm329, %v1614, %v1619
      %v1654 = vsel %vm329, %v1617, %v1622
      %v1657 = vsel %vm329, %v1624, %v1527
      %v1660 = vsel %vm329, %v1627, %v1630
      %v1662 = vsel %vm329, %v1532, 0
      %v1664 = vsel %vm329, %v1633, 0
      %1677 = vrot.lane.b32.xlu0 %v1561, 7
      %v1678 = vpop.permute.xlu0 %1677
      %1679 = vrot.lane.b32.xlu0 %v1636, 7
      %v1680 = vpop.permute.xlu0 %1679
      %1681 = vrot.lane.b32.xlu0 %v1639, 7
      %v1682 = vpop.permute.xlu0 %1681
      %1683 = vrot.lane.b32.xlu0 %v1642, 7
      %v1684 = vpop.permute.xlu0 %1683
      %1685 = vrot.lane.b32.xlu0 %v1645, 7
      %v1686 = vpop.permute.xlu0 %1685
      %1687 = vrot.lane.b32.xlu0 %v1648, 7
      %v1688 = vpop.permute.xlu0 %1687
      %1689 = vrot.lane.b32.xlu0 %v1651, 7
      %v1690 = vpop.permute.xlu0 %1689
      %1691 = vrot.lane.b32.xlu0 %v1654, 7
      %v1692 = vpop.permute.xlu0 %1691
      %1693 = vrot.lane.b32.xlu0 %v1657, 7
      %v1694 = vpop.permute.xlu0 %1693
      %1695 = vrot.lane.b32.xlu0 %v1660, 7
      %v1696 = vpop.permute.xlu0 %1695
      %1697 = vrot.lane.b32.xlu0 %v1662, 7
      %v1698 = vpop.permute.xlu0 %1697
      %1699 = vrot.lane.b32.xlu0 %v1664, 7
      %v1700 = vpop.permute.xlu0 %1699
      %v1701 = vsel %vm483, %v1678, %v1680
      %v1702 = vsel %vm483, %v1682, %v1684
      %v1703 = vsel %vm483, %v1686, %v1688
      %v1704 = vsel %vm483, %v1690, %v1692
      %v1705 = vsel %vm483, %v1694, %v1696
      %v1706 = vsel %vm483, %v1698, %v1700
      %1713 = vmatprep.subr.bf16.mxu0 0
      %1714 = vmatpush1.bf16.msra.mxu0 %v1589
      %1715 = vmatprep.subr.bf16.mxu0 0
      %1716 = vmatpush1.bf16.msra.mxu0 %v1585
      %1717 = vmatprep.subr.bf16.mxu0 0
      %1718 = vmatpush1.bf16.msra.mxu0 %v1581
      %1719 = vmatprep.subr.bf16.mxu0 0
      %1720 = vmatpush1.bf16.msra.mxu0 %v1577
      %1721 = vmatprep.subr.bf16.mxu0 0
      %1722 = vmatpush1.bf16.msra.mxu0 %v1573
      %1723 = vmatprep.subr.bf16.mxu0 0
      %1724 = vmatpush1.bf16.msra.mxu0 %v1569
      %1725 = vmatprep.subr.bf16.mxu0 0
      %1726 = vmatpush1.bf16.msra.mxu0 %v1565
      %1727 = vmatprep.subr.bf16.mxu0 0
      %1728 = vmatpush1.bf16.msra.mxu0 %v1561
      %1729 = vmatprep.subr.bf16.mxu0 0
      %1730 = vmatpush2.bf16.msra.mxu0 %v482
      %1731 = vmatprep.subr.bf16.mxu0 0
      %1732 = vmatpush2.bf16.msra.mxu0 %v482
      %1733 = vmatprep.subr.bf16.mxu0 0
      %1734 = vmatpush2.bf16.msra.mxu0 %v1706
      %1735 = vmatprep.subr.bf16.mxu0 0
      %1736 = vmatpush2.bf16.msra.mxu0 %v1705
      %1737 = vmatprep.subr.bf16.mxu0 0
      %1738 = vmatpush2.bf16.msra.mxu0 %v1704
      %1739 = vmatprep.subr.bf16.mxu0 0
      %1740 = vmatpush2.bf16.msra.mxu0 %v1703
      %1741 = vmatprep.subr.bf16.mxu0 0
      %1742 = vmatpush2.bf16.msra.mxu0 %v1702
      %1743 = vmatprep.subr.bf16.mxu0 0
      %1744 = vmatpush2.bf16.msra.mxu0 %v1701
      %1745 = vmatprep.mubr.bf16.mxu0 %v506
      %1746 = vmatmul.mubr.bf16.gmra.mxu0 %v505
      %v1747 = vpop.f32.mrf.mxu0
      %v1748 = vadd.f32 %v500, %v1747
      %v1749 = vpop.f32.mrf.mxu0
      %v1750 = vpop.f32.mrf.mxu0
      %v1751 = vpop.f32.mrf.mxu0
      %1752 = vdwg.mxu0
      %v1753 = vmax.f32 %v1748, 0.0
      %s1754 = scalar_lea.vmem %s224, 32
      %1755 = vst [vmem:[%s1754] sm:$0xff] %v1753
      %v1756 = vadd.s32 %v229, 512
      %v1757 = vcvt.s32.f32 %v1756
      %v1758 = vmul.f32 %v1757, %v552
      %v1759 = vfloor.f32 %v1758
      %v1760 = vmul.f32 %v1759, 100.0
      %v1761 = vsub.f32 %v1757, %v1760
      %v1762 = vmul.f32 %v1761, %v557
      %v1763 = vfloor.f32 %v1762
      %v1764 = vmul.f32 %v1763, 10.0
      %v1765 = vsub.f32 %v1761, %v1764
      %vm1766 = vcmp.lt.f32.partialorder %v1759, 8.0
      %vm1767 = vcmp.lt.f32.partialorder %v1763, 8.0
      %vm1768 = vmand %vm1766, %vm1767
      %vm1769 = vcmp.lt.f32.partialorder %v1765, 8.0
      %vm1770 = vmand %vm1768, %vm1769
      %v1771 = vsel %vm1770, 1, 0
      %v1772 = vcvt.s32.f32 %v1771
      %v1773 = vmul.f32 %v1753, %v1772
      %v1774 = vadd.f32 %v1473, %v1773
      %v1775 = vmul.f32 %v1773, %v1753
      %v1776 = vadd.f32 %v1475, %v1775
      %v1777 = vld [vmem:[%s1177] sm:$0xf]
      %v1778 = vld [vmem:[%s1478] sm:$0xf]
      %s1779 = scalar_lea.vmem %s219, 28
      %v1780 = vld [vmem:[%s1779] sm:$0xf]
      %v1783 = vrot.slane %v1777, 4
      %v1784 = vrot.slane %v1778, 4
      %1785 = vrot.lane.b32.xlu0 %v1783, 127
      %v1786 = vpop.permute.xlu0 %1785
      %1787 = vrot.lane.b32.xlu0 %v1784, 127
      %v1788 = vpop.permute.xlu0 %1787
      %v1789 = vsel %vm243, %v1786, %v1788
      %1790 = vrot.lane.b32.xlu0 %v1777, 126
      %v1791 = vpop.permute.xlu0 %1790
      %1792 = vrot.lane.b32.xlu0 %v1778, 126
      %v1793 = vpop.permute.xlu0 %1792
      %v1794 = vsel %vm249, %v1791, %v1793
      %1795 = vrot.lane.b32.xlu0 %v1783, 118
      %v1796 = vpop.permute.xlu0 %1795
      %1797 = vrot.lane.b32.xlu0 %v1784, 118
      %v1798 = vpop.permute.xlu0 %1797
      %v1799 = vsel %vm255, %v1796, %v1798
      %1800 = vrot.lane.b32.xlu0 %v1777, 117
      %v1801 = vpop.permute.xlu0 %1800
      %1802 = vrot.lane.b32.xlu0 %v1778, 117
      %v1803 = vpop.permute.xlu0 %1802
      %v1804 = vsel %vm261, %v1801, %v1803
      %1805 = vrot.lane.b32.xlu0 %v1783, 116
      %v1806 = vpop.permute.xlu0 %1805
      %1807 = vrot.lane.b32.xlu0 %v1784, 116
      %v1808 = vpop.permute.xlu0 %1807
      %v1809 = vsel %vm267, %v1806, %v1808
      %1810 = vrot.lane.b32.xlu0 %v1777, 108
      %v1811 = vpop.permute.xlu0 %1810
      %1812 = vrot.lane.b32.xlu0 %v1778, 108
      %v1813 = vpop.permute.xlu0 %1812
      %v1814 = vsel %vm273, %v1811, %v1813
      %1815 = vrot.lane.b32.xlu0 %v1783, 107
      %v1816 = vpop.permute.xlu0 %1815
      %1817 = vrot.lane.b32.xlu0 %v1784, 107
      %v1818 = vpop.permute.xlu0 %1817
      %v1819 = vsel %vm279, %v1816, %v1818
      %1820 = vrot.lane.b32.xlu0 %v1777, 106
      %v1821 = vpop.permute.xlu0 %1820
      %1822 = vrot.lane.b32.xlu0 %v1778, 106
      %v1823 = vpop.permute.xlu0 %1822
      %v1824 = vsel %vm285, %v1821, %v1823
      %1825 = vrot.lane.b32.xlu0 %v1783, 28
      %v1826 = vpop.permute.xlu0 %1825
      %1827 = vrot.lane.b32.xlu0 %v1784, 28
      %v1828 = vpop.permute.xlu0 %1827
      %v1829 = vsel %vm291, %v1826, %v1828
      %1830 = vrot.lane.b32.xlu0 %v1777, 27
      %v1831 = vpop.permute.xlu0 %1830
      %1832 = vrot.lane.b32.xlu0 %v1778, 27
      %v1833 = vpop.permute.xlu0 %1832
      %v1834 = vsel %vm297, %v1831, %v1833
      %1835 = vrot.lane.b32.xlu0 %v1783, 26
      %v1836 = vpop.permute.xlu0 %1835
      %1837 = vrot.lane.b32.xlu0 %v1784, 26
      %v1838 = vpop.permute.xlu0 %1837
      %v1839 = vsel %vm303, %v1836, %v1838
      %1840 = vrot.lane.b32.xlu0 %v1777, 18
      %v1841 = vpop.permute.xlu0 %1840
      %1842 = vrot.lane.b32.xlu0 %v1778, 18
      %v1843 = vpop.permute.xlu0 %1842
      %v1844 = vsel %vm309, %v1841, %v1843
      %1845 = vrot.lane.b32.xlu0 %v1783, 17
      %v1846 = vpop.permute.xlu0 %1845
      %1847 = vrot.lane.b32.xlu0 %v1784, 17
      %v1848 = vpop.permute.xlu0 %1847
      %v1849 = vsel %vm315, %v1846, %v1848
      %1850 = vrot.lane.b32.xlu0 %v1777, 16
      %v1851 = vpop.permute.xlu0 %1850
      %1852 = vrot.lane.b32.xlu0 %v1778, 16
      %v1853 = vpop.permute.xlu0 %1852
      %v1854 = vsel %vm321, %v1851, %v1853
      %1855 = vrot.lane.b32.xlu0 %v1783, 8
      %v1856 = vpop.permute.xlu0 %1855
      %1857 = vrot.lane.b32.xlu0 %v1784, 8
      %v1858 = vpop.permute.xlu0 %1857
      %v1859 = vsel %vm327, %v1856, %v1858
      %v1862 = vsel %vm329, %v1777, %v1789
      %v1866 = vsel %vm329, %v1794, %v1799
      %v1870 = vsel %vm329, %v1804, %v1809
      %v1874 = vsel %vm329, %v1814, %v1819
      %v1878 = vsel %vm329, %v1824, %v1829
      %v1882 = vsel %vm329, %v1834, %v1839
      %v1886 = vsel %vm329, %v1844, %v1849
      %v1890 = vsel %vm329, %v1854, %v1859
      %1893 = vrot.lane.b32.xlu0 %v1778, 49
      %v1894 = vpop.permute.xlu0 %1893
      %1895 = vrot.lane.b32.xlu0 %v1780, 49
      %v1896 = vpop.permute.xlu0 %1895
      %v1897 = vsel %vm367, %v1894, %v1896
      %v1898 = vrot.slane %v1780, 4
      %1899 = vrot.lane.b32.xlu0 %v1784, 48
      %v1900 = vpop.permute.xlu0 %1899
      %1901 = vrot.lane.b32.xlu0 %v1898, 48
      %v1902 = vpop.permute.xlu0 %1901
      %v1903 = vsel %vm374, %v1900, %v1902
      %1904 = vrot.lane.b32.xlu0 %v1778, 47
      %v1905 = vpop.permute.xlu0 %1904
      %1906 = vrot.lane.b32.xlu0 %v1780, 47
      %v1907 = vpop.permute.xlu0 %1906
      %v1908 = vsel %vm380, %v1905, %v1907
      %1909 = vrot.lane.b32.xlu0 %v1784, 39
      %v1910 = vpop.permute.xlu0 %1909
      %1911 = vrot.lane.b32.xlu0 %v1898, 39
      %v1912 = vpop.permute.xlu0 %1911
      %v1913 = vsel %vm386, %v1910, %v1912
      %1914 = vrot.lane.b32.xlu0 %v1778, 38
      %v1915 = vpop.permute.xlu0 %1914
      %1916 = vrot.lane.b32.xlu0 %v1780, 38
      %v1917 = vpop.permute.xlu0 %1916
      %v1918 = vsel %vm392, %v1915, %v1917
      %1919 = vrot.lane.b32.xlu0 %v1784, 37
      %v1920 = vpop.permute.xlu0 %1919
      %1921 = vrot.lane.b32.xlu0 %v1898, 37
      %v1922 = vpop.permute.xlu0 %1921
      %v1923 = vsel %vm398, %v1920, %v1922
      %1924 = vrot.lane.b32.xlu0 %v1778, 29
      %v1925 = vpop.permute.xlu0 %1924
      %1926 = vrot.lane.b32.xlu0 %v1780, 29
      %v1927 = vpop.permute.xlu0 %1926
      %v1928 = vsel %vm404, %v1925, %v1927
      %1929 = vrot.lane.b32.xlu0 %v1898, 28
      %v1930 = vpop.permute.xlu0 %1929
      %v1931 = vsel %vm291, %v1828, %v1930
      %1932 = vrot.lane.b32.xlu0 %v1780, 27
      %v1933 = vpop.permute.xlu0 %1932
      %v1934 = vsel %vm297, %v1833, %v1933
      %v1937 = vsel %vm329, %v1778, %v1788
      %v1940 = vsel %vm329, %v1894, %v1900
      %v1943 = vsel %vm329, %v1897, %v1903
      %v1946 = vsel %vm329, %v1905, %v1910
      %v1949 = vsel %vm329, %v1908, %v1913
      %v1952 = vsel %vm329, %v1915, %v1920
      %v1955 = vsel %vm329, %v1918, %v1923
      %v1958 = vsel %vm329, %v1925, %v1828
      %v1961 = vsel %vm329, %v1928, %v1931
      %v1963 = vsel %vm329, %v1833, 0
      %v1965 = vsel %vm329, %v1934, 0
      %1978 = vrot.lane.b32.xlu0 %v1862, 7
      %v1979 = vpop.permute.xlu0 %1978
      %1980 = vrot.lane.b32.xlu0 %v1937, 7
      %v1981 = vpop.permute.xlu0 %1980
      %1982 = vrot.lane.b32.xlu0 %v1940, 7
      %v1983 = vpop.permute.xlu0 %1982
      %1984 = vrot.lane.b32.xlu0 %v1943, 7
      %v1985 = vpop.permute.xlu0 %1984
      %1986 = vrot.lane.b32.xlu0 %v1946, 7
      %v1987 = vpop.permute.xlu0 %1986
      %1988 = vrot.lane.b32.xlu0 %v1949, 7
      %v1989 = vpop.permute.xlu0 %1988
      %1990 = vrot.lane.b32.xlu0 %v1952, 7
      %v1991 = vpop.permute.xlu0 %1990
      %1992 = vrot.lane.b32.xlu0 %v1955, 7
      %v1993 = vpop.permute.xlu0 %1992
      %1994 = vrot.lane.b32.xlu0 %v1958, 7
      %v1995 = vpop.permute.xlu0 %1994
      %1996 = vrot.lane.b32.xlu0 %v1961, 7
      %v1997 = vpop.permute.xlu0 %1996
      %1998 = vrot.lane.b32.xlu0 %v1963, 7
      %v1999 = vpop.permute.xlu0 %1998
      %2000 = vrot.lane.b32.xlu0 %v1965, 7
      %v2001 = vpop.permute.xlu0 %2000
      %v2002 = vsel %vm483, %v1979, %v1981
      %v2003 = vsel %vm483, %v1983, %v1985
      %v2004 = vsel %vm483, %v1987, %v1989
      %v2005 = vsel %vm483, %v1991, %v1993
      %v2006 = vsel %vm483, %v1995, %v1997
      %v2007 = vsel %vm483, %v1999, %v2001
      %2014 = vmatprep.subr.bf16.mxu0 0
      %2015 = vmatpush1.bf16.msra.mxu0 %v1890
      %2016 = vmatprep.subr.bf16.mxu0 0
      %2017 = vmatpush1.bf16.msra.mxu0 %v1886
      %2018 = vmatprep.subr.bf16.mxu0 0
      %2019 = vmatpush1.bf16.msra.mxu0 %v1882
      %2020 = vmatprep.subr.bf16.mxu0 0
      %2021 = vmatpush1.bf16.msra.mxu0 %v1878
      %2022 = vmatprep.subr.bf16.mxu0 0
      %2023 = vmatpush1.bf16.msra.mxu0 %v1874
      %2024 = vmatprep.subr.bf16.mxu0 0
      %2025 = vmatpush1.bf16.msra.mxu0 %v1870
      %2026 = vmatprep.subr.bf16.mxu0 0
      %2027 = vmatpush1.bf16.msra.mxu0 %v1866
      %2028 = vmatprep.subr.bf16.mxu0 0
      %2029 = vmatpush1.bf16.msra.mxu0 %v1862
      %2030 = vmatprep.subr.bf16.mxu0 0
      %2031 = vmatpush2.bf16.msra.mxu0 %v482
      %2032 = vmatprep.subr.bf16.mxu0 0
      %2033 = vmatpush2.bf16.msra.mxu0 %v482
      %2034 = vmatprep.subr.bf16.mxu0 0
      %2035 = vmatpush2.bf16.msra.mxu0 %v2007
      %2036 = vmatprep.subr.bf16.mxu0 0
      %2037 = vmatpush2.bf16.msra.mxu0 %v2006
      %2038 = vmatprep.subr.bf16.mxu0 0
      %2039 = vmatpush2.bf16.msra.mxu0 %v2005
      %2040 = vmatprep.subr.bf16.mxu0 0
      %2041 = vmatpush2.bf16.msra.mxu0 %v2004
      %2042 = vmatprep.subr.bf16.mxu0 0
      %2043 = vmatpush2.bf16.msra.mxu0 %v2003
      %2044 = vmatprep.subr.bf16.mxu0 0
      %2045 = vmatpush2.bf16.msra.mxu0 %v2002
      %2046 = vmatprep.mubr.bf16.mxu0 %v506
      %2047 = vmatmul.mubr.bf16.gmra.mxu0 %v505
      %v2048 = vpop.f32.mrf.mxu0
      %v2049 = vadd.f32 %v500, %v2048
      %v2050 = vpop.f32.mrf.mxu0
      %v2051 = vpop.f32.mrf.mxu0
      %v2052 = vpop.f32.mrf.mxu0
      %2053 = vdwg.mxu0
      %v2054 = vmax.f32 %v2049, 0.0
      %s2055 = scalar_lea.vmem %s224, 40
      %2056 = vst [vmem:[%s2055] sm:$0xff] %v2054
      %v2057 = vadd.s32 %v229, 640
      %v2058 = vcvt.s32.f32 %v2057
      %v2059 = vmul.f32 %v2058, %v552
      %v2060 = vfloor.f32 %v2059
      %v2061 = vmul.f32 %v2060, 100.0
      %v2062 = vsub.f32 %v2058, %v2061
      %v2063 = vmul.f32 %v2062, %v557
      %v2064 = vfloor.f32 %v2063
      %v2065 = vmul.f32 %v2064, 10.0
      %v2066 = vsub.f32 %v2062, %v2065
      %vm2067 = vcmp.lt.f32.partialorder %v2060, 8.0
      %vm2068 = vcmp.lt.f32.partialorder %v2064, 8.0
      %vm2069 = vmand %vm2067, %vm2068
      %vm2070 = vcmp.lt.f32.partialorder %v2066, 8.0
      %vm2071 = vmand %vm2069, %vm2070
      %v2072 = vsel %vm2071, 1, 0
      %v2073 = vcvt.s32.f32 %v2072
      %v2074 = vmul.f32 %v2054, %v2073
      %v2075 = vadd.f32 %v1774, %v2074
      %v2076 = vmul.f32 %v2074, %v2054
      %v2077 = vadd.f32 %v1776, %v2076
      %v2078 = vld [vmem:[%s1478] sm:$0xf]
      %v2079 = vld [vmem:[%s1779] sm:$0xf]
      %s2080 = scalar_lea.vmem %s219, 32
      %v2081 = vld [vmem:[%s2080] sm:$0xf]
      %v2084 = vrot.slane %v2078, 4
      %v2085 = vrot.slane %v2079, 4
      %2086 = vrot.lane.b32.xlu0 %v2084, 127
      %v2087 = vpop.permute.xlu0 %2086
      %2088 = vrot.lane.b32.xlu0 %v2085, 127
      %v2089 = vpop.permute.xlu0 %2088
      %v2090 = vsel %vm243, %v2087, %v2089
      %2091 = vrot.lane.b32.xlu0 %v2078, 126
      %v2092 = vpop.permute.xlu0 %2091
      %2093 = vrot.lane.b32.xlu0 %v2079, 126
      %v2094 = vpop.permute.xlu0 %2093
      %v2095 = vsel %vm249, %v2092, %v2094
      %2096 = vrot.lane.b32.xlu0 %v2084, 118
      %v2097 = vpop.permute.xlu0 %2096
      %2098 = vrot.lane.b32.xlu0 %v2085, 118
      %v2099 = vpop.permute.xlu0 %2098
      %v2100 = vsel %vm255, %v2097, %v2099
      %2101 = vrot.lane.b32.xlu0 %v2078, 117
      %v2102 = vpop.permute.xlu0 %2101
      %2103 = vrot.lane.b32.xlu0 %v2079, 117
      %v2104 = vpop.permute.xlu0 %2103
      %v2105 = vsel %vm261, %v2102, %v2104
      %2106 = vrot.lane.b32.xlu0 %v2084, 116
      %v2107 = vpop.permute.xlu0 %2106
      %2108 = vrot.lane.b32.xlu0 %v2085, 116
      %v2109 = vpop.permute.xlu0 %2108
      %v2110 = vsel %vm267, %v2107, %v2109
      %2111 = vrot.lane.b32.xlu0 %v2078, 108
      %v2112 = vpop.permute.xlu0 %2111
      %2113 = vrot.lane.b32.xlu0 %v2079, 108
      %v2114 = vpop.permute.xlu0 %2113
      %v2115 = vsel %vm273, %v2112, %v2114
      %2116 = vrot.lane.b32.xlu0 %v2084, 107
      %v2117 = vpop.permute.xlu0 %2116
      %2118 = vrot.lane.b32.xlu0 %v2085, 107
      %v2119 = vpop.permute.xlu0 %2118
      %v2120 = vsel %vm279, %v2117, %v2119
      %2121 = vrot.lane.b32.xlu0 %v2078, 106
      %v2122 = vpop.permute.xlu0 %2121
      %2123 = vrot.lane.b32.xlu0 %v2079, 106
      %v2124 = vpop.permute.xlu0 %2123
      %v2125 = vsel %vm285, %v2122, %v2124
      %2126 = vrot.lane.b32.xlu0 %v2084, 28
      %v2127 = vpop.permute.xlu0 %2126
      %2128 = vrot.lane.b32.xlu0 %v2085, 28
      %v2129 = vpop.permute.xlu0 %2128
      %v2130 = vsel %vm291, %v2127, %v2129
      %2131 = vrot.lane.b32.xlu0 %v2078, 27
      %v2132 = vpop.permute.xlu0 %2131
      %2133 = vrot.lane.b32.xlu0 %v2079, 27
      %v2134 = vpop.permute.xlu0 %2133
      %v2135 = vsel %vm297, %v2132, %v2134
      %2136 = vrot.lane.b32.xlu0 %v2084, 26
      %v2137 = vpop.permute.xlu0 %2136
      %2138 = vrot.lane.b32.xlu0 %v2085, 26
      %v2139 = vpop.permute.xlu0 %2138
      %v2140 = vsel %vm303, %v2137, %v2139
      %2141 = vrot.lane.b32.xlu0 %v2078, 18
      %v2142 = vpop.permute.xlu0 %2141
      %2143 = vrot.lane.b32.xlu0 %v2079, 18
      %v2144 = vpop.permute.xlu0 %2143
      %v2145 = vsel %vm309, %v2142, %v2144
      %2146 = vrot.lane.b32.xlu0 %v2084, 17
      %v2147 = vpop.permute.xlu0 %2146
      %2148 = vrot.lane.b32.xlu0 %v2085, 17
      %v2149 = vpop.permute.xlu0 %2148
      %v2150 = vsel %vm315, %v2147, %v2149
      %2151 = vrot.lane.b32.xlu0 %v2078, 16
      %v2152 = vpop.permute.xlu0 %2151
      %2153 = vrot.lane.b32.xlu0 %v2079, 16
      %v2154 = vpop.permute.xlu0 %2153
      %v2155 = vsel %vm321, %v2152, %v2154
      %2156 = vrot.lane.b32.xlu0 %v2084, 8
      %v2157 = vpop.permute.xlu0 %2156
      %2158 = vrot.lane.b32.xlu0 %v2085, 8
      %v2159 = vpop.permute.xlu0 %2158
      %v2160 = vsel %vm327, %v2157, %v2159
      %v2163 = vsel %vm329, %v2078, %v2090
      %v2167 = vsel %vm329, %v2095, %v2100
      %v2171 = vsel %vm329, %v2105, %v2110
      %v2175 = vsel %vm329, %v2115, %v2120
      %v2179 = vsel %vm329, %v2125, %v2130
      %v2183 = vsel %vm329, %v2135, %v2140
      %v2187 = vsel %vm329, %v2145, %v2150
      %v2191 = vsel %vm329, %v2155, %v2160
      %2194 = vrot.lane.b32.xlu0 %v2079, 49
      %v2195 = vpop.permute.xlu0 %2194
      %2196 = vrot.lane.b32.xlu0 %v2081, 49
      %v2197 = vpop.permute.xlu0 %2196
      %v2198 = vsel %vm367, %v2195, %v2197
      %v2199 = vrot.slane %v2081, 4
      %2200 = vrot.lane.b32.xlu0 %v2085, 48
      %v2201 = vpop.permute.xlu0 %2200
      %2202 = vrot.lane.b32.xlu0 %v2199, 48
      %v2203 = vpop.permute.xlu0 %2202
      %v2204 = vsel %vm374, %v2201, %v2203
      %2205 = vrot.lane.b32.xlu0 %v2079, 47
      %v2206 = vpop.permute.xlu0 %2205
      %2207 = vrot.lane.b32.xlu0 %v2081, 47
      %v2208 = vpop.permute.xlu0 %2207
      %v2209 = vsel %vm380, %v2206, %v2208
      %2210 = vrot.lane.b32.xlu0 %v2085, 39
      %v2211 = vpop.permute.xlu0 %2210
      %2212 = vrot.lane.b32.xlu0 %v2199, 39
      %v2213 = vpop.permute.xlu0 %2212
      %v2214 = vsel %vm386, %v2211, %v2213
      %2215 = vrot.lane.b32.xlu0 %v2079, 38
      %v2216 = vpop.permute.xlu0 %2215
      %2217 = vrot.lane.b32.xlu0 %v2081, 38
      %v2218 = vpop.permute.xlu0 %2217
      %v2219 = vsel %vm392, %v2216, %v2218
      %2220 = vrot.lane.b32.xlu0 %v2085, 37
      %v2221 = vpop.permute.xlu0 %2220
      %2222 = vrot.lane.b32.xlu0 %v2199, 37
      %v2223 = vpop.permute.xlu0 %2222
      %v2224 = vsel %vm398, %v2221, %v2223
      %2225 = vrot.lane.b32.xlu0 %v2079, 29
      %v2226 = vpop.permute.xlu0 %2225
      %2227 = vrot.lane.b32.xlu0 %v2081, 29
      %v2228 = vpop.permute.xlu0 %2227
      %v2229 = vsel %vm404, %v2226, %v2228
      %2230 = vrot.lane.b32.xlu0 %v2199, 28
      %v2231 = vpop.permute.xlu0 %2230
      %v2232 = vsel %vm291, %v2129, %v2231
      %2233 = vrot.lane.b32.xlu0 %v2081, 27
      %v2234 = vpop.permute.xlu0 %2233
      %v2235 = vsel %vm297, %v2134, %v2234
      %v2238 = vsel %vm329, %v2079, %v2089
      %v2241 = vsel %vm329, %v2195, %v2201
      %v2244 = vsel %vm329, %v2198, %v2204
      %v2247 = vsel %vm329, %v2206, %v2211
      %v2250 = vsel %vm329, %v2209, %v2214
      %v2253 = vsel %vm329, %v2216, %v2221
      %v2256 = vsel %vm329, %v2219, %v2224
      %v2259 = vsel %vm329, %v2226, %v2129
      %v2262 = vsel %vm329, %v2229, %v2232
      %v2264 = vsel %vm329, %v2134, 0
      %v2266 = vsel %vm329, %v2235, 0
      %2279 = vrot.lane.b32.xlu0 %v2163, 7
      %v2280 = vpop.permute.xlu0 %2279
      %2281 = vrot.lane.b32.xlu0 %v2238, 7
      %v2282 = vpop.permute.xlu0 %2281
      %2283 = vrot.lane.b32.xlu0 %v2241, 7
      %v2284 = vpop.permute.xlu0 %2283
      %2285 = vrot.lane.b32.xlu0 %v2244, 7
      %v2286 = vpop.permute.xlu0 %2285
      %2287 = vrot.lane.b32.xlu0 %v2247, 7
      %v2288 = vpop.permute.xlu0 %2287
      %2289 = vrot.lane.b32.xlu0 %v2250, 7
      %v2290 = vpop.permute.xlu0 %2289
      %2291 = vrot.lane.b32.xlu0 %v2253, 7
      %v2292 = vpop.permute.xlu0 %2291
      %2293 = vrot.lane.b32.xlu0 %v2256, 7
      %v2294 = vpop.permute.xlu0 %2293
      %2295 = vrot.lane.b32.xlu0 %v2259, 7
      %v2296 = vpop.permute.xlu0 %2295
      %2297 = vrot.lane.b32.xlu0 %v2262, 7
      %v2298 = vpop.permute.xlu0 %2297
      %2299 = vrot.lane.b32.xlu0 %v2264, 7
      %v2300 = vpop.permute.xlu0 %2299
      %2301 = vrot.lane.b32.xlu0 %v2266, 7
      %v2302 = vpop.permute.xlu0 %2301
      %v2303 = vsel %vm483, %v2280, %v2282
      %v2304 = vsel %vm483, %v2284, %v2286
      %v2305 = vsel %vm483, %v2288, %v2290
      %v2306 = vsel %vm483, %v2292, %v2294
      %v2307 = vsel %vm483, %v2296, %v2298
      %v2308 = vsel %vm483, %v2300, %v2302
      %2315 = vmatprep.subr.bf16.mxu0 0
      %2316 = vmatpush1.bf16.msra.mxu0 %v2191
      %2317 = vmatprep.subr.bf16.mxu0 0
      %2318 = vmatpush1.bf16.msra.mxu0 %v2187
      %2319 = vmatprep.subr.bf16.mxu0 0
      %2320 = vmatpush1.bf16.msra.mxu0 %v2183
      %2321 = vmatprep.subr.bf16.mxu0 0
      %2322 = vmatpush1.bf16.msra.mxu0 %v2179
      %2323 = vmatprep.subr.bf16.mxu0 0
      %2324 = vmatpush1.bf16.msra.mxu0 %v2175
      %2325 = vmatprep.subr.bf16.mxu0 0
      %2326 = vmatpush1.bf16.msra.mxu0 %v2171
      %2327 = vmatprep.subr.bf16.mxu0 0
      %2328 = vmatpush1.bf16.msra.mxu0 %v2167
      %2329 = vmatprep.subr.bf16.mxu0 0
      %2330 = vmatpush1.bf16.msra.mxu0 %v2163
      %2331 = vmatprep.subr.bf16.mxu0 0
      %2332 = vmatpush2.bf16.msra.mxu0 %v482
      %2333 = vmatprep.subr.bf16.mxu0 0
      %2334 = vmatpush2.bf16.msra.mxu0 %v482
      %2335 = vmatprep.subr.bf16.mxu0 0
      %2336 = vmatpush2.bf16.msra.mxu0 %v2308
      %2337 = vmatprep.subr.bf16.mxu0 0
      %2338 = vmatpush2.bf16.msra.mxu0 %v2307
      %2339 = vmatprep.subr.bf16.mxu0 0
      %2340 = vmatpush2.bf16.msra.mxu0 %v2306
      %2341 = vmatprep.subr.bf16.mxu0 0
      %2342 = vmatpush2.bf16.msra.mxu0 %v2305
      %2343 = vmatprep.subr.bf16.mxu0 0
      %2344 = vmatpush2.bf16.msra.mxu0 %v2304
      %2345 = vmatprep.subr.bf16.mxu0 0
      %2346 = vmatpush2.bf16.msra.mxu0 %v2303
      %2347 = vmatprep.mubr.bf16.mxu0 %v506
      %2348 = vmatmul.mubr.bf16.gmra.mxu0 %v505
      %v2349 = vpop.f32.mrf.mxu0
      %v2350 = vadd.f32 %v500, %v2349
      %v2351 = vpop.f32.mrf.mxu0
      %v2352 = vpop.f32.mrf.mxu0
      %v2353 = vpop.f32.mrf.mxu0
      %2354 = vdwg.mxu0
      %v2355 = vmax.f32 %v2350, 0.0
      %s2356 = scalar_lea.vmem %s224, 48
      %2357 = vst [vmem:[%s2356] sm:$0xff] %v2355
      %v2358 = vadd.s32 %v229, 768
      %v2359 = vcvt.s32.f32 %v2358
      %v2360 = vmul.f32 %v2359, %v552
      %v2361 = vfloor.f32 %v2360
      %v2362 = vmul.f32 %v2361, 100.0
      %v2363 = vsub.f32 %v2359, %v2362
      %v2364 = vmul.f32 %v2363, %v557
      %v2365 = vfloor.f32 %v2364
      %v2366 = vmul.f32 %v2365, 10.0
      %v2367 = vsub.f32 %v2363, %v2366
      %vm2368 = vcmp.lt.f32.partialorder %v2361, 8.0
      %vm2369 = vcmp.lt.f32.partialorder %v2365, 8.0
      %vm2370 = vmand %vm2368, %vm2369
      %vm2371 = vcmp.lt.f32.partialorder %v2367, 8.0
      %vm2372 = vmand %vm2370, %vm2371
      %v2373 = vsel %vm2372, 1, 0
      %v2374 = vcvt.s32.f32 %v2373
      %v2375 = vmul.f32 %v2355, %v2374
      %v2376 = vadd.f32 %v2075, %v2375
      %v2377 = vmul.f32 %v2375, %v2355
      %v2378 = vadd.f32 %v2077, %v2377
      %v2379 = vld [vmem:[%s1779] sm:$0xf]
      %v2380 = vld [vmem:[%s2080] sm:$0xf]
      %s2381 = scalar_lea.vmem %s219, 36
      %v2382 = vld [vmem:[%s2381] sm:$0xf]
      %v2385 = vrot.slane %v2379, 4
      %v2386 = vrot.slane %v2380, 4
      %2387 = vrot.lane.b32.xlu0 %v2385, 127
      %v2388 = vpop.permute.xlu0 %2387
      %2389 = vrot.lane.b32.xlu0 %v2386, 127
      %v2390 = vpop.permute.xlu0 %2389
      %v2391 = vsel %vm243, %v2388, %v2390
      %2392 = vrot.lane.b32.xlu0 %v2379, 126
      %v2393 = vpop.permute.xlu0 %2392
      %2394 = vrot.lane.b32.xlu0 %v2380, 126
      %v2395 = vpop.permute.xlu0 %2394
      %v2396 = vsel %vm249, %v2393, %v2395
      %2397 = vrot.lane.b32.xlu0 %v2385, 118
      %v2398 = vpop.permute.xlu0 %2397
      %2399 = vrot.lane.b32.xlu0 %v2386, 118
      %v2400 = vpop.permute.xlu0 %2399
      %v2401 = vsel %vm255, %v2398, %v2400
      %2402 = vrot.lane.b32.xlu0 %v2379, 117
      %v2403 = vpop.permute.xlu0 %2402
      %2404 = vrot.lane.b32.xlu0 %v2380, 117
      %v2405 = vpop.permute.xlu0 %2404
      %v2406 = vsel %vm261, %v2403, %v2405
      %2407 = vrot.lane.b32.xlu0 %v2385, 116
      %v2408 = vpop.permute.xlu0 %2407
      %2409 = vrot.lane.b32.xlu0 %v2386, 116
      %v2410 = vpop.permute.xlu0 %2409
      %v2411 = vsel %vm267, %v2408, %v2410
      %2412 = vrot.lane.b32.xlu0 %v2379, 108
      %v2413 = vpop.permute.xlu0 %2412
      %2414 = vrot.lane.b32.xlu0 %v2380, 108
      %v2415 = vpop.permute.xlu0 %2414
      %v2416 = vsel %vm273, %v2413, %v2415
      %2417 = vrot.lane.b32.xlu0 %v2385, 107
      %v2418 = vpop.permute.xlu0 %2417
      %2419 = vrot.lane.b32.xlu0 %v2386, 107
      %v2420 = vpop.permute.xlu0 %2419
      %v2421 = vsel %vm279, %v2418, %v2420
      %2422 = vrot.lane.b32.xlu0 %v2379, 106
      %v2423 = vpop.permute.xlu0 %2422
      %2424 = vrot.lane.b32.xlu0 %v2380, 106
      %v2425 = vpop.permute.xlu0 %2424
      %v2426 = vsel %vm285, %v2423, %v2425
      %2427 = vrot.lane.b32.xlu0 %v2385, 28
      %v2428 = vpop.permute.xlu0 %2427
      %2429 = vrot.lane.b32.xlu0 %v2386, 28
      %v2430 = vpop.permute.xlu0 %2429
      %v2431 = vsel %vm291, %v2428, %v2430
      %2432 = vrot.lane.b32.xlu0 %v2379, 27
      %v2433 = vpop.permute.xlu0 %2432
      %2434 = vrot.lane.b32.xlu0 %v2380, 27
      %v2435 = vpop.permute.xlu0 %2434
      %v2436 = vsel %vm297, %v2433, %v2435
      %2437 = vrot.lane.b32.xlu0 %v2385, 26
      %v2438 = vpop.permute.xlu0 %2437
      %2439 = vrot.lane.b32.xlu0 %v2386, 26
      %v2440 = vpop.permute.xlu0 %2439
      %v2441 = vsel %vm303, %v2438, %v2440
      %2442 = vrot.lane.b32.xlu0 %v2379, 18
      %v2443 = vpop.permute.xlu0 %2442
      %2444 = vrot.lane.b32.xlu0 %v2380, 18
      %v2445 = vpop.permute.xlu0 %2444
      %v2446 = vsel %vm309, %v2443, %v2445
      %2447 = vrot.lane.b32.xlu0 %v2385, 17
      %v2448 = vpop.permute.xlu0 %2447
      %2449 = vrot.lane.b32.xlu0 %v2386, 17
      %v2450 = vpop.permute.xlu0 %2449
      %v2451 = vsel %vm315, %v2448, %v2450
      %2452 = vrot.lane.b32.xlu0 %v2379, 16
      %v2453 = vpop.permute.xlu0 %2452
      %2454 = vrot.lane.b32.xlu0 %v2380, 16
      %v2455 = vpop.permute.xlu0 %2454
      %v2456 = vsel %vm321, %v2453, %v2455
      %2457 = vrot.lane.b32.xlu0 %v2385, 8
      %v2458 = vpop.permute.xlu0 %2457
      %2459 = vrot.lane.b32.xlu0 %v2386, 8
      %v2460 = vpop.permute.xlu0 %2459
      %v2461 = vsel %vm327, %v2458, %v2460
      %v2464 = vsel %vm329, %v2379, %v2391
      %v2468 = vsel %vm329, %v2396, %v2401
      %v2472 = vsel %vm329, %v2406, %v2411
      %v2476 = vsel %vm329, %v2416, %v2421
      %v2480 = vsel %vm329, %v2426, %v2431
      %v2484 = vsel %vm329, %v2436, %v2441
      %v2488 = vsel %vm329, %v2446, %v2451
      %v2492 = vsel %vm329, %v2456, %v2461
      %2495 = vrot.lane.b32.xlu0 %v2380, 49
      %v2496 = vpop.permute.xlu0 %2495
      %2497 = vrot.lane.b32.xlu0 %v2382, 49
      %v2498 = vpop.permute.xlu0 %2497
      %v2499 = vsel %vm367, %v2496, %v2498
      %v2500 = vrot.slane %v2382, 4
      %2501 = vrot.lane.b32.xlu0 %v2386, 48
      %v2502 = vpop.permute.xlu0 %2501
      %2503 = vrot.lane.b32.xlu0 %v2500, 48
      %v2504 = vpop.permute.xlu0 %2503
      %v2505 = vsel %vm374, %v2502, %v2504
      %2506 = vrot.lane.b32.xlu0 %v2380, 47
      %v2507 = vpop.permute.xlu0 %2506
      %2508 = vrot.lane.b32.xlu0 %v2382, 47
      %v2509 = vpop.permute.xlu0 %2508
      %v2510 = vsel %vm380, %v2507, %v2509
      %2511 = vrot.lane.b32.xlu0 %v2386, 39
      %v2512 = vpop.permute.xlu0 %2511
      %2513 = vrot.lane.b32.xlu0 %v2500, 39
      %v2514 = vpop.permute.xlu0 %2513
      %v2515 = vsel %vm386, %v2512, %v2514
      %2516 = vrot.lane.b32.xlu0 %v2380, 38
      %v2517 = vpop.permute.xlu0 %2516
      %2518 = vrot.lane.b32.xlu0 %v2382, 38
      %v2519 = vpop.permute.xlu0 %2518
      %v2520 = vsel %vm392, %v2517, %v2519
      %2521 = vrot.lane.b32.xlu0 %v2386, 37
      %v2522 = vpop.permute.xlu0 %2521
      %2523 = vrot.lane.b32.xlu0 %v2500, 37
      %v2524 = vpop.permute.xlu0 %2523
      %v2525 = vsel %vm398, %v2522, %v2524
      %2526 = vrot.lane.b32.xlu0 %v2380, 29
      %v2527 = vpop.permute.xlu0 %2526
      %2528 = vrot.lane.b32.xlu0 %v2382, 29
      %v2529 = vpop.permute.xlu0 %2528
      %v2530 = vsel %vm404, %v2527, %v2529
      %2531 = vrot.lane.b32.xlu0 %v2500, 28
      %v2532 = vpop.permute.xlu0 %2531
      %v2533 = vsel %vm291, %v2430, %v2532
      %2534 = vrot.lane.b32.xlu0 %v2382, 27
      %v2535 = vpop.permute.xlu0 %2534
      %v2536 = vsel %vm297, %v2435, %v2535
      %v2539 = vsel %vm329, %v2380, %v2390
      %v2542 = vsel %vm329, %v2496, %v2502
      %v2545 = vsel %vm329, %v2499, %v2505
      %v2548 = vsel %vm329, %v2507, %v2512
      %v2551 = vsel %vm329, %v2510, %v2515
      %v2554 = vsel %vm329, %v2517, %v2522
      %v2557 = vsel %vm329, %v2520, %v2525
      %v2560 = vsel %vm329, %v2527, %v2430
      %v2563 = vsel %vm329, %v2530, %v2533
      %v2565 = vsel %vm329, %v2435, 0
      %v2567 = vsel %vm329, %v2536, 0
      %2580 = vrot.lane.b32.xlu0 %v2464, 7
      %v2581 = vpop.permute.xlu0 %2580
      %2582 = vrot.lane.b32.xlu0 %v2539, 7
      %v2583 = vpop.permute.xlu0 %2582
      %2584 = vrot.lane.b32.xlu0 %v2542, 7
      %v2585 = vpop.permute.xlu0 %2584
      %2586 = vrot.lane.b32.xlu0 %v2545, 7
      %v2587 = vpop.permute.xlu0 %2586
      %2588 = vrot.lane.b32.xlu0 %v2548, 7
      %v2589 = vpop.permute.xlu0 %2588
      %2590 = vrot.lane.b32.xlu0 %v2551, 7
      %v2591 = vpop.permute.xlu0 %2590
      %2592 = vrot.lane.b32.xlu0 %v2554, 7
      %v2593 = vpop.permute.xlu0 %2592
      %2594 = vrot.lane.b32.xlu0 %v2557, 7
      %v2595 = vpop.permute.xlu0 %2594
      %2596 = vrot.lane.b32.xlu0 %v2560, 7
      %v2597 = vpop.permute.xlu0 %2596
      %2598 = vrot.lane.b32.xlu0 %v2563, 7
      %v2599 = vpop.permute.xlu0 %2598
      %2600 = vrot.lane.b32.xlu0 %v2565, 7
      %v2601 = vpop.permute.xlu0 %2600
      %2602 = vrot.lane.b32.xlu0 %v2567, 7
      %v2603 = vpop.permute.xlu0 %2602
      %v2604 = vsel %vm483, %v2581, %v2583
      %v2605 = vsel %vm483, %v2585, %v2587
      %v2606 = vsel %vm483, %v2589, %v2591
      %v2607 = vsel %vm483, %v2593, %v2595
      %v2608 = vsel %vm483, %v2597, %v2599
      %v2609 = vsel %vm483, %v2601, %v2603
      %2616 = vmatprep.subr.bf16.mxu0 0
      %2617 = vmatpush1.bf16.msra.mxu0 %v2492
      %2618 = vmatprep.subr.bf16.mxu0 0
      %2619 = vmatpush1.bf16.msra.mxu0 %v2488
      %2620 = vmatprep.subr.bf16.mxu0 0
      %2621 = vmatpush1.bf16.msra.mxu0 %v2484
      %2622 = vmatprep.subr.bf16.mxu0 0
      %2623 = vmatpush1.bf16.msra.mxu0 %v2480
      %2624 = vmatprep.subr.bf16.mxu0 0
      %2625 = vmatpush1.bf16.msra.mxu0 %v2476
      %2626 = vmatprep.subr.bf16.mxu0 0
      %2627 = vmatpush1.bf16.msra.mxu0 %v2472
      %2628 = vmatprep.subr.bf16.mxu0 0
      %2629 = vmatpush1.bf16.msra.mxu0 %v2468
      %2630 = vmatprep.subr.bf16.mxu0 0
      %2631 = vmatpush1.bf16.msra.mxu0 %v2464
      %2632 = vmatprep.subr.bf16.mxu0 0
      %2633 = vmatpush2.bf16.msra.mxu0 %v482
      %2634 = vmatprep.subr.bf16.mxu0 0
      %2635 = vmatpush2.bf16.msra.mxu0 %v482
      %2636 = vmatprep.subr.bf16.mxu0 0
      %2637 = vmatpush2.bf16.msra.mxu0 %v2609
      %2638 = vmatprep.subr.bf16.mxu0 0
      %2639 = vmatpush2.bf16.msra.mxu0 %v2608
      %2640 = vmatprep.subr.bf16.mxu0 0
      %2641 = vmatpush2.bf16.msra.mxu0 %v2607
      %2642 = vmatprep.subr.bf16.mxu0 0
      %2643 = vmatpush2.bf16.msra.mxu0 %v2606
      %2644 = vmatprep.subr.bf16.mxu0 0
      %2645 = vmatpush2.bf16.msra.mxu0 %v2605
      %2646 = vmatprep.subr.bf16.mxu0 0
      %2647 = vmatpush2.bf16.msra.mxu0 %v2604
      %2648 = vmatprep.mubr.bf16.mxu0 %v506
      %2649 = vmatmul.mubr.bf16.gmra.mxu0 %v505
      %v2650 = vpop.f32.mrf.mxu0
      %v2651 = vadd.f32 %v500, %v2650
      %v2652 = vpop.f32.mrf.mxu0
      %v2653 = vpop.f32.mrf.mxu0
      %v2654 = vpop.f32.mrf.mxu0
      %2655 = vdwg.mxu0
      %v2656 = vmax.f32 %v2651, 0.0
      %s2657 = scalar_lea.vmem %s224, 56
      %2658 = vst [vmem:[%s2657] sm:$0xff] %v2656
      %v2659 = vadd.s32 %v229, 896
      %v2660 = vcvt.s32.f32 %v2659
      %v2661 = vmul.f32 %v2660, %v552
      %v2662 = vfloor.f32 %v2661
      %v2663 = vmul.f32 %v2662, 100.0
      %v2664 = vsub.f32 %v2660, %v2663
      %v2665 = vmul.f32 %v2664, %v557
      %v2666 = vfloor.f32 %v2665
      %v2667 = vmul.f32 %v2666, 10.0
      %v2668 = vsub.f32 %v2664, %v2667
      %vm2669 = vcmp.lt.f32.partialorder %v2662, 8.0
      %vm2670 = vcmp.lt.f32.partialorder %v2666, 8.0
      %vm2671 = vmand %vm2669, %vm2670
      %vm2672 = vcmp.lt.f32.partialorder %v2668, 8.0
      %vm2673 = vmand %vm2671, %vm2672
      %v2674 = vsel %vm2673, 1, 0
      %v2675 = vcvt.s32.f32 %v2674
      %v2676 = vmul.f32 %v2656, %v2675
      %v2677 = vadd.f32 %v2376, %v2676
      %v2678 = vmul.f32 %v2676, %v2656
      %v2679 = vadd.f32 %v2378, %v2678
      %2680 = vadd.xlane.f32.xlu0 %v2677
      %v2681 = vpop.xlane.xlu0 %2680
      %v2682 = vrot.slane %v2681, 4
      %v2683 = vadd.f32 %v2681, %v2682
      %v2684 = vrot.slane %v2683, 2
      %v2685 = vadd.f32 %v2683, %v2684
      %v2686 = vrot.slane %v2685, 1
      %v2687 = vadd.f32 %v2685, %v2686
      %s2688 = vtos %v2687
      %s2689 = smul.f32 %s2688, 0.00024414063
      %2690 = vadd.xlane.f32.xlu0 %v2679
      %v2691 = vpop.xlane.xlu0 %2690
      %v2692 = vrot.slane %v2691, 4
      %v2693 = vadd.f32 %v2691, %v2692
      %v2694 = vrot.slane %v2693, 2
      %v2695 = vadd.f32 %v2693, %v2694
      %v2696 = vrot.slane %v2695, 1
      %v2697 = vadd.f32 %v2695, %v2696
      %s2698 = vtos %v2697
      %s2699 = smul.f32 %s2698, 0.00024414063
      %s2700 = smul.f32 %s2689, %s2689
      %s2701 = ssub.f32 %s2699, %s2700
      %s2702 = smax.f32 %s2701, 0.0
      %s2703 = sadd.f32 %s2702, 1e-05
      %v2704 = vstv %s2703
      %v2705 = vrsqrt.pop %v2704
      %s2706 = vtos %v2705
      %v2707 = vld [vmem:[%s3] sm:$0xff]
      %v2708 = vstv %s2706
      %v2709 = vmul.f32 %v2707, %v2708
      %v2710 = vld [vmem:[%s4] sm:$0xff]
      %v2711 = vstv %s2689
      %v2712 = vmul.f32 %v2711, %v2709
      %v2713 = vsub.f32 %v2710, %v2712
      %v2714 = vld [vmem:[%s224] sm:$0xff]
      %2716 = vset.pattern.permute.xlu0 0
      %2717 = vperm.xlu0 %2716, %v2709
      %v2718 = vpop.permute.xlu0 %2717
      %v2720 = vmul.f32 %v2714, %v2718
      %2722 = vset.pattern.permute.xlu0 0
      %2723 = vperm.xlu0 %2722, %v2713
      %v2724 = vpop.permute.xlu0 %2723
      %v2726 = vadd.f32 %v2720, %v2724
      %2727 = vst [vmem:[%s224] sm:$0xff] %v2726
      %v2728 = vld [vmem:[%s851] sm:$0xff]
      %v2729 = vmul.f32 %v2728, %v2718
      %v2730 = vadd.f32 %v2729, %v2724
      %2731 = vst [vmem:[%s851] sm:$0xff] %v2730
      %v2732 = vld [vmem:[%s1152] sm:$0xff]
      %v2733 = vmul.f32 %v2732, %v2718
      %v2734 = vadd.f32 %v2733, %v2724
      %2735 = vst [vmem:[%s1152] sm:$0xff] %v2734
      %v2736 = vld [vmem:[%s1453] sm:$0xff]
      %v2737 = vmul.f32 %v2736, %v2718
      %v2738 = vadd.f32 %v2737, %v2724
      %2739 = vst [vmem:[%s1453] sm:$0xff] %v2738
      %v2740 = vld [vmem:[%s1754] sm:$0xff]
      %v2741 = vmul.f32 %v2740, %v2718
      %v2742 = vadd.f32 %v2741, %v2724
      %2743 = vst [vmem:[%s1754] sm:$0xff] %v2742
      %v2744 = vld [vmem:[%s2055] sm:$0xff]
      %v2745 = vmul.f32 %v2744, %v2718
      %v2746 = vadd.f32 %v2745, %v2724
      %2747 = vst [vmem:[%s2055] sm:$0xff] %v2746
      %v2748 = vld [vmem:[%s2356] sm:$0xff]
      %v2749 = vmul.f32 %v2748, %v2718
      %v2750 = vadd.f32 %v2749, %v2724
      %2751 = vst [vmem:[%s2356] sm:$0xff] %v2750
      %v2752 = vld [vmem:[%s2657] sm:$0xff]
      %v2753 = vmul.f32 %v2752, %v2718
      %v2754 = vadd.f32 %v2753, %v2724
      %2755 = vst [vmem:[%s2657] sm:$0xff] %v2754
      %p2756 = scmp.lt.s32.totalorder %s16, 1
      %s2757 = scalar_select %p2756, %s16, 1
      %s2758 = smul.addr %s2757, 8
      %s2759 = smul.addr %s2758, 8
      %s2760 = scalar_lea.vmem %s5, %s2759
      // Predicated region
      $region41: #{conv3d_block_forward.1} parent=39 // pred_check
        %p2761 = pneg %p144
      $region42: #{conv3d_block_forward.1} parent=39 // pred_check_branch
        %2763 = sbr.rel (%p2761) target = $region44
      $region43: #{conv3d_block_forward.1} parent=39 // pred_region
        _
      $region44: #{conv3d_block_forward.1} parent=39 // pred_fallthru
        _
    $region40: #{conv3d_block_forward.1} parent=5 // pred_fallthru
      _
    %p2764 = scmp.le.s32.totalorder 2, %s11
    // Predicated region
    $region45: #{conv3d_block_forward.1} parent=5 // pred_check
      %p2765 = pneg %p2764
    $region46: #{conv3d_block_forward.1} parent=5 // pred_check_branch
      %2767 = sbr.rel (%p2765) target = $region48
    $region47: #{conv3d_block_forward.1} parent=5 // pred_region
      %s2768 = ssub.s32 %s11, 2
      // Predicated region
      $region49: #{conv3d_block_forward.1} parent=47 // pred_check
        %p2769 = pneg %p150
      $region50: #{conv3d_block_forward.1} parent=47 // pred_check_branch
        %2771 = sbr.rel (%p2769) target = $region52
      $region51: #{conv3d_block_forward.1} parent=47 // pred_region
        %p2772 = scmp.lt.s32.totalorder %s17, 1
        %s2773 = scalar_select %p2772, %s17, 1
        %s2774 = smul.addr %s2773, 8
        %s2775 = smul.addr %s2774, 8
        %s2776 = scalar_lea.vmem %s5, %s2775
      $region52: #{conv3d_block_forward.1} parent=47 // pred_fallthru
        _
    $region48: #{conv3d_block_forward.1} parent=5 // pred_fallthru
      _
  $region6: #{conv3d_block_forward.1} parent=0 // loop_footer
    %s15 = sadd.s32 1, %s11
  $region7: #{conv3d_block_forward.1} parent=0 // loop_footer_branch
    %10 = sbr.rel target = $region3
  $region8: #{conv3d_block_forward.1} parent=0 // loop_exit
    _

</llo_original>
